<compile_context>
chip_gen: v7x
topology: tpu7x:2x2x1
jax: 0.10.0
libtpu: 0.0.40
codegen_flags: <defaults>
</compile_context>

<pallas_src>
import functools

import numpy as np
import jax
import jax.numpy as jnp
from jax import lax
from jax.experimental import pallas as pl
from jax.experimental.pallas import tpu as pltpu

EPS = 1e-5
LANE = 128                        # every channel axis is zero-padded to 128
_VMEM_LIMIT = 32 * 1024 * 1024    # safe on v5e/v6e (128 MiB) and v7x (64 MiB)


def _cparams(sem):
    return pltpu.CompilerParams(dimension_semantics=sem,
                                vmem_limit_bytes=_VMEM_LIMIT)


def _imod(x, n):
    """x % n for a static python int n (bitwise AND when n is a power of 2)."""
    if n & (n - 1) == 0:
        return x & (n - 1)
    return x % n


def _idiv(x, n):
    """x // n for a static python int n (shift when n is a power of 2)."""
    if n & (n - 1) == 0:
        return x >> (n.bit_length() - 1)
    return x // n


def _sum_sumsq(z):
    """Per-channel partial sums for BN statistics: (2, 128) = [sum; sum(z^2)]."""
    return jnp.concatenate([jnp.sum(z, axis=0, keepdims=True),
                            jnp.sum(z * z, axis=0, keepdims=True)], axis=0)


def _bn_apply(z, s, sq, g, b, count):
    """Training-mode BatchNorm from global sum / sum-of-squares (biased var)."""
    inv = 1.0 / count
    mu = s * inv
    var = jnp.maximum(sq * inv - mu * mu, 0.0)
    return g * ((z - mu) * lax.rsqrt(var + EPS)) + b


# ---------------------------------------------------------------------------
# Stage kernels (one M-tiled pallas_call each)
# ---------------------------------------------------------------------------
def _stage1_kernel(x_ref, w_ref, z1_ref, zs_ref, st_ref):
    """conv1 (1x1, stride folded into rows) and conv_shortcut as one N=256 GEMM.
    Writes both pre-BN outputs and accumulates their sum / sum-of-squares."""
    z = jnp.dot(x_ref[...], w_ref[...], preferred_element_type=jnp.float32)
    z1 = z[:, :LANE]
    zs = z[:, LANE:]
    z1_ref[...] = z1
    zs_ref[...] = zs

    @pl.when(pl.program_id(0) == 0)
    def _():
        st_ref[...] = jnp.zeros_like(st_ref)

    st_ref[...] += jnp.concatenate([_sum_sumsq(z1), _sum_sumsq(zs)], axis=0)


def _stage2_kernel(z1_ref, st1_ref, bn_ref, w2_ref, z2_ref, st2_ref,
                   *, ho, wo, count):
    """BN1 + ReLU, then the 3x3 conv (padding=1) as an in-VMEM im2col:
    9 masked row-shifts concatenated along lanes feed one (tile, 9*128) x
    (9*128, 128) MXU GEMM.  Tiles contain whole images, so no halo is needed
    and the tap masks depend only on the tile-local row index."""
    st = st1_ref[...]
    y1 = jnp.maximum(_bn_apply(z1_ref[...], st[0:1, :], st[1:2, :],
                               bn_ref[0:1, :], bn_ref[1:2, :], count), 0.0)
    y1 = y1.astype(jnp.bfloat16)       # cast once; rolls/selects run in bf16
    tile_m = y1.shape[0]

    # Tap-validity masks from an in-kernel iota (no O(M) HBM mask operand).
    r = lax.broadcasted_iota(jnp.int32, (tile_m, LANE), 0)
    q = _imod(r, ho * wo)              # position inside the image
    h = _idiv(q, wo)
    w = _imod(q, wo)

    cols = []
    for t in range(9):
        dy, dx = t // 3 - 1, t % 3 - 1
        off = dy * wo + dx
        if off == 0:
            cols.append(y1)            # centre tap: always valid
        else:
            shifted = jnp.roll(y1, -off, axis=0)
            valid = ((h >= -dy) & (h < ho - dy) & (w >= -dx) & (w < wo - dx))
            cols.append(jnp.where(valid, shifted, jnp.zeros_like(shifted)))
    im2col = jnp.concatenate(cols, axis=1)             # (tile_m, 9*128) bf16
    z2 = jnp.dot(im2col, w2_ref[...], preferred_element_type=jnp.float32)
    z2_ref[...] = z2

    @pl.when(pl.program_id(0) == 0)
    def _():
        st2_ref[...] = jnp.zeros_like(st2_ref)

    st2_ref[...] += _sum_sumsq(z2)


def _stage3_kernel(z2_ref, st2_ref, bn_ref, w3_ref, z3_ref, st3_ref, *, count):
    """BN2 + ReLU, then conv3 (1x1) GEMM; accumulates stats of its output."""
    st = st2_ref[...]
    y2 = jnp.maximum(_bn_apply(z2_ref[...], st[0:1, :], st[1:2, :],
                               bn_ref[2:3, :], bn_ref[3:4, :], count), 0.0)
    z3 = jnp.dot(y2.astype(jnp.bfloat16), w3_ref[...],
                 preferred_element_type=jnp.float32)
    z3_ref[...] = z3

    @pl.when(pl.program_id(0) == 0)
    def _():
        st3_ref[...] = jnp.zeros_like(st3_ref)

    st3_ref[...] += _sum_sumsq(z3)


def _stage4_kernel(z3_ref, zs_ref, st3_ref, st1_ref, bn_ref, o_ref, *, count):
    """BN3(main) + BN3(shortcut) + add + ReLU.  BN3 shares its affine params
    between the two calls but each tensor uses its own batch statistics,
    exactly like calling the same nn.BatchNorm2d module twice."""
    g3, b3 = bn_ref[4:5, :], bn_ref[5:6, :]
    st3 = st3_ref[...]
    st1 = st1_ref[...]
    main = _bn_apply(z3_ref[...], st3[0:1, :], st3[1:2, :], g3, b3, count)
    short = _bn_apply(zs_ref[...], st1[2:3, :], st1[3:4, :], g3, b3, count)
    o_ref[...] = jnp.maximum(main + short, 0.0)


# ---------------------------------------------------------------------------
# conv_block forward (wrapper: layout glue + 4 M-tiled pallas_calls)
# ---------------------------------------------------------------------------
def conv_block_forward(x_nchw, params, stride, *, target_tile_rows=2048):
    B, Cin, H, W = x_nchw.shape
    F0 = params["w1"].shape[1]
    F1 = params["w2"].shape[3]
    F2 = params["w3"].shape[1]
    # TODO(synk): generalize to >128 channels (multiple lane tiles per conv).
    assert max(Cin, F0, F1, F2) <= LANE

    # kernel_size=1 conv with stride s == spatial subsampling + pointwise GEMM.
    Ho = (H - 1) // stride + 1
    Wo = (W - 1) // stride + 1
    rows_per_img = Ho * Wo
    M = B * rows_per_img

    # ---- M tiling: whole images per tile so the 3x3 conv never needs a halo.
    # target_tile_rows ~2048 keeps double-buffered tiles comfortably inside
    # v7x's 64 MiB VMEM; v5e/v6e could use larger tiles.
    imgs_per_tile = max(1, min(B, target_tile_rows // rows_per_img))
    while B % imgs_per_tile:
        imgs_per_tile -= 1
    tile_m = imgs_per_tile * rows_per_img
    if tile_m % 8 != 0 and tile_m != M:
        imgs_per_tile, tile_m = B, M    # (8,128) sublane constraint fallback
    n_tiles = M // tile_m

    # ---- layout glue: NCHW -> lane-dense (M, 128) bf16 rows -----------------
    x_nhwc = jnp.transpose(x_nchw, (0, 2, 3, 1))
    xs2d = x_nhwc[:, ::stride, ::stride, :].reshape(M, Cin)
    x_pad = jnp.pad(xs2d, ((0, 0), (0, LANE - Cin))).astype(jnp.bfloat16)

    # ---- packed weight operands (bf16, resident in VMEM) --------------------
    def _pad2(w):
        return jnp.pad(w, ((0, LANE - w.shape[0]), (0, LANE - w.shape[1])))

    # conv1 and conv_shortcut share their input -> one (128, 256) GEMM operand
    w1s = jnp.concatenate([_pad2(params["w1"]), _pad2(params["ws"])],
                          axis=1).astype(jnp.bfloat16)
    # 3x3 conv, tap-major rows (t = ky*3 + kx) -> one (9*128, 128) GEMM operand
    w2p = jnp.pad(params["w2"],
                  ((0, 0), (0, 0), (0, LANE - F0), (0, LANE - F1)))
    w2p = w2p.reshape(9 * LANE, LANE).astype(jnp.bfloat16)
    w3p = _pad2(params["w3"]).astype(jnp.bfloat16)

    # ---- BN affine params packed into one (8, 128) f32 operand --------------
    # Padded channels carry gamma = beta = 0 so they normalize to exactly 0.
    def _pad_row(v):
        return jnp.pad(v, ((0, 0), (0, LANE - v.shape[1])))

    bn_packed = jnp.concatenate(
        [_pad_row(params[k]) for k in ("g1", "bt1", "g2", "bt2", "g3", "bt3")]
        + [jnp.zeros((2, LANE), jnp.float32)], axis=0)

    tile_spec = pl.BlockSpec((tile_m, LANE), lambda i: (i, 0))

    def _resident(shape):
        zeros = (0,) * len(shape)
        return pl.BlockSpec(shape, lambda i, _z=zeros: _z)

    # --- stage 1: conv1 + shortcut GEMM; z1/zs to HBM; stats accumulate ------
    z1, zs, st1 = pl.pallas_call(
        _stage1_kernel,
        out_shape=(jax.ShapeDtypeStruct((M, LANE), jnp.float32),
                   jax.ShapeDtypeStruct((M, LANE), jnp.float32),
                   jax.ShapeDtypeStruct((4, LANE), jnp.float32)),
        grid=(n_tiles,),
        in_specs=[tile_spec, _resident((LANE, 2 * LANE))],
        out_specs=(tile_spec, tile_spec, _resident((4, LANE))),
        compiler_params=_cparams(("arbitrary",)),
    )(x_pad, w1s)

    # --- stage 2: BN1 + ReLU -> 3x3 conv (im2col GEMM); stats of z2 ----------
    z2, st2 = pl.pallas_call(
        functools.partial(_stage2_kernel, ho=Ho, wo=Wo, count=M),
        out_shape=(jax.ShapeDtypeStruct((M, LANE), jnp.float32),
                   jax.ShapeDtypeStruct((2, LANE), jnp.float32)),
        grid=(n_tiles,),
        in_specs=[tile_spec, _resident((4, LANE)), _resident((8, LANE)),
                  _resident((9 * LANE, LANE))],
        out_specs=(tile_spec, _resident((2, LANE))),
        compiler_params=_cparams(("arbitrary",)),
    )(z1, st1, bn_packed, w2p)

    # --- stage 3: BN2 + ReLU -> conv3 GEMM; stats of z3 ----------------------
    z3, st3 = pl.pallas_call(
        functools.partial(_stage3_kernel, count=M),
        out_shape=(jax.ShapeDtypeStruct((M, LANE), jnp.float32),
                   jax.ShapeDtypeStruct((2, LANE), jnp.float32)),
        grid=(n_tiles,),
        in_specs=[tile_spec, _resident((2, LANE)), _resident((8, LANE)),
                  _resident((LANE, LANE))],
        out_specs=(tile_spec, _resident((2, LANE))),
        compiler_params=_cparams(("arbitrary",)),
    )(z2, st2, bn_packed, w3p)

    # --- stage 4: BN3(main) + BN3(shortcut) + add + ReLU (elementwise) -------
    out2d = pl.pallas_call(
        functools.partial(_stage4_kernel, count=M),
        out_shape=jax.ShapeDtypeStruct((M, LANE), jnp.float32),
        grid=(n_tiles,),
        in_specs=[tile_spec, tile_spec, _resident((2, LANE)),
                  _resident((4, LANE)), _resident((8, LANE))],
        out_specs=tile_spec,
        compiler_params=_cparams(("parallel",)),
    )(z3, zs, st3, st1, bn_packed)

    out = out2d[:, :F2].reshape(B, Ho, Wo, F2)
    return jnp.transpose(out, (0, 3, 1, 2))               # NHWC -> NCHW


# ---------------------------------------------------------------------------
# Pure-JAX reference (lax convs), using the same bf16 operand rounding
# ---------------------------------------------------------------------------
def _reference_forward(x_nchw, params, stride):
    def bn(y, g, b):
        mu = jnp.mean(y, axis=(0, 2, 3), keepdims=True)
        var = jnp.mean((y - mu) ** 2, axis=(0, 2, 3), keepdims=True)
        yn = (y - mu) * lax.rsqrt(var + EPS)
        return g.reshape(1, -1, 1, 1) * yn + b.reshape(1, -1, 1, 1)

    def conv(x, w_oihw, s, pad):
        return lax.conv_general_dilated(
            x.astype(jnp.bfloat16), w_oihw.astype(jnp.bfloat16),
            window_strides=(s, s), padding=pad,
            dimension_numbers=("NCHW", "OIHW", "NCHW"),
            preferred_element_type=jnp.float32)

    w1 = jnp.transpose(params["w1"], (1, 0))[:, :, None, None]
    w2 = jnp.transpose(params["w2"], (3, 2, 0, 1))
    w3 = jnp.transpose(params["w3"], (1, 0))[:, :, None, None]
    ws = jnp.transpose(params["ws"], (1, 0))[:, :, None, None]

    sc = bn(conv(x_nchw, ws, stride, "VALID"), params["g3"], params["bt3"])
    y = jnp.maximum(bn(conv(x_nchw, w1, stride, "VALID"),
                       params["g1"], params["bt1"]), 0.0)
    y = jnp.maximum(bn(conv(y, w2, 1, [(1, 1), (1, 1)]),
                       params["g2"], params["bt2"]), 0.0)
    y = bn(conv(y, w3, 1, "VALID"), params["g3"], params["bt3"])
    return jnp.maximum(y + sc, 0.0)


# ---------------------------------------------------------------------------
# Deterministic synthetic parameters
# ---------------------------------------------------------------------------
def init_params(key, input_dim, filters):
    """Weights stored in GEMM layout (in_ch[, kh, kw], out_ch).  Conv biases
    are omitted: with training-mode BatchNorm right after each conv they
    cancel exactly in (y - mean(y)), so the forward output is unchanged."""
    f0, f1, f2 = filters
    keys = jax.random.split(key, 10)
    row = lambda v: v.reshape(1, -1).astype(jnp.float32)
    return {
        "w1": jax.random.normal(keys[0], (input_dim, f0), jnp.float32) * 0.1,
        "w2": jax.random.normal(keys[1], (3, 3, f0, f1), jnp.float32) * 0.1,  # HWIO
        "w3": jax.random.normal(keys[2], (f1, f2), jnp.float32) * 0.1,
        "ws": jax.random.normal(keys[3], (input_dim, f2), jnp.float32) * 0.1,
        "g1": row(1.0 + 0.1 * jax.random.normal(keys[4], (f0,))),
        "bt1": row(0.1 * jax.random.normal(keys[5], (f0,))),
        "g2": row(1.0 + 0.1 * jax.random.normal(keys[6], (f1,))),
        "bt2": row(0.1 * jax.random.normal(keys[7], (f1,))),
        "g3": row(1.0 + 0.1 * jax.random.normal(keys[8], (f2,))),
        "bt3": row(0.1 * jax.random.normal(keys[9], (f2,))),
    }


if __name__ == "__main__":
    key = jax.random.PRNGKey(0)
    k_x, k_p = jax.random.split(key)

    B, Cin, H, W = 2, 4, 16, 16
    filters = (4, 4, 8)
    stride = 2

    x = jax.random.normal(k_x, (B, Cin, H, W), jnp.float32)
    params = init_params(k_p, Cin, filters)
    ref = _reference_forward(x, params, stride)

    # (a) forced multi-tile path: 64-row tiles -> 2 grid steps, exercising the
    #     cross-tile staged BN sum/sumsq reduction.
    fwd_tiled = jax.jit(lambda xx: conv_block_forward(xx, params, stride,
                                                      target_tile_rows=64))
    out_tiled = fwd_tiled(x)
    jax.block_until_ready(out_tiled)

    # (b) default tile target (single tile at this toy size).
    fwd_default = jax.jit(lambda xx: conv_block_forward(xx, params, stride))
    out_default = fwd_default(x)
    jax.block_until_ready(out_default)

    for out in (out_tiled, out_default):
        assert out.shape == (B, filters[2], H // stride, W // stride), out.shape
        assert bool(jnp.all(out >= 0.0))                  # final ReLU
        np.testing.assert_allclose(np.asarray(out), np.asarray(ref),
                                   rtol=2e-2, atol=2e-2)
    print("KERNEL_OK")
</pallas_src>

<mosaic_0001>
module attributes {stable_mosaic.version = 11 : i64} {
  func.func @_stage1_kernel(%arg0: i32, %arg1: memref<64x128xbf16, #tpu.memory_space<vmem>>, %arg2: memref<128x256xbf16, #tpu.memory_space<vmem>>, %arg3: memref<64x128xf32, #tpu.memory_space<vmem>>, %arg4: memref<64x128xf32, #tpu.memory_space<vmem>>, %arg5: memref<4x128xf32, #tpu.memory_space<vmem>>) attributes {dimension_semantics = [#tpu.dimension_semantics<arbitrary>], iteration_bounds = array<i64: 2>, scalar_prefetch = 0 : i64, scratch_operands = 0 : i64, tpu.core_type = #tpu.core_type<tc>, window_params = [{transform_indices = @transform_0, window_bounds = array<i64: 64, 128>}, {pipeline_mode = #tpu.pipeline_mode<synchronous>, transform_indices = @transform_1, window_bounds = array<i64: 128, 256>}, {transform_indices = @transform_2, window_bounds = array<i64: 64, 128>}, {transform_indices = @transform_3, window_bounds = array<i64: 64, 128>}, {pipeline_mode = #tpu.pipeline_mode<synchronous>, transform_indices = @transform_4, window_bounds = array<i64: 4, 128>}]} {
    %c0 = arith.constant 0 : index
    %c0_0 = arith.constant 0 : index
    %0 = vector.load %arg1[%c0, %c0_0] : memref<64x128xbf16, #tpu.memory_space<vmem>>, vector<64x128xbf16>
    %c0_1 = arith.constant 0 : index
    %c0_2 = arith.constant 0 : index
    %1 = vector.load %arg2[%c0_1, %c0_2] : memref<128x256xbf16, #tpu.memory_space<vmem>>, vector<128x256xbf16>
    %cst = arith.constant dense<0.000000e+00> : vector<64x256xf32>
    %2 = tpu.matmul %0, %1, %cst {dimension_numbers = #tpu.dot_dimension_numbers<[1], [0], [0], [1], [0, 0, 1, 1], [], []>} : vector<64x128xbf16>, vector<128x256xbf16>, vector<64x256xf32> -> vector<64x256xf32>
    %3 = vector.extract_strided_slice %2 {offsets = [0, 0], sizes = [64, 128], strides = [1, 1]} : vector<64x256xf32> to vector<64x128xf32>
    %4 = vector.extract_strided_slice %2 {offsets = [0, 128], sizes = [64, 128], strides = [1, 1]} : vector<64x256xf32> to vector<64x128xf32>
    %c0_3 = arith.constant 0 : index
    %c0_4 = arith.constant 0 : index
    %5 = vector.load %arg3[%c0_3, %c0_4] : memref<64x128xf32, #tpu.memory_space<vmem>>, vector<64x128xf32>
    tpu.vector_store %arg3[%c0_3, %c0_4], %3 {strides = array<i32>} : memref<64x128xf32, #tpu.memory_space<vmem>>, vector<64x128xf32>,
    %c0_5 = arith.constant 0 : index
    %c0_6 = arith.constant 0 : index
    %6 = vector.load %arg4[%c0_5, %c0_6] : memref<64x128xf32, #tpu.memory_space<vmem>>, vector<64x128xf32>
    tpu.vector_store %arg4[%c0_5, %c0_6], %4 {strides = array<i32>} : memref<64x128xf32, #tpu.memory_space<vmem>>, vector<64x128xf32>,
    %c0_i32 = arith.constant 0 : i32
    %7 = arith.cmpi eq, %arg0, %c0_i32 : i32
    %8 = arith.extui %7 : i1 to i32
    %c0_i32_7 = arith.constant 0 : i32
    %9 = arith.cmpi ne, %8, %c0_i32_7 : i32
    scf.if %9 {
      %cst_16 = arith.constant 0.000000e+00 : f32
      %26 = vector.broadcast %cst_16 : f32 to vector<4x128xf32>
      %c0_17 = arith.constant 0 : index
      %c0_18 = arith.constant 0 : index
      %27 = vector.load %arg5[%c0_17, %c0_18] : memref<4x128xf32, #tpu.memory_space<vmem>>, vector<4x128xf32>
      tpu.vector_store %arg5[%c0_17, %c0_18], %26 {strides = array<i32>} : memref<4x128xf32, #tpu.memory_space<vmem>>, vector<4x128xf32>,
    } else {
    }
    %c0_8 = arith.constant 0 : index
    %c0_9 = arith.constant 0 : index
    %10 = vector.load %arg5[%c0_8, %c0_9] : memref<4x128xf32, #tpu.memory_space<vmem>>, vector<4x128xf32>
    %cst_10 = arith.constant dense<0.000000e+00> : vector<128xf32>
    %11 = vector.multi_reduction <add>, %3, %cst_10 [0] : vector<64x128xf32> to vector<128xf32>
    %12 = vector.shape_cast %11 : vector<128xf32> to vector<1x128xf32>
    %13 = arith.mulf %3, %3 : vector<64x128xf32>
    %cst_11 = arith.constant dense<0.000000e+00> : vector<128xf32>
    %14 = vector.multi_reduction <add>, %13, %cst_11 [0] : vector<64x128xf32> to vector<128xf32>
    %15 = vector.shape_cast %14 : vector<128xf32> to vector<1x128xf32>
    %16 = tpu.concatenate %12, %15 in 0 : vector<1x128xf32>, vector<1x128xf32> -> vector<2x128xf32>
    %cst_12 = arith.constant dense<0.000000e+00> : vector<128xf32>
    %17 = vector.multi_reduction <add>, %4, %cst_12 [0] : vector<64x128xf32> to vector<128xf32>
    %18 = vector.shape_cast %17 : vector<128xf32> to vector<1x128xf32>
    %19 = arith.mulf %4, %4 : vector<64x128xf32>
    %cst_13 = arith.constant dense<0.000000e+00> : vector<128xf32>
    %20 = vector.multi_reduction <add>, %19, %cst_13 [0] : vector<64x128xf32> to vector<128xf32>
    %21 = vector.shape_cast %20 : vector<128xf32> to vector<1x128xf32>
    %22 = tpu.concatenate %18, %21 in 0 : vector<1x128xf32>, vector<1x128xf32> -> vector<2x128xf32>
    %23 = tpu.concatenate %16, %22 in 0 : vector<2x128xf32>, vector<2x128xf32> -> vector<4x128xf32>
    %24 = arith.addf %10, %23 : vector<4x128xf32>
    %c0_14 = arith.constant 0 : index
    %c0_15 = arith.constant 0 : index
    %25 = vector.load %arg5[%c0_14, %c0_15] : memref<4x128xf32, #tpu.memory_space<vmem>>, vector<4x128xf32>
    tpu.vector_store %arg5[%c0_14, %c0_15], %24 {strides = array<i32>} : memref<4x128xf32, #tpu.memory_space<vmem>>, vector<4x128xf32>,
    return
  }
  func.func @transform_0(%arg0: i32) -> (i32, i32) {
    %c0_i32 = arith.constant 0 : i32
    %c0_i32_0 = arith.constant 0 : i32
    return %arg0, %c0_i32 : i32, i32
  }
  func.func @transform_1(%arg0: i32) -> (i32, i32) {
    %c0_i32 = arith.constant 0 : i32
    %c0_i32_0 = arith.constant 0 : i32
    %c0_i32_1 = arith.constant 0 : i32
    return %c0_i32, %c0_i32_0 : i32, i32
  }
  func.func @transform_2(%arg0: i32) -> (i32, i32) {
    %c0_i32 = arith.constant 0 : i32
    %c0_i32_0 = arith.constant 0 : i32
    return %arg0, %c0_i32 : i32, i32
  }
  func.func @transform_3(%arg0: i32) -> (i32, i32) {
    %c0_i32 = arith.constant 0 : i32
    %c0_i32_0 = arith.constant 0 : i32
    return %arg0, %c0_i32 : i32, i32
  }
  func.func @transform_4(%arg0: i32) -> (i32, i32) {
    %c0_i32 = arith.constant 0 : i32
    %c0_i32_0 = arith.constant 0 : i32
    %c0_i32_1 = arith.constant 0 : i32
    return %c0_i32, %c0_i32_0 : i32, i32
  }
}

module attributes {stable_mosaic.version = 11 : i64} {
  func.func @_stage3_kernel(%arg0: i32, %arg1: memref<64x128xf32, #tpu.memory_space<vmem>>, %arg2: memref<2x128xf32, #tpu.memory_space<vmem>>, %arg3: memref<8x128xf32, #tpu.memory_space<vmem>>, %arg4: memref<128x128xbf16, #tpu.memory_space<vmem>>, %arg5: memref<64x128xf32, #tpu.memory_space<vmem>>, %arg6: memref<2x128xf32, #tpu.memory_space<vmem>>) attributes {dimension_semantics = [#tpu.dimension_semantics<arbitrary>], iteration_bounds = array<i64: 2>, scalar_prefetch = 0 : i64, scratch_operands = 0 : i64, tpu.core_type = #tpu.core_type<tc>, window_params = [{transform_indices = @transform_0, window_bounds = array<i64: 64, 128>}, {pipeline_mode = #tpu.pipeline_mode<synchronous>, transform_indices = @transform_1, window_bounds = array<i64: 2, 128>}, {pipeline_mode = #tpu.pipeline_mode<synchronous>, transform_indices = @transform_2, window_bounds = array<i64: 8, 128>}, {pipeline_mode = #tpu.pipeline_mode<synchronous>, transform_indices = @transform_3, window_bounds = array<i64: 128, 128>}, {transform_indices = @transform_4, window_bounds = array<i64: 64, 128>}, {pipeline_mode = #tpu.pipeline_mode<synchronous>, transform_indices = @transform_5, window_bounds = array<i64: 2, 128>}]} {
    %c0 = arith.constant 0 : index
    %c0_0 = arith.constant 0 : index
    %0 = vector.load %arg2[%c0, %c0_0] : memref<2x128xf32, #tpu.memory_space<vmem>>, vector<2x128xf32>
    %c0_1 = arith.constant 0 : index
    %c0_2 = arith.constant 0 : index
    %1 = vector.load %arg1[%c0_1, %c0_2] : memref<64x128xf32, #tpu.memory_space<vmem>>, vector<64x128xf32>
    %2 = vector.extract_strided_slice %0 {offsets = [0, 0], sizes = [1, 128], strides = [1, 1]} : vector<2x128xf32> to vector<1x128xf32>
    %3 = vector.extract_strided_slice %0 {offsets = [1, 0], sizes = [1, 128], strides = [1, 1]} : vector<2x128xf32> to vector<1x128xf32>
    %c2 = arith.constant 2 : index
    %c0_3 = arith.constant 0 : index
    %4 = vector.load %arg3[%c2, %c0_3] : memref<8x128xf32, #tpu.memory_space<vmem>>, vector<1x128xf32>
    %c3 = arith.constant 3 : index
    %c0_4 = arith.constant 0 : index
    %5 = vector.load %arg3[%c3, %c0_4] : memref<8x128xf32, #tpu.memory_space<vmem>>, vector<1x128xf32>
    %cst = arith.constant 7.812500e-03 : f32
    %6 = vector.broadcast %cst : f32 to vector<1x128xf32>
    %7 = arith.mulf %2, %6 : vector<1x128xf32>
    %cst_5 = arith.constant 7.812500e-03 : f32
    %8 = vector.broadcast %cst_5 : f32 to vector<1x128xf32>
    %9 = arith.mulf %3, %8 : vector<1x128xf32>
    %10 = arith.mulf %7, %7 : vector<1x128xf32>
    %11 = arith.subf %9, %10 : vector<1x128xf32>
    %cst_6 = arith.constant 0.000000e+00 : f32
    %12 = vector.broadcast %cst_6 : f32 to vector<1x128xf32>
    %13 = arith.maximumf %11, %12 : vector<1x128xf32>
    %14 = vector.broadcast %7 : vector<1x128xf32> to vector<64x128xf32>
    %15 = arith.subf %1, %14 : vector<64x128xf32>
    %cst_7 = arith.constant 9.99999974E-6 : f32
    %16 = vector.broadcast %cst_7 : f32 to vector<1x128xf32>
    %17 = arith.addf %13, %16 : vector<1x128xf32>
    %18 = math.rsqrt %17 : vector<1x128xf32>
    %19 = vector.broadcast %18 : vector<1x128xf32> to vector<64x128xf32>
    %20 = arith.mulf %15, %19 : vector<64x128xf32>
    %21 = vector.broadcast %4 : vector<1x128xf32> to vector<64x128xf32>
    %22 = arith.mulf %21, %20 : vector<64x128xf32>
    %23 = vector.broadcast %5 : vector<1x128xf32> to vector<64x128xf32>
    %24 = arith.addf %22, %23 : vector<64x128xf32>
    %cst_8 = arith.constant 0.000000e+00 : f32
    %25 = vector.broadcast %cst_8 : f32 to vector<64x128xf32>
    %26 = arith.maximumf %24, %25 : vector<64x128xf32>
    %27 = arith.truncf %26 : vector<64x128xf32> to vector<64x128xbf16>
    %c0_9 = arith.constant 0 : index
    %c0_10 = arith.constant 0 : index
    %28 = vector.load %arg4[%c0_9, %c0_10] : memref<128x128xbf16, #tpu.memory_space<vmem>>, vector<128x128xbf16>
    %cst_11 = arith.constant dense<0.000000e+00> : vector<64x128xf32>
    %29 = tpu.matmul %27, %28, %cst_11 {dimension_numbers = #tpu.dot_dimension_numbers<[1], [0], [0], [1], [0, 0, 1, 1], [], []>} : vector<64x128xbf16>, vector<128x128xbf16>, vector<64x128xf32> -> vector<64x128xf32>
    %c0_12 = arith.constant 0 : index
    %c0_13 = arith.constant 0 : index
    %30 = vector.load %arg5[%c0_12, %c0_13] : memref<64x128xf32, #tpu.memory_space<vmem>>, vector<64x128xf32>
    tpu.vector_store %arg5[%c0_12, %c0_13], %29 {strides = array<i32>} : memref<64x128xf32, #tpu.memory_space<vmem>>, vector<64x128xf32>,
    %c0_i32 = arith.constant 0 : i32
    %31 = arith.cmpi eq, %arg0, %c0_i32 : i32
    %32 = arith.extui %31 : i1 to i32
    %c0_i32_14 = arith.constant 0 : i32
    %33 = arith.cmpi ne, %32, %c0_i32_14 : i32
    scf.if %33 {
      %cst_21 = arith.constant 0.000000e+00 : f32
      %43 = vector.broadcast %cst_21 : f32 to vector<2x128xf32>
      %c0_22 = arith.constant 0 : index
      %c0_23 = arith.constant 0 : index
      %44 = vector.load %arg6[%c0_22, %c0_23] : memref<2x128xf32, #tpu.memory_space<vmem>>, vector<2x128xf32>
      tpu.vector_store %arg6[%c0_22, %c0_23], %43 {strides = array<i32>} : memref<2x128xf32, #tpu.memory_space<vmem>>, vector<2x128xf32>,
    } else {
    }
    %c0_15 = arith.constant 0 : index
    %c0_16 = arith.constant 0 : index
    %34 = vector.load %arg6[%c0_15, %c0_16] : memref<2x128xf32, #tpu.memory_space<vmem>>, vector<2x128xf32>
    %cst_17 = arith.constant dense<0.000000e+00> : vector<128xf32>
    %35 = vector.multi_reduction <add>, %29, %cst_17 [0] : vector<64x128xf32> to vector<128xf32>
    %36 = vector.shape_cast %35 : vector<128xf32> to vector<1x128xf32>
    %37 = arith.mulf %29, %29 : vector<64x128xf32>
    %cst_18 = arith.constant dense<0.000000e+00> : vector<128xf32>
    %38 = vector.multi_reduction <add>, %37, %cst_18 [0] : vector<64x128xf32> to vector<128xf32>
    %39 = vector.shape_cast %38 : vector<128xf32> to vector<1x128xf32>
    %40 = tpu.concatenate %36, %39 in 0 : vector<1x128xf32>, vector<1x128xf32> -> vector<2x128xf32>
    %41 = arith.addf %34, %40 : vector<2x128xf32>
    %c0_19 = arith.constant 0 : index
    %c0_20 = arith.constant 0 : index
    %42 = vector.load %arg6[%c0_19, %c0_20] : memref<2x128xf32, #tpu.memory_space<vmem>>, vector<2x128xf32>
    tpu.vector_store %arg6[%c0_19, %c0_20], %41 {strides = array<i32>} : memref<2x128xf32, #tpu.memory_space<vmem>>, vector<2x128xf32>,
    return
  }
  func.func @transform_0(%arg0: i32) -> (i32, i32) {
    %c0_i32 = arith.constant 0 : i32
    %c0_i32_0 = arith.constant 0 : i32
    return %arg0, %c0_i32 : i32, i32
  }
  func.func @transform_1(%arg0: i32) -> (i32, i32) {
    %c0_i32 = arith.constant 0 : i32
    %c0_i32_0 = arith.constant 0 : i32
    %c0_i32_1 = arith.constant 0 : i32
    return %c0_i32, %c0_i32_0 : i32, i32
  }
  func.func @transform_2(%arg0: i32) -> (i32, i32) {
    %c0_i32 = arith.constant 0 : i32
    %c0_i32_0 = arith.constant 0 : i32
    %c0_i32_1 = arith.constant 0 : i32
    return %c0_i32, %c0_i32_0 : i32, i32
  }
  func.func @transform_3(%arg0: i32) -> (i32, i32) {
    %c0_i32 = arith.constant 0 : i32
    %c0_i32_0 = arith.constant 0 : i32
    %c0_i32_1 = arith.constant 0 : i32
    return %c0_i32, %c0_i32_0 : i32, i32
  }
  func.func @transform_4(%arg0: i32) -> (i32, i32) {
    %c0_i32 = arith.constant 0 : i32
    %c0_i32_0 = arith.constant 0 : i32
    return %arg0, %c0_i32 : i32, i32
  }
  func.func @transform_5(%arg0: i32) -> (i32, i32) {
    %c0_i32 = arith.constant 0 : i32
    %c0_i32_0 = arith.constant 0 : i32
    %c0_i32_1 = arith.constant 0 : i32
    return %c0_i32, %c0_i32_0 : i32, i32
  }
}

module attributes {stable_mosaic.version = 11 : i64} {
  func.func @_stage2_kernel(%arg0: i32, %arg1: memref<64x128xf32, #tpu.memory_space<vmem>>, %arg2: memref<4x128xf32, #tpu.memory_space<vmem>>, %arg3: memref<8x128xf32, #tpu.memory_space<vmem>>, %arg4: memref<1152x128xbf16, #tpu.memory_space<vmem>>, %arg5: memref<64x128xf32, #tpu.memory_space<vmem>>, %arg6: memref<2x128xf32, #tpu.memory_space<vmem>>) attributes {dimension_semantics = [#tpu.dimension_semantics<arbitrary>], iteration_bounds = array<i64: 2>, scalar_prefetch = 0 : i64, scratch_operands = 0 : i64, tpu.core_type = #tpu.core_type<tc>, window_params = [{transform_indices = @transform_0, window_bounds = array<i64: 64, 128>}, {pipeline_mode = #tpu.pipeline_mode<synchronous>, transform_indices = @transform_1, window_bounds = array<i64: 4, 128>}, {pipeline_mode = #tpu.pipeline_mode<synchronous>, transform_indices = @transform_2, window_bounds = array<i64: 8, 128>}, {pipeline_mode = #tpu.pipeline_mode<synchronous>, transform_indices = @transform_3, window_bounds = array<i64: 1152, 128>}, {transform_indices = @transform_4, window_bounds = array<i64: 64, 128>}, {pipeline_mode = #tpu.pipeline_mode<synchronous>, transform_indices = @transform_5, window_bounds = array<i64: 2, 128>}]} {
    %c0 = arith.constant 0 : index
    %c0_0 = arith.constant 0 : index
    %0 = vector.load %arg2[%c0, %c0_0] : memref<4x128xf32, #tpu.memory_space<vmem>>, vector<4x128xf32>
    %c0_1 = arith.constant 0 : index
    %c0_2 = arith.constant 0 : index
    %1 = vector.load %arg1[%c0_1, %c0_2] : memref<64x128xf32, #tpu.memory_space<vmem>>, vector<64x128xf32>
    %2 = vector.extract_strided_slice %0 {offsets = [0, 0], sizes = [1, 128], strides = [1, 1]} : vector<4x128xf32> to vector<1x128xf32>
    %3 = vector.extract_strided_slice %0 {offsets = [1, 0], sizes = [1, 128], strides = [1, 1]} : vector<4x128xf32> to vector<1x128xf32>
    %c0_3 = arith.constant 0 : index
    %c0_4 = arith.constant 0 : index
    %4 = vector.load %arg3[%c0_3, %c0_4] : memref<8x128xf32, #tpu.memory_space<vmem>>, vector<1x128xf32>
    %c1 = arith.constant 1 : index
    %c0_5 = arith.constant 0 : index
    %5 = vector.load %arg3[%c1, %c0_5] : memref<8x128xf32, #tpu.memory_space<vmem>>, vector<1x128xf32>
    %cst = arith.constant 7.812500e-03 : f32
    %6 = vector.broadcast %cst : f32 to vector<1x128xf32>
    %7 = arith.mulf %2, %6 : vector<1x128xf32>
    %cst_6 = arith.constant 7.812500e-03 : f32
    %8 = vector.broadcast %cst_6 : f32 to vector<1x128xf32>
    %9 = arith.mulf %3, %8 : vector<1x128xf32>
    %10 = arith.mulf %7, %7 : vector<1x128xf32>
    %11 = arith.subf %9, %10 : vector<1x128xf32>
    %cst_7 = arith.constant 0.000000e+00 : f32
    %12 = vector.broadcast %cst_7 : f32 to vector<1x128xf32>
    %13 = arith.maximumf %11, %12 : vector<1x128xf32>
    %14 = vector.broadcast %7 : vector<1x128xf32> to vector<64x128xf32>
    %15 = arith.subf %1, %14 : vector<64x128xf32>
    %cst_8 = arith.constant 9.99999974E-6 : f32
    %16 = vector.broadcast %cst_8 : f32 to vector<1x128xf32>
    %17 = arith.addf %13, %16 : vector<1x128xf32>
    %18 = math.rsqrt %17 : vector<1x128xf32>
    %19 = vector.broadcast %18 : vector<1x128xf32> to vector<64x128xf32>
    %20 = arith.mulf %15, %19 : vector<64x128xf32>
    %21 = vector.broadcast %4 : vector<1x128xf32> to vector<64x128xf32>
    %22 = arith.mulf %21, %20 : vector<64x128xf32>
    %23 = vector.broadcast %5 : vector<1x128xf32> to vector<64x128xf32>
    %24 = arith.addf %22, %23 : vector<64x128xf32>
    %cst_9 = arith.constant 0.000000e+00 : f32
    %25 = vector.broadcast %cst_9 : f32 to vector<64x128xf32>
    %26 = arith.maximumf %24, %25 : vector<64x128xf32>
    %27 = arith.truncf %26 : vector<64x128xf32> to vector<64x128xbf16>
    %28 = tpu.iota {dimensions = array<i32: 0>} : vector<64x128xi32>
    %c63_i32 = arith.constant 63 : i32
    %29 = vector.broadcast %c63_i32 : i32 to vector<64x128xi32>
    %30 = arith.andi %28, %29 : vector<64x128xi32>
    %c3_i32 = arith.constant 3 : i32
    %31 = vector.broadcast %c3_i32 : i32 to vector<64x128xi32>
    %32 = arith.shrsi %30, %31 : vector<64x128xi32>
    %c7_i32 = arith.constant 7 : i32
    %33 = vector.broadcast %c7_i32 : i32 to vector<64x128xi32>
    %34 = arith.andi %30, %33 : vector<64x128xi32>
    %35 = vector.extract_strided_slice %27 {offsets = [55, 0], sizes = [9, 128], strides = [1, 1]} : vector<64x128xbf16> to vector<9x128xbf16>
    %36 = vector.extract_strided_slice %27 {offsets = [0, 0], sizes = [55, 128], strides = [1, 1]} : vector<64x128xbf16> to vector<55x128xbf16>
    %37 = tpu.concatenate %35, %36 in 0 : vector<9x128xbf16>, vector<55x128xbf16> -> vector<64x128xbf16>
    %c1_i32 = arith.constant 1 : i32
    %38 = vector.broadcast %c1_i32 : i32 to vector<64x128xi32>
    %39 = arith.cmpi sge, %32, %38 : vector<64x128xi32>
    %c9_i32 = arith.constant 9 : i32
    %40 = vector.broadcast %c9_i32 : i32 to vector<64x128xi32>
    %41 = arith.cmpi slt, %32, %40 : vector<64x128xi32>
    %42 = arith.andi %39, %41 : vector<64x128xi1>
    %c1_i32_10 = arith.constant 1 : i32
    %43 = vector.broadcast %c1_i32_10 : i32 to vector<64x128xi32>
    %44 = arith.cmpi sge, %34, %43 : vector<64x128xi32>
    %45 = arith.andi %42, %44 : vector<64x128xi1>
    %c9_i32_11 = arith.constant 9 : i32
    %46 = vector.broadcast %c9_i32_11 : i32 to vector<64x128xi32>
    %47 = arith.cmpi slt, %34, %46 : vector<64x128xi32>
    %48 = arith.andi %45, %47 : vector<64x128xi1>
    %cst_12 = arith.constant 0.000000e+00 : bf16
    %49 = vector.broadcast %cst_12 : bf16 to vector<64x128xbf16>
    %50 = arith.select %48, %37, %49 : vector<64x128xi1>, vector<64x128xbf16>
    %51 = vector.extract_strided_slice %27 {offsets = [56, 0], sizes = [8, 128], strides = [1, 1]} : vector<64x128xbf16> to vector<8x128xbf16>
    %52 = vector.extract_strided_slice %27 {offsets = [0, 0], sizes = [56, 128], strides = [1, 1]} : vector<64x128xbf16> to vector<56x128xbf16>
    %53 = tpu.concatenate %51, %52 in 0 : vector<8x128xbf16>, vector<56x128xbf16> -> vector<64x128xbf16>
    %c1_i32_13 = arith.constant 1 : i32
    %54 = vector.broadcast %c1_i32_13 : i32 to vector<64x128xi32>
    %55 = arith.cmpi sge, %32, %54 : vector<64x128xi32>
    %c9_i32_14 = arith.constant 9 : i32
    %56 = vector.broadcast %c9_i32_14 : i32 to vector<64x128xi32>
    %57 = arith.cmpi slt, %32, %56 : vector<64x128xi32>
    %58 = arith.andi %55, %57 : vector<64x128xi1>
    %c0_i32 = arith.constant 0 : i32
    %59 = vector.broadcast %c0_i32 : i32 to vector<64x128xi32>
    %60 = arith.cmpi sge, %34, %59 : vector<64x128xi32>
    %61 = arith.andi %58, %60 : vector<64x128xi1>
    %c8_i32 = arith.constant 8 : i32
    %62 = vector.broadcast %c8_i32 : i32 to vector<64x128xi32>
    %63 = arith.cmpi slt, %34, %62 : vector<64x128xi32>
    %64 = arith.andi %61, %63 : vector<64x128xi1>
    %cst_15 = arith.constant 0.000000e+00 : bf16
    %65 = vector.broadcast %cst_15 : bf16 to vector<64x128xbf16>
    %66 = arith.select %64, %53, %65 : vector<64x128xi1>, vector<64x128xbf16>
    %67 = vector.extract_strided_slice %27 {offsets = [57, 0], sizes = [7, 128], strides = [1, 1]} : vector<64x128xbf16> to vector<7x128xbf16>
    %68 = vector.extract_strided_slice %27 {offsets = [0, 0], sizes = [57, 128], strides = [1, 1]} : vector<64x128xbf16> to vector<57x128xbf16>
    %69 = tpu.concatenate %67, %68 in 0 : vector<7x128xbf16>, vector<57x128xbf16> -> vector<64x128xbf16>
    %c1_i32_16 = arith.constant 1 : i32
    %70 = vector.broadcast %c1_i32_16 : i32 to vector<64x128xi32>
    %71 = arith.cmpi sge, %32, %70 : vector<64x128xi32>
    %c9_i32_17 = arith.constant 9 : i32
    %72 = vector.broadcast %c9_i32_17 : i32 to vector<64x128xi32>
    %73 = arith.cmpi slt, %32, %72 : vector<64x128xi32>
    %74 = arith.andi %71, %73 : vector<64x128xi1>
    %c-1_i32 = arith.constant -1 : i32
    %75 = vector.broadcast %c-1_i32 : i32 to vector<64x128xi32>
    %76 = arith.cmpi sge, %34, %75 : vector<64x128xi32>
    %77 = arith.andi %74, %76 : vector<64x128xi1>
    %c7_i32_18 = arith.constant 7 : i32
    %78 = vector.broadcast %c7_i32_18 : i32 to vector<64x128xi32>
    %79 = arith.cmpi slt, %34, %78 : vector<64x128xi32>
    %80 = arith.andi %77, %79 : vector<64x128xi1>
    %cst_19 = arith.constant 0.000000e+00 : bf16
    %81 = vector.broadcast %cst_19 : bf16 to vector<64x128xbf16>
    %82 = arith.select %80, %69, %81 : vector<64x128xi1>, vector<64x128xbf16>
    %83 = vector.extract_strided_slice %27 {offsets = [63, 0], sizes = [1, 128], strides = [1, 1]} : vector<64x128xbf16> to vector<1x128xbf16>
    %84 = vector.extract_strided_slice %27 {offsets = [0, 0], sizes = [63, 128], strides = [1, 1]} : vector<64x128xbf16> to vector<63x128xbf16>
    %85 = tpu.concatenate %83, %84 in 0 : vector<1x128xbf16>, vector<63x128xbf16> -> vector<64x128xbf16>
    %c0_i32_20 = arith.constant 0 : i32
    %86 = vector.broadcast %c0_i32_20 : i32 to vector<64x128xi32>
    %87 = arith.cmpi sge, %32, %86 : vector<64x128xi32>
    %c8_i32_21 = arith.constant 8 : i32
    %88 = vector.broadcast %c8_i32_21 : i32 to vector<64x128xi32>
    %89 = arith.cmpi slt, %32, %88 : vector<64x128xi32>
    %90 = arith.andi %87, %89 : vector<64x128xi1>
    %c1_i32_22 = arith.constant 1 : i32
    %91 = vector.broadcast %c1_i32_22 : i32 to vector<64x128xi32>
    %92 = arith.cmpi sge, %34, %91 : vector<64x128xi32>
    %93 = arith.andi %90, %92 : vector<64x128xi1>
    %c9_i32_23 = arith.constant 9 : i32
    %94 = vector.broadcast %c9_i32_23 : i32 to vector<64x128xi32>
    %95 = arith.cmpi slt, %34, %94 : vector<64x128xi32>
    %96 = arith.andi %93, %95 : vector<64x128xi1>
    %cst_24 = arith.constant 0.000000e+00 : bf16
    %97 = vector.broadcast %cst_24 : bf16 to vector<64x128xbf16>
    %98 = arith.select %96, %85, %97 : vector<64x128xi1>, vector<64x128xbf16>
    %99 = vector.extract_strided_slice %27 {offsets = [1, 0], sizes = [63, 128], strides = [1, 1]} : vector<64x128xbf16> to vector<63x128xbf16>
    %100 = vector.extract_strided_slice %27 {offsets = [0, 0], sizes = [1, 128], strides = [1, 1]} : vector<64x128xbf16> to vector<1x128xbf16>
    %101 = tpu.concatenate %99, %100 in 0 : vector<63x128xbf16>, vector<1x128xbf16> -> vector<64x128xbf16>
    %c0_i32_25 = arith.constant 0 : i32
    %102 = vector.broadcast %c0_i32_25 : i32 to vector<64x128xi32>
    %103 = arith.cmpi sge, %32, %102 : vector<64x128xi32>
    %c8_i32_26 = arith.constant 8 : i32
    %104 = vector.broadcast %c8_i32_26 : i32 to vector<64x128xi32>
    %105 = arith.cmpi slt, %32, %104 : vector<64x128xi32>
    %106 = arith.andi %103, %105 : vector<64x128xi1>
    %c-1_i32_27 = arith.constant -1 : i32
    %107 = vector.broadcast %c-1_i32_27 : i32 to vector<64x128xi32>
    %108 = arith.cmpi sge, %34, %107 : vector<64x128xi32>
    %109 = arith.andi %106, %108 : vector<64x128xi1>
    %c7_i32_28 = arith.constant 7 : i32
    %110 = vector.broadcast %c7_i32_28 : i32 to vector<64x128xi32>
    %111 = arith.cmpi slt, %34, %110 : vector<64x128xi32>
    %112 = arith.andi %109, %111 : vector<64x128xi1>
    %cst_29 = arith.constant 0.000000e+00 : bf16
    %113 = vector.broadcast %cst_29 : bf16 to vector<64x128xbf16>
    %114 = arith.select %112, %101, %113 : vector<64x128xi1>, vector<64x128xbf16>
    %115 = vector.extract_strided_slice %27 {offsets = [7, 0], sizes = [57, 128], strides = [1, 1]} : vector<64x128xbf16> to vector<57x128xbf16>
    %116 = vector.extract_strided_slice %27 {offsets = [0, 0], sizes = [7, 128], strides = [1, 1]} : vector<64x128xbf16> to vector<7x128xbf16>
    %117 = tpu.concatenate %115, %116 in 0 : vector<57x128xbf16>, vector<7x128xbf16> -> vector<64x128xbf16>
    %c-1_i32_30 = arith.constant -1 : i32
    %118 = vector.broadcast %c-1_i32_30 : i32 to vector<64x128xi32>
    %119 = arith.cmpi sge, %32, %118 : vector<64x128xi32>
    %c7_i32_31 = arith.constant 7 : i32
    %120 = vector.broadcast %c7_i32_31 : i32 to vector<64x128xi32>
    %121 = arith.cmpi slt, %32, %120 : vector<64x128xi32>
    %122 = arith.andi %119, %121 : vector<64x128xi1>
    %c1_i32_32 = arith.constant 1 : i32
    %123 = vector.broadcast %c1_i32_32 : i32 to vector<64x128xi32>
    %124 = arith.cmpi sge, %34, %123 : vector<64x128xi32>
    %125 = arith.andi %122, %124 : vector<64x128xi1>
    %c9_i32_33 = arith.constant 9 : i32
    %126 = vector.broadcast %c9_i32_33 : i32 to vector<64x128xi32>
    %127 = arith.cmpi slt, %34, %126 : vector<64x128xi32>
    %128 = arith.andi %125, %127 : vector<64x128xi1>
    %cst_34 = arith.constant 0.000000e+00 : bf16
    %129 = vector.broadcast %cst_34 : bf16 to vector<64x128xbf16>
    %130 = arith.select %128, %117, %129 : vector<64x128xi1>, vector<64x128xbf16>
    %131 = vector.extract_strided_slice %27 {offsets = [8, 0], sizes = [56, 128], strides = [1, 1]} : vector<64x128xbf16> to vector<56x128xbf16>
    %132 = vector.extract_strided_slice %27 {offsets = [0, 0], sizes = [8, 128], strides = [1, 1]} : vector<64x128xbf16> to vector<8x128xbf16>
    %133 = tpu.concatenate %131, %132 in 0 : vector<56x128xbf16>, vector<8x128xbf16> -> vector<64x128xbf16>
    %c-1_i32_35 = arith.constant -1 : i32
    %134 = vector.broadcast %c-1_i32_35 : i32 to vector<64x128xi32>
    %135 = arith.cmpi sge, %32, %134 : vector<64x128xi32>
    %c7_i32_36 = arith.constant 7 : i32
    %136 = vector.broadcast %c7_i32_36 : i32 to vector<64x128xi32>
    %137 = arith.cmpi slt, %32, %136 : vector<64x128xi32>
    %138 = arith.andi %135, %137 : vector<64x128xi1>
    %c0_i32_37 = arith.constant 0 : i32
    %139 = vector.broadcast %c0_i32_37 : i32 to vector<64x128xi32>
    %140 = arith.cmpi sge, %34, %139 : vector<64x128xi32>
    %141 = arith.andi %138, %140 : vector<64x128xi1>
    %c8_i32_38 = arith.constant 8 : i32
    %142 = vector.broadcast %c8_i32_38 : i32 to vector<64x128xi32>
    %143 = arith.cmpi slt, %34, %142 : vector<64x128xi32>
    %144 = arith.andi %141, %143 : vector<64x128xi1>
    %cst_39 = arith.constant 0.000000e+00 : bf16
    %145 = vector.broadcast %cst_39 : bf16 to vector<64x128xbf16>
    %146 = arith.select %144, %133, %145 : vector<64x128xi1>, vector<64x128xbf16>
    %147 = vector.extract_strided_slice %27 {offsets = [9, 0], sizes = [55, 128], strides = [1, 1]} : vector<64x128xbf16> to vector<55x128xbf16>
    %148 = vector.extract_strided_slice %27 {offsets = [0, 0], sizes = [9, 128], strides = [1, 1]} : vector<64x128xbf16> to vector<9x128xbf16>
    %149 = tpu.concatenate %147, %148 in 0 : vector<55x128xbf16>, vector<9x128xbf16> -> vector<64x128xbf16>
    %c-1_i32_40 = arith.constant -1 : i32
    %150 = vector.broadcast %c-1_i32_40 : i32 to vector<64x128xi32>
    %151 = arith.cmpi sge, %32, %150 : vector<64x128xi32>
    %c7_i32_41 = arith.constant 7 : i32
    %152 = vector.broadcast %c7_i32_41 : i32 to vector<64x128xi32>
    %153 = arith.cmpi slt, %32, %152 : vector<64x128xi32>
    %154 = arith.andi %151, %153 : vector<64x128xi1>
    %c-1_i32_42 = arith.constant -1 : i32
    %155 = vector.broadcast %c-1_i32_42 : i32 to vector<64x128xi32>
    %156 = arith.cmpi sge, %34, %155 : vector<64x128xi32>
    %157 = arith.andi %154, %156 : vector<64x128xi1>
    %c7_i32_43 = arith.constant 7 : i32
    %158 = vector.broadcast %c7_i32_43 : i32 to vector<64x128xi32>
    %159 = arith.cmpi slt, %34, %158 : vector<64x128xi32>
    %160 = arith.andi %157, %159 : vector<64x128xi1>
    %cst_44 = arith.constant 0.000000e+00 : bf16
    %161 = vector.broadcast %cst_44 : bf16 to vector<64x128xbf16>
    %162 = arith.select %160, %149, %161 : vector<64x128xi1>, vector<64x128xbf16>
    %163 = tpu.concatenate %50, %66, %82, %98, %27, %114, %130, %146, %162 in 1 : vector<64x128xbf16>, vector<64x128xbf16>, vector<64x128xbf16>, vector<64x128xbf16>, vector<64x128xbf16>, vector<64x128xbf16>, vector<64x128xbf16>, vector<64x128xbf16>, vector<64x128xbf16> -> vector<64x1152xbf16>
    %c0_45 = arith.constant 0 : index
    %c0_46 = arith.constant 0 : index
    %164 = vector.load %arg4[%c0_45, %c0_46] : memref<1152x128xbf16, #tpu.memory_space<vmem>>, vector<1152x128xbf16>
    %cst_47 = arith.constant dense<0.000000e+00> : vector<64x128xf32>
    %165 = tpu.matmul %163, %164, %cst_47 {dimension_numbers = #tpu.dot_dimension_numbers<[1], [0], [0], [1], [0, 0, 1, 1], [], []>} : vector<64x1152xbf16>, vector<1152x128xbf16>, vector<64x128xf32> -> vector<64x128xf32>
    %c0_48 = arith.constant 0 : index
    %c0_49 = arith.constant 0 : index
    %166 = vector.load %arg5[%c0_48, %c0_49] : memref<64x128xf32, #tpu.memory_space<vmem>>, vector<64x128xf32>
    tpu.vector_store %arg5[%c0_48, %c0_49], %165 {strides = array<i32>} : memref<64x128xf32, #tpu.memory_space<vmem>>, vector<64x128xf32>,
    %c0_i32_50 = arith.constant 0 : i32
    %167 = arith.cmpi eq, %arg0, %c0_i32_50 : i32
    %168 = arith.extui %167 : i1 to i32
    %c0_i32_51 = arith.constant 0 : i32
    %169 = arith.cmpi ne, %168, %c0_i32_51 : i32
    scf.if %169 {
      %cst_58 = arith.constant 0.000000e+00 : f32
      %179 = vector.broadcast %cst_58 : f32 to vector<2x128xf32>
      %c0_59 = arith.constant 0 : index
      %c0_60 = arith.constant 0 : index
      %180 = vector.load %arg6[%c0_59, %c0_60] : memref<2x128xf32, #tpu.memory_space<vmem>>, vector<2x128xf32>
      tpu.vector_store %arg6[%c0_59, %c0_60], %179 {strides = array<i32>} : memref<2x128xf32, #tpu.memory_space<vmem>>, vector<2x128xf32>,
    } else {
    }
    %c0_52 = arith.constant 0 : index
    %c0_53 = arith.constant 0 : index
    %170 = vector.load %arg6[%c0_52, %c0_53] : memref<2x128xf32, #tpu.memory_space<vmem>>, vector<2x128xf32>
    %cst_54 = arith.constant dense<0.000000e+00> : vector<128xf32>
    %171 = vector.multi_reduction <add>, %165, %cst_54 [0] : vector<64x128xf32> to vector<128xf32>
    %172 = vector.shape_cast %171 : vector<128xf32> to vector<1x128xf32>
    %173 = arith.mulf %165, %165 : vector<64x128xf32>
    %cst_55 = arith.constant dense<0.000000e+00> : vector<128xf32>
    %174 = vector.multi_reduction <add>, %173, %cst_55 [0] : vector<64x128xf32> to vector<128xf32>
    %175 = vector.shape_cast %174 : vector<128xf32> to vector<1x128xf32>
    %176 = tpu.concatenate %172, %175 in 0 : vector<1x128xf32>, vector<1x128xf32> -> vector<2x128xf32>
    %177 = arith.addf %170, %176 : vector<2x128xf32>
    %c0_56 = arith.constant 0 : index
    %c0_57 = arith.constant 0 : index
    %178 = vector.load %arg6[%c0_56, %c0_57] : memref<2x128xf32, #tpu.memory_space<vmem>>, vector<2x128xf32>
    tpu.vector_store %arg6[%c0_56, %c0_57], %177 {strides = array<i32>} : memref<2x128xf32, #tpu.memory_space<vmem>>, vector<2x128xf32>,
    return
  }
  func.func @transform_0(%arg0: i32) -> (i32, i32) {
    %c0_i32 = arith.constant 0 : i32
    %c0_i32_0 = arith.constant 0 : i32
    return %arg0, %c0_i32 : i32, i32
  }
  func.func @transform_1(%arg0: i32) -> (i32, i32) {
    %c0_i32 = arith.constant 0 : i32
    %c0_i32_0 = arith.constant 0 : i32
    %c0_i32_1 = arith.constant 0 : i32
    return %c0_i32, %c0_i32_0 : i32, i32
  }
  func.func @transform_2(%arg0: i32) -> (i32, i32) {
    %c0_i32 = arith.constant 0 : i32
    %c0_i32_0 = arith.constant 0 : i32
    %c0_i32_1 = arith.constant 0 : i32
    return %c0_i32, %c0_i32_0 : i32, i32
  }
  func.func @transform_3(%arg0: i32) -> (i32, i32) {
    %c0_i32 = arith.constant 0 : i32
    %c0_i32_0 = arith.constant 0 : i32
    %c0_i32_1 = arith.constant 0 : i32
    return %c0_i32, %c0_i32_0 : i32, i32
  }
  func.func @transform_4(%arg0: i32) -> (i32, i32) {
    %c0_i32 = arith.constant 0 : i32
    %c0_i32_0 = arith.constant 0 : i32
    return %arg0, %c0_i32 : i32, i32
  }
  func.func @transform_5(%arg0: i32) -> (i32, i32) {
    %c0_i32 = arith.constant 0 : i32
    %c0_i32_0 = arith.constant 0 : i32
    %c0_i32_1 = arith.constant 0 : i32
    return %c0_i32, %c0_i32_0 : i32, i32
  }
}

module attributes {stable_mosaic.version = 11 : i64} {
  func.func @_stage4_kernel(%arg0: i32, %arg1: memref<64x128xf32, #tpu.memory_space<vmem>>, %arg2: memref<64x128xf32, #tpu.memory_space<vmem>>, %arg3: memref<2x128xf32, #tpu.memory_space<vmem>>, %arg4: memref<4x128xf32, #tpu.memory_space<vmem>>, %arg5: memref<8x128xf32, #tpu.memory_space<vmem>>, %arg6: memref<64x128xf32, #tpu.memory_space<vmem>>) attributes {dimension_semantics = [#tpu.dimension_semantics<parallel>], iteration_bounds = array<i64: 2>, scalar_prefetch = 0 : i64, scratch_operands = 0 : i64, tpu.core_type = #tpu.core_type<tc>, window_params = [{transform_indices = @transform_0, window_bounds = array<i64: 64, 128>}, {transform_indices = @transform_1, window_bounds = array<i64: 64, 128>}, {pipeline_mode = #tpu.pipeline_mode<synchronous>, transform_indices = @transform_2, window_bounds = array<i64: 2, 128>}, {pipeline_mode = #tpu.pipeline_mode<synchronous>, transform_indices = @transform_3, window_bounds = array<i64: 4, 128>}, {pipeline_mode = #tpu.pipeline_mode<synchronous>, transform_indices = @transform_4, window_bounds = array<i64: 8, 128>}, {transform_indices = @transform_5, window_bounds = array<i64: 64, 128>}]} {
    %c4 = arith.constant 4 : index
    %c0 = arith.constant 0 : index
    %0 = vector.load %arg5[%c4, %c0] : memref<8x128xf32, #tpu.memory_space<vmem>>, vector<1x128xf32>
    %c5 = arith.constant 5 : index
    %c0_0 = arith.constant 0 : index
    %1 = vector.load %arg5[%c5, %c0_0] : memref<8x128xf32, #tpu.memory_space<vmem>>, vector<1x128xf32>
    %c0_1 = arith.constant 0 : index
    %c0_2 = arith.constant 0 : index
    %2 = vector.load %arg3[%c0_1, %c0_2] : memref<2x128xf32, #tpu.memory_space<vmem>>, vector<2x128xf32>
    %c0_3 = arith.constant 0 : index
    %c0_4 = arith.constant 0 : index
    %3 = vector.load %arg4[%c0_3, %c0_4] : memref<4x128xf32, #tpu.memory_space<vmem>>, vector<4x128xf32>
    %c0_5 = arith.constant 0 : index
    %c0_6 = arith.constant 0 : index
    %4 = vector.load %arg1[%c0_5, %c0_6] : memref<64x128xf32, #tpu.memory_space<vmem>>, vector<64x128xf32>
    %5 = vector.extract_strided_slice %2 {offsets = [0, 0], sizes = [1, 128], strides = [1, 1]} : vector<2x128xf32> to vector<1x128xf32>
    %6 = vector.extract_strided_slice %2 {offsets = [1, 0], sizes = [1, 128], strides = [1, 1]} : vector<2x128xf32> to vector<1x128xf32>
    %cst = arith.constant 7.812500e-03 : f32
    %7 = vector.broadcast %cst : f32 to vector<1x128xf32>
    %8 = arith.mulf %5, %7 : vector<1x128xf32>
    %cst_7 = arith.constant 7.812500e-03 : f32
    %9 = vector.broadcast %cst_7 : f32 to vector<1x128xf32>
    %10 = arith.mulf %6, %9 : vector<1x128xf32>
    %11 = arith.mulf %8, %8 : vector<1x128xf32>
    %12 = arith.subf %10, %11 : vector<1x128xf32>
    %cst_8 = arith.constant 0.000000e+00 : f32
    %13 = vector.broadcast %cst_8 : f32 to vector<1x128xf32>
    %14 = arith.maximumf %12, %13 : vector<1x128xf32>
    %15 = vector.broadcast %8 : vector<1x128xf32> to vector<64x128xf32>
    %16 = arith.subf %4, %15 : vector<64x128xf32>
    %cst_9 = arith.constant 9.99999974E-6 : f32
    %17 = vector.broadcast %cst_9 : f32 to vector<1x128xf32>
    %18 = arith.addf %14, %17 : vector<1x128xf32>
    %19 = math.rsqrt %18 : vector<1x128xf32>
    %20 = vector.broadcast %19 : vector<1x128xf32> to vector<64x128xf32>
    %21 = arith.mulf %16, %20 : vector<64x128xf32>
    %22 = vector.broadcast %0 : vector<1x128xf32> to vector<64x128xf32>
    %23 = arith.mulf %22, %21 : vector<64x128xf32>
    %24 = vector.broadcast %1 : vector<1x128xf32> to vector<64x128xf32>
    %25 = arith.addf %23, %24 : vector<64x128xf32>
    %c0_10 = arith.constant 0 : index
    %c0_11 = arith.constant 0 : index
    %26 = vector.load %arg2[%c0_10, %c0_11] : memref<64x128xf32, #tpu.memory_space<vmem>>, vector<64x128xf32>
    %27 = vector.extract_strided_slice %3 {offsets = [2, 0], sizes = [1, 128], strides = [1, 1]} : vector<4x128xf32> to vector<1x128xf32>
    %28 = vector.extract_strided_slice %3 {offsets = [3, 0], sizes = [1, 128], strides = [1, 1]} : vector<4x128xf32> to vector<1x128xf32>
    %cst_12 = arith.constant 7.812500e-03 : f32
    %29 = vector.broadcast %cst_12 : f32 to vector<1x128xf32>
    %30 = arith.mulf %27, %29 : vector<1x128xf32>
    %cst_13 = arith.constant 7.812500e-03 : f32
    %31 = vector.broadcast %cst_13 : f32 to vector<1x128xf32>
    %32 = arith.mulf %28, %31 : vector<1x128xf32>
    %33 = arith.mulf %30, %30 : vector<1x128xf32>
    %34 = arith.subf %32, %33 : vector<1x128xf32>
    %cst_14 = arith.constant 0.000000e+00 : f32
    %35 = vector.broadcast %cst_14 : f32 to vector<1x128xf32>
    %36 = arith.maximumf %34, %35 : vector<1x128xf32>
    %37 = vector.broadcast %30 : vector<1x128xf32> to vector<64x128xf32>
    %38 = arith.subf %26, %37 : vector<64x128xf32>
    %cst_15 = arith.constant 9.99999974E-6 : f32
    %39 = vector.broadcast %cst_15 : f32 to vector<1x128xf32>
    %40 = arith.addf %36, %39 : vector<1x128xf32>
    %41 = math.rsqrt %40 : vector<1x128xf32>
    %42 = vector.broadcast %41 : vector<1x128xf32> to vector<64x128xf32>
    %43 = arith.mulf %38, %42 : vector<64x128xf32>
    %44 = vector.broadcast %0 : vector<1x128xf32> to vector<64x128xf32>
    %45 = arith.mulf %44, %43 : vector<64x128xf32>
    %46 = vector.broadcast %1 : vector<1x128xf32> to vector<64x128xf32>
    %47 = arith.addf %45, %46 : vector<64x128xf32>
    %48 = arith.addf %25, %47 : vector<64x128xf32>
    %cst_16 = arith.constant 0.000000e+00 : f32
    %49 = vector.broadcast %cst_16 : f32 to vector<64x128xf32>
    %50 = arith.maximumf %48, %49 : vector<64x128xf32>
    %c0_17 = arith.constant 0 : index
    %c0_18 = arith.constant 0 : index
    %51 = vector.load %arg6[%c0_17, %c0_18] : memref<64x128xf32, #tpu.memory_space<vmem>>, vector<64x128xf32>
    tpu.vector_store %arg6[%c0_17, %c0_18], %50 {strides = array<i32>} : memref<64x128xf32, #tpu.memory_space<vmem>>, vector<64x128xf32>,
    return
  }
  func.func @transform_0(%arg0: i32) -> (i32, i32) {
    %c0_i32 = arith.constant 0 : i32
    %c0_i32_0 = arith.constant 0 : i32
    return %arg0, %c0_i32 : i32, i32
  }
  func.func @transform_1(%arg0: i32) -> (i32, i32) {
    %c0_i32 = arith.constant 0 : i32
    %c0_i32_0 = arith.constant 0 : i32
    return %arg0, %c0_i32 : i32, i32
  }
  func.func @transform_2(%arg0: i32) -> (i32, i32) {
    %c0_i32 = arith.constant 0 : i32
    %c0_i32_0 = arith.constant 0 : i32
    %c0_i32_1 = arith.constant 0 : i32
    return %c0_i32, %c0_i32_0 : i32, i32
  }
  func.func @transform_3(%arg0: i32) -> (i32, i32) {
    %c0_i32 = arith.constant 0 : i32
    %c0_i32_0 = arith.constant 0 : i32
    %c0_i32_1 = arith.constant 0 : i32
    return %c0_i32, %c0_i32_0 : i32, i32
  }
  func.func @transform_4(%arg0: i32) -> (i32, i32) {
    %c0_i32 = arith.constant 0 : i32
    %c0_i32_0 = arith.constant 0 : i32
    %c0_i32_1 = arith.constant 0 : i32
    return %c0_i32, %c0_i32_0 : i32, i32
  }
  func.func @transform_5(%arg0: i32) -> (i32, i32) {
    %c0_i32 = arith.constant 0 : i32
    %c0_i32_0 = arith.constant 0 : i32
    return %arg0, %c0_i32 : i32, i32
  }
}

</mosaic_0001>

<llo_original>
// kernel: _lambda_.7
$region0: #{_lambda_.7}
  #allocation0 [shape = 'u32[]', space=smem, size = 0x4, offset = 0x4, fixed_abs, tag = 'smem constant byte address 0x4 - core index']
  #allocation1 [shape = 'u32[144,128]{1,0:T(1,128)}', space=vmem, size = 0x12000, scoped, tag = 'internal scratch']
  %s0 = inlined_call_operand.vmem [shape: f32[128,128], index: 0, kind: input, shape index: {}]
  %s1 = inlined_call_operand.vmem [shape: f32[128,128], index: 1, kind: input, shape index: {}]
  %s2 = inlined_call_operand.vmem [shape: f32[2,128], index: 2, kind: input, shape index: {}]
  %s3 = inlined_call_operand.vmem [shape: f32[4,128], index: 3, kind: input, shape index: {}]
  %s4 = inlined_call_operand.vmem [shape: f32[8,128], index: 4, kind: input, shape index: {}]
  %s5 = inlined_call_operand.vmem [shape: f32[128,128], index: 5, kind: output, shape index: {}]
  %s6 = sld [smem:[#allocation0]]
  $region53: #{_lambda_.7} parent=0
    _
  %s8 = ssub.s32 1, %s6
  %s9 = scalar_select 0, %s8, %s6
  loop: start=0, step=1, limit=4
  $region2: #{_lambda_.7} parent=0 // loop_pre_header
    _
  $region3: #{_lambda_.7} parent=0 // loop_header
    %s11 = sphi 0, %s15
    %p12 = scmp.ge.s32.totalorder %s11, 4
    %s21 = sphi 0, %s23
    %s24 = sphi 0, %s21
    %s25 = sphi 0, %s24
    %s41 = sphi 0, %s25
    %s47 = sphi 0, %s49
    %s50 = sphi 0, %s47
    %s51 = sphi 0, %s50
    %s67 = sphi 0, %s51
    %s71 = sphi 0, %s71
    %s73 = sphi 0, %s71
    %s74 = sphi 0, %s73
    %s88 = sphi 0, %s74
    %s92 = sphi 0, %s92
    %s94 = sphi 0, %s92
    %s95 = sphi 0, %s94
    %s109 = sphi 0, %s95
    %s113 = sphi 0, %s113
    %s115 = sphi 0, %s113
    %s116 = sphi 0, %s115
    %s130 = sphi 0, %s116
    %s136 = sphi 0, %s138
    %s139 = sphi 0, %s136
    %s140 = sphi 0, %s139
    %s156 = sphi 0, %s140
  $region4: #{_lambda_.7} parent=0 // loop_header_branch
    %14 = sbr.rel (%p12) target = $region8
  $region5: #{_lambda_.7} parent=0 // loop_body
    %s16 = ssub.s32 %s11, 1
    %s17 = ssub.s32 %s11, 2
    %s18 = sadd.s32 %s11, 1
    %s19 = ssub.s32 %s11, %s18
    %p20 = scmp.eq.s32.totalorder %s19, 0
    %s22 = sadd.s32 %s21, 1
    %s23 = scalar_select %p20, %s21, %s22
    %p26 = pneg %p20
    %p27 = scmp.eq.s32.totalorder %s11, 1
    %p28 = por %p26, %p27
    %p29 = scmp.ne.s32.totalorder %s21, %s24
    %p30 = scmp.eq.s32.totalorder %s11, 0
    %p31 = por %p29, %p30
    %p32 = scmp.ne.s32.totalorder %s21, %s24
    %p33 = scmp.eq.s32.totalorder %s16, 1
    %p34 = por %p32, %p33
    %p35 = scmp.ne.s32.totalorder %s24, %s25
    %p36 = scmp.eq.s32.totalorder %s16, 0
    %p37 = por %p35, %p36
    %p38 = scmp.ne.s32.totalorder %s24, %s25
    %p39 = scmp.eq.s32.totalorder %s17, 1
    %p40 = por %p38, %p39
    %p42 = scmp.ne.s32.totalorder %s25, %s41
    %p43 = scmp.eq.s32.totalorder %s17, 0
    %p44 = por %p42, %p43
    %s45 = ssub.s32 %s11, %s18
    %p46 = scmp.eq.s32.totalorder %s45, 0
    %s48 = sadd.s32 %s47, 1
    %s49 = scalar_select %p46, %s47, %s48
    %p52 = pneg %p46
    %p53 = scmp.eq.s32.totalorder %s11, 1
    %p54 = por %p52, %p53
    %p55 = scmp.ne.s32.totalorder %s47, %s50
    %p56 = scmp.eq.s32.totalorder %s11, 0
    %p57 = por %p55, %p56
    %p58 = scmp.ne.s32.totalorder %s47, %s50
    %p59 = scmp.eq.s32.totalorder %s16, 1
    %p60 = por %p58, %p59
    %p61 = scmp.ne.s32.totalorder %s50, %s51
    %p62 = scmp.eq.s32.totalorder %s16, 0
    %p63 = por %p61, %p62
    %p64 = scmp.ne.s32.totalorder %s50, %s51
    %p65 = scmp.eq.s32.totalorder %s17, 1
    %p66 = por %p64, %p65
    %p68 = scmp.ne.s32.totalorder %s51, %s67
    %p69 = scmp.eq.s32.totalorder %s17, 0
    %p70 = por %p68, %p69
    %s72 = sadd.s32 %s71, 1
    %p75 = scmp.eq.s32.totalorder %s11, 1
    %p76 = scmp.ne.s32.totalorder %s71, %s73
    %p77 = scmp.eq.s32.totalorder %s11, 0
    %p78 = por %p76, %p77
    %p79 = scmp.ne.s32.totalorder %s71, %s73
    %p80 = scmp.eq.s32.totalorder %s16, 1
    %p81 = por %p79, %p80
    %p82 = scmp.ne.s32.totalorder %s73, %s74
    %p83 = scmp.eq.s32.totalorder %s16, 0
    %p84 = por %p82, %p83
    %p85 = scmp.ne.s32.totalorder %s73, %s74
    %p86 = scmp.eq.s32.totalorder %s17, 1
    %p87 = por %p85, %p86
    %p89 = scmp.ne.s32.totalorder %s74, %s88
    %p90 = scmp.eq.s32.totalorder %s17, 0
    %p91 = por %p89, %p90
    %s93 = sadd.s32 %s92, 1
    %p96 = scmp.eq.s32.totalorder %s11, 1
    %p97 = scmp.ne.s32.totalorder %s92, %s94
    %p98 = scmp.eq.s32.totalorder %s11, 0
    %p99 = por %p97, %p98
    %p100 = scmp.ne.s32.totalorder %s92, %s94
    %p101 = scmp.eq.s32.totalorder %s16, 1
    %p102 = por %p100, %p101
    %p103 = scmp.ne.s32.totalorder %s94, %s95
    %p104 = scmp.eq.s32.totalorder %s16, 0
    %p105 = por %p103, %p104
    %p106 = scmp.ne.s32.totalorder %s94, %s95
    %p107 = scmp.eq.s32.totalorder %s17, 1
    %p108 = por %p106, %p107
    %p110 = scmp.ne.s32.totalorder %s95, %s109
    %p111 = scmp.eq.s32.totalorder %s17, 0
    %p112 = por %p110, %p111
    %s114 = sadd.s32 %s113, 1
    %p117 = scmp.eq.s32.totalorder %s11, 1
    %p118 = scmp.ne.s32.totalorder %s113, %s115
    %p119 = scmp.eq.s32.totalorder %s11, 0
    %p120 = por %p118, %p119
    %p121 = scmp.ne.s32.totalorder %s113, %s115
    %p122 = scmp.eq.s32.totalorder %s16, 1
    %p123 = por %p121, %p122
    %p124 = scmp.ne.s32.totalorder %s115, %s116
    %p125 = scmp.eq.s32.totalorder %s16, 0
    %p126 = por %p124, %p125
    %p127 = scmp.ne.s32.totalorder %s115, %s116
    %p128 = scmp.eq.s32.totalorder %s17, 1
    %p129 = por %p127, %p128
    %p131 = scmp.ne.s32.totalorder %s116, %s130
    %p132 = scmp.eq.s32.totalorder %s17, 0
    %p133 = por %p131, %p132
    %s134 = ssub.s32 %s11, %s18
    %p135 = scmp.eq.s32.totalorder %s134, 0
    %s137 = sadd.s32 %s136, 1
    %s138 = scalar_select %p135, %s136, %s137
    %p141 = pneg %p135
    %p142 = scmp.eq.s32.totalorder %s11, 1
    %p143 = por %p141, %p142
    %p144 = scmp.ne.s32.totalorder %s136, %s139
    %p145 = scmp.eq.s32.totalorder %s11, 0
    %p146 = por %p144, %p145
    %p147 = scmp.ne.s32.totalorder %s136, %s139
    %p148 = scmp.eq.s32.totalorder %s16, 1
    %p149 = por %p147, %p148
    %p150 = scmp.ne.s32.totalorder %s139, %s140
    %p151 = scmp.eq.s32.totalorder %s16, 0
    %p152 = por %p150, %p151
    %p153 = scmp.ne.s32.totalorder %s139, %s140
    %p154 = scmp.eq.s32.totalorder %s17, 1
    %p155 = por %p153, %p154
    %p157 = scmp.ne.s32.totalorder %s140, %s156
    %p158 = scmp.eq.s32.totalorder %s17, 0
    %p159 = por %p157, %p158
    %p160 = scmp.le.s32.totalorder 1, %s11
    %p161 = scmp.lt.s32.totalorder %s11, 3
    %p162 = pnand %p160, %p161
    %p163 = pneg %p162
    // Predicated region
    $region9: #{_lambda_.7} parent=5 // pred_check
      _
    $region10: #{_lambda_.7} parent=5 // pred_check_branch
      %165 = sbr.rel (%p162) target = $region12
    $region11: #{_lambda_.7} parent=5 // pred_region
      %s166 = ssub.s32 %s11, 1
      // Predicated region
      $region13: #{_lambda_.7} parent=11 // pred_check
        %p167 = pneg %p84
      $region14: #{_lambda_.7} parent=11 // pred_check_branch
        %169 = sbr.rel (%p167) target = $region16
      $region15: #{_lambda_.7} parent=11 // pred_region
        _
      $region16: #{_lambda_.7} parent=11 // pred_fallthru
        _
      // Predicated region
      $region17: #{_lambda_.7} parent=11 // pred_check
        %p170 = pneg %p105
      $region18: #{_lambda_.7} parent=11 // pred_check_branch
        %172 = sbr.rel (%p170) target = $region20
      $region19: #{_lambda_.7} parent=11 // pred_region
        _
      $region20: #{_lambda_.7} parent=11 // pred_fallthru
        _
      // Predicated region
      $region21: #{_lambda_.7} parent=11 // pred_check
        %p173 = pneg %p126
      $region22: #{_lambda_.7} parent=11 // pred_check_branch
        %175 = sbr.rel (%p173) target = $region24
      $region23: #{_lambda_.7} parent=11 // pred_region
        _
      $region24: #{_lambda_.7} parent=11 // pred_fallthru
        _
    $region12: #{_lambda_.7} parent=5 // pred_fallthru
      _
    %p176 = scmp.lt.s32.totalorder %s11, 2
    // Predicated region
    $region25: #{_lambda_.7} parent=5 // pred_check
      %p177 = pneg %p176
    $region26: #{_lambda_.7} parent=5 // pred_check_branch
      %179 = sbr.rel (%p177) target = $region28
    $region27: #{_lambda_.7} parent=5 // pred_region
      // Predicated region
      $region29: #{_lambda_.7} parent=27 // pred_check
        %p180 = pneg %p31
      $region30: #{_lambda_.7} parent=27 // pred_check_branch
        %182 = sbr.rel (%p180) target = $region32
      $region31: #{_lambda_.7} parent=27 // pred_region
        %s183 = smul.u32 8, %s11
        %p184 = scmp.lt.s32.totalorder %s183, 15
        %s185 = scalar_select %p184, %s183, 15
        %s186 = smul.addr %s185, 8
        %s187 = scalar_lea.vmem %s0, %s186
        %s188 = smul.u32 8, %s11
      $region32: #{_lambda_.7} parent=27 // pred_fallthru
        _
      // Predicated region
      $region33: #{_lambda_.7} parent=27 // pred_check
        %p189 = pneg %p57
      $region34: #{_lambda_.7} parent=27 // pred_check_branch
        %191 = sbr.rel (%p189) target = $region36
      $region35: #{_lambda_.7} parent=27 // pred_region
        %s192 = smul.u32 8, %s11
        %p193 = scmp.lt.s32.totalorder %s192, 15
        %s194 = scalar_select %p193, %s192, 15
        %s195 = smul.addr %s194, 8
        %s196 = scalar_lea.vmem %s1, %s195
        %s197 = smul.u32 8, %s11
      $region36: #{_lambda_.7} parent=27 // pred_fallthru
        _
    $region28: #{_lambda_.7} parent=5 // pred_fallthru
      _
    %p198 = scmp.le.s32.totalorder 1, %s11
    %p199 = scmp.lt.s32.totalorder %s11, 3
    %p200 = pnand %p198, %p199
    %p201 = pneg %p200
    // Predicated region
    $region37: #{_lambda_.7} parent=5 // pred_check
      _
    $region38: #{_lambda_.7} parent=5 // pred_check_branch
      %203 = sbr.rel (%p200) target = $region40
    $region39: #{_lambda_.7} parent=5 // pred_region
      %s204 = ssub.s32 %s11, 1
      %s205 = smul.u32 8, %s16
      %p206 = scmp.lt.s32.totalorder %s205, 15
      %s207 = scalar_select %p206, %s205, 15
      %s208 = smul.addr %s207, 8
      %s209 = scalar_lea.vmem %s0, %s208
      %p210 = pneg %p37
      %p211 = pneg %p34
      %s212 = smul.u32 8, %s16
      %p213 = scmp.lt.s32.totalorder %s212, 15
      %s214 = scalar_select %p213, %s212, 15
      %s215 = smul.addr %s214, 8
      %s216 = scalar_lea.vmem %s1, %s215
      %p217 = pneg %p63
      %p218 = pneg %p60
      %p219 = pneg %p84
      %p220 = pneg %p81
      %p221 = pneg %p105
      %p222 = pneg %p102
      %p223 = pneg %p126
      %p224 = pneg %p123
      %p225 = pneg %p152
      %p226 = pneg %p149
      %s227 = smul.u32 8, %s16
      %p228 = scmp.lt.s32.totalorder %s227, 15
      %s229 = scalar_select %p228, %s227, 15
      %s230 = smul.addr %s229, 8
      %s231 = scalar_lea.vmem %s5, %s230
      %s232 = smul.u32 8, %s16
      %p233 = scmp.lt.s32.totalorder %s232, 15
      %s234 = scalar_select %p233, %s232, 15
      %s235 = smul.addr %s234, 8
      %s236 = scalar_lea.vmem %s0, %s235
      %s237 = smul.u32 8, %s16
      %s238 = smul.u32 8, %s16
      %p239 = scmp.lt.s32.totalorder %s238, 15
      %s240 = scalar_select %p239, %s238, 15
      %s241 = smul.addr %s240, 8
      %s242 = scalar_lea.vmem %s1, %s241
      %s243 = smul.u32 8, %s16
      %s244 = smul.u32 8, %s16
      %p245 = scmp.lt.s32.totalorder %s244, 15
      %s246 = scalar_select %p245, %s244, 15
      %s247 = smul.addr %s246, 8
      %s248 = scalar_lea.vmem %s5, %s247
      %s249 = smul.u32 8, %s16
      %v250 = vld [vmem:[%s4 + $0x4] sm:$0x1]
      %v251 = vld [vmem:[%s4 + $0x5] sm:$0x1]
      %v252 = vld [vmem:[%s2] sm:$0x3]
      %v253 = vld [vmem:[%s3] sm:$0xf]
      %v254 = vld [vmem:[%s236] sm:$0xff]
      %v255 = vld [vmem:[%s236 + $0x8] sm:$0xff]
      %v256 = vld [vmem:[%s236 + $0x10] sm:$0xff]
      %v257 = vld [vmem:[%s236 + $0x18] sm:$0xff]
      %v258 = vld [vmem:[%s236 + $0x20] sm:$0xff]
      %v259 = vld [vmem:[%s236 + $0x28] sm:$0xff]
      %v260 = vld [vmem:[%s236 + $0x30] sm:$0xff]
      %v261 = vld [vmem:[%s236 + $0x38] sm:$0xff]
      %v262 = vmul.f32 %v252, 0.0078125
      %v263 = vmul.f32 %v262, %v262
      %v265 = vrot.slane %v263, 7
      %v267 = vsub.f32 %v262, %v265
      %v268 = vmax.f32 %v267, 0.0
      %v269 = vlaneseq
      %v270 = vshrl.u32 %v269, 7
      %v271 = vsub.s32 0, %v270
      %v272 = vrot.slane %v262, %v271
      %v273 = vsub.f32 %v254, %v272
      %v274 = vsub.f32 %v255, %v272
      %v275 = vsub.f32 %v256, %v272
      %v276 = vsub.f32 %v257, %v272
      %v277 = vsub.f32 %v258, %v272
      %v278 = vsub.f32 %v259, %v272
      %v279 = vsub.f32 %v260, %v272
      %v280 = vsub.f32 %v261, %v272
      %v281 = vadd.f32 %v268, 1e-05
      %v282 = vrsqrt.pop %v281
      %v283 = vlaneseq
      %v284 = vshrl.u32 %v283, 7
      %v285 = vsub.s32 1, %v284
      %v286 = vrot.slane %v282, %v285
      %v287 = vmul.f32 %v273, %v286
      %v288 = vmul.f32 %v274, %v286
      %v289 = vmul.f32 %v275, %v286
      %v290 = vmul.f32 %v276, %v286
      %v291 = vmul.f32 %v277, %v286
      %v292 = vmul.f32 %v278, %v286
      %v293 = vmul.f32 %v279, %v286
      %v294 = vmul.f32 %v280, %v286
      %v295 = vlaneseq
      %v296 = vshrl.u32 %v295, 7
      %v297 = vsub.s32 0, %v296
      %v298 = vrot.slane %v250, %v297
      %v299 = vmul.f32 %v298, %v287
      %v300 = vmul.f32 %v298, %v288
      %v301 = vmul.f32 %v298, %v289
      %v302 = vmul.f32 %v298, %v290
      %v303 = vmul.f32 %v298, %v291
      %v304 = vmul.f32 %v298, %v292
      %v305 = vmul.f32 %v298, %v293
      %v306 = vmul.f32 %v298, %v294
      %v307 = vlaneseq
      %v308 = vshrl.u32 %v307, 7
      %v309 = vsub.s32 0, %v308
      %v310 = vrot.slane %v251, %v309
      %v311 = vadd.f32 %v299, %v310
      %v312 = vadd.f32 %v300, %v310
      %v313 = vadd.f32 %v301, %v310
      %v314 = vadd.f32 %v302, %v310
      %v315 = vadd.f32 %v303, %v310
      %v316 = vadd.f32 %v304, %v310
      %v317 = vadd.f32 %v305, %v310
      %v318 = vadd.f32 %v306, %v310
      %v319 = vld [vmem:[%s242] sm:$0xff]
      %v320 = vld [vmem:[%s242 + $0x8] sm:$0xff]
      %v321 = vld [vmem:[%s242 + $0x10] sm:$0xff]
      %v322 = vld [vmem:[%s242 + $0x18] sm:$0xff]
      %v323 = vld [vmem:[%s242 + $0x20] sm:$0xff]
      %v324 = vld [vmem:[%s242 + $0x28] sm:$0xff]
      %v325 = vld [vmem:[%s242 + $0x30] sm:$0xff]
      %v326 = vld [vmem:[%s242 + $0x38] sm:$0xff]
      %v327 = vmul.f32 %v253, 0.0078125
      %v328 = vmul.f32 %v327, %v327
      %v330 = vrot.slane %v328, 7
      %v332 = vsub.f32 %v327, %v330
      %v333 = vmax.f32 %v332, 0.0
      %v334 = vlaneseq
      %v335 = vshrl.u32 %v334, 7
      %v336 = vsub.s32 2, %v335
      %v337 = vrot.slane %v327, %v336
      %v338 = vsub.f32 %v319, %v337
      %v339 = vsub.f32 %v320, %v337
      %v340 = vsub.f32 %v321, %v337
      %v341 = vsub.f32 %v322, %v337
      %v342 = vsub.f32 %v323, %v337
      %v343 = vsub.f32 %v324, %v337
      %v344 = vsub.f32 %v325, %v337
      %v345 = vsub.f32 %v326, %v337
      %v346 = vadd.f32 %v333, 1e-05
      %v347 = vrsqrt.pop %v346
      %v348 = vlaneseq
      %v349 = vshrl.u32 %v348, 7
      %v350 = vsub.s32 3, %v349
      %v351 = vrot.slane %v347, %v350
      %v352 = vmul.f32 %v338, %v351
      %v353 = vmul.f32 %v339, %v351
      %v354 = vmul.f32 %v340, %v351
      %v355 = vmul.f32 %v341, %v351
      %v356 = vmul.f32 %v342, %v351
      %v357 = vmul.f32 %v343, %v351
      %v358 = vmul.f32 %v344, %v351
      %v359 = vmul.f32 %v345, %v351
      %v360 = vmul.f32 %v298, %v352
      %v361 = vmul.f32 %v298, %v353
      %v362 = vmul.f32 %v298, %v354
      %v363 = vmul.f32 %v298, %v355
      %v364 = vmul.f32 %v298, %v356
      %v365 = vmul.f32 %v298, %v357
      %v366 = vmul.f32 %v298, %v358
      %v367 = vmul.f32 %v298, %v359
      %v368 = vadd.f32 %v360, %v310
      %v369 = vadd.f32 %v361, %v310
      %v370 = vadd.f32 %v362, %v310
      %v371 = vadd.f32 %v363, %v310
      %v372 = vadd.f32 %v364, %v310
      %v373 = vadd.f32 %v365, %v310
      %v374 = vadd.f32 %v366, %v310
      %v375 = vadd.f32 %v367, %v310
      %v376 = vadd.f32 %v311, %v368
      %v377 = vadd.f32 %v312, %v369
      %v378 = vadd.f32 %v313, %v370
      %v379 = vadd.f32 %v314, %v371
      %v380 = vadd.f32 %v315, %v372
      %v381 = vadd.f32 %v316, %v373
      %v382 = vadd.f32 %v317, %v374
      %v383 = vadd.f32 %v318, %v375
      %v384 = vmax.f32 %v376, 0.0
      %v385 = vmax.f32 %v377, 0.0
      %v386 = vmax.f32 %v378, 0.0
      %v387 = vmax.f32 %v379, 0.0
      %v388 = vmax.f32 %v380, 0.0
      %v389 = vmax.f32 %v381, 0.0
      %v390 = vmax.f32 %v382, 0.0
      %v391 = vmax.f32 %v383, 0.0
      %392 = vst [vmem:[%s248] sm:$0xff] %v384
      %393 = vst [vmem:[%s248 + $0x8] sm:$0xff] %v385
      %394 = vst [vmem:[%s248 + $0x10] sm:$0xff] %v386
      %395 = vst [vmem:[%s248 + $0x18] sm:$0xff] %v387
      %396 = vst [vmem:[%s248 + $0x20] sm:$0xff] %v388
      %397 = vst [vmem:[%s248 + $0x28] sm:$0xff] %v389
      %398 = vst [vmem:[%s248 + $0x30] sm:$0xff] %v390
      %399 = vst [vmem:[%s248 + $0x38] sm:$0xff] %v391
      %s400 = smul.u32 8, %s16
      %p401 = scmp.lt.s32.totalorder %s400, 15
      %s402 = scalar_select %p401, %s400, 15
      %s403 = smul.addr %s402, 8
      %s404 = scalar_lea.vmem %s5, %s403
      // Predicated region
      $region41: #{_lambda_.7} parent=39 // pred_check
        %p405 = pneg %p149
      $region42: #{_lambda_.7} parent=39 // pred_check_branch
        %407 = sbr.rel (%p405) target = $region44
      $region43: #{_lambda_.7} parent=39 // pred_region
        %s408 = smul.u32 8, %s16
      $region44: #{_lambda_.7} parent=39 // pred_fallthru
        _
    $region40: #{_lambda_.7} parent=5 // pred_fallthru
      _
    %p409 = scmp.le.s32.totalorder 2, %s11
    // Predicated region
    $region45: #{_lambda_.7} parent=5 // pred_check
      %p410 = pneg %p409
    $region46: #{_lambda_.7} parent=5 // pred_check_branch
      %412 = sbr.rel (%p410) target = $region48
    $region47: #{_lambda_.7} parent=5 // pred_region
      %s413 = ssub.s32 %s11, 2
      // Predicated region
      $region49: #{_lambda_.7} parent=47 // pred_check
        %p414 = pneg %p155
      $region50: #{_lambda_.7} parent=47 // pred_check_branch
        %416 = sbr.rel (%p414) target = $region52
      $region51: #{_lambda_.7} parent=47 // pred_region
        %s417 = smul.u32 8, %s17
        %p418 = scmp.lt.s32.totalorder %s417, 15
        %s419 = scalar_select %p418, %s417, 15
        %s420 = smul.addr %s419, 8
        %s421 = scalar_lea.vmem %s5, %s420
      $region52: #{_lambda_.7} parent=47 // pred_fallthru
        _
    $region48: #{_lambda_.7} parent=5 // pred_fallthru
      _
  $region6: #{_lambda_.7} parent=0 // loop_footer
    %s15 = sadd.s32 1, %s11
  $region7: #{_lambda_.7} parent=0 // loop_footer_branch
    %10 = sbr.rel target = $region3
  $region8: #{_lambda_.7} parent=0 // loop_exit
    _

// kernel: _lambda_.4
$region0: #{_lambda_.4}
  #allocation0 [shape = 'u32[]', space=smem, size = 0x4, offset = 0x4, fixed_abs, tag = 'smem constant byte address 0x4 - core index']
  #allocation1 [shape = 'u32[144,128]{1,0:T(1,128)}', space=vmem, size = 0x12000, scoped, tag = 'internal scratch']
  %s0 = inlined_call_operand.vmem [shape: bf16[128,128], index: 0, kind: input, shape index: {}]
  %s1 = inlined_call_operand.vmem [shape: bf16[128,256], index: 1, kind: input, shape index: {}]
  %s2 = inlined_call_operand.vmem [shape: f32[128,128], index: 2, kind: output, shape index: {0}]
  %s3 = inlined_call_operand.vmem [shape: f32[128,128], index: 3, kind: output, shape index: {1}]
  %s4 = inlined_call_operand.vmem [shape: f32[4,128], index: 4, kind: output, shape index: {2}]
  %5 = xla_tuple %s2, %s3, %s4
  %s6 = sld [smem:[#allocation0]]
  $region61: #{_lambda_.4} parent=0
    _
  %s8 = ssub.s32 1, %s6
  %s9 = scalar_select 0, %s8, %s6
  loop: start=0, step=1, limit=4
  $region2: #{_lambda_.4} parent=0 // loop_pre_header
    _
  $region3: #{_lambda_.4} parent=0 // loop_header
    %s11 = sphi 0, %s15
    %p12 = scmp.ge.s32.totalorder %s11, 4
    %s21 = sphi 0, %s23
    %s24 = sphi 0, %s21
    %s25 = sphi 0, %s24
    %s41 = sphi 0, %s25
    %s45 = sphi 0, %s45
    %s47 = sphi 0, %s45
    %s48 = sphi 0, %s47
    %s62 = sphi 0, %s48
    %s68 = sphi 0, %s70
    %s71 = sphi 0, %s68
    %s72 = sphi 0, %s71
    %s88 = sphi 0, %s72
    %s94 = sphi 0, %s96
    %s97 = sphi 0, %s94
    %s98 = sphi 0, %s97
    %s114 = sphi 0, %s98
    %s118 = sphi 0, %s118
    %s120 = sphi 0, %s118
    %s121 = sphi 0, %s120
    %s135 = sphi 0, %s121
  $region4: #{_lambda_.4} parent=0 // loop_header_branch
    %14 = sbr.rel (%p12) target = $region8
  $region5: #{_lambda_.4} parent=0 // loop_body
    %s16 = ssub.s32 %s11, 1
    %s17 = ssub.s32 %s11, 2
    %s18 = sadd.s32 %s11, 1
    %s19 = ssub.s32 %s11, %s18
    %p20 = scmp.eq.s32.totalorder %s19, 0
    %s22 = sadd.s32 %s21, 1
    %s23 = scalar_select %p20, %s21, %s22
    %p26 = pneg %p20
    %p27 = scmp.eq.s32.totalorder %s11, 1
    %p28 = por %p26, %p27
    %p29 = scmp.ne.s32.totalorder %s21, %s24
    %p30 = scmp.eq.s32.totalorder %s11, 0
    %p31 = por %p29, %p30
    %p32 = scmp.ne.s32.totalorder %s21, %s24
    %p33 = scmp.eq.s32.totalorder %s16, 1
    %p34 = por %p32, %p33
    %p35 = scmp.ne.s32.totalorder %s24, %s25
    %p36 = scmp.eq.s32.totalorder %s16, 0
    %p37 = por %p35, %p36
    %p38 = scmp.ne.s32.totalorder %s24, %s25
    %p39 = scmp.eq.s32.totalorder %s17, 1
    %p40 = por %p38, %p39
    %p42 = scmp.ne.s32.totalorder %s25, %s41
    %p43 = scmp.eq.s32.totalorder %s17, 0
    %p44 = por %p42, %p43
    %s46 = sadd.s32 %s45, 1
    %p49 = scmp.eq.s32.totalorder %s11, 1
    %p50 = scmp.ne.s32.totalorder %s45, %s47
    %p51 = scmp.eq.s32.totalorder %s11, 0
    %p52 = por %p50, %p51
    %p53 = scmp.ne.s32.totalorder %s45, %s47
    %p54 = scmp.eq.s32.totalorder %s16, 1
    %p55 = por %p53, %p54
    %p56 = scmp.ne.s32.totalorder %s47, %s48
    %p57 = scmp.eq.s32.totalorder %s16, 0
    %p58 = por %p56, %p57
    %p59 = scmp.ne.s32.totalorder %s47, %s48
    %p60 = scmp.eq.s32.totalorder %s17, 1
    %p61 = por %p59, %p60
    %p63 = scmp.ne.s32.totalorder %s48, %s62
    %p64 = scmp.eq.s32.totalorder %s17, 0
    %p65 = por %p63, %p64
    %s66 = ssub.s32 %s11, %s18
    %p67 = scmp.eq.s32.totalorder %s66, 0
    %s69 = sadd.s32 %s68, 1
    %s70 = scalar_select %p67, %s68, %s69
    %p73 = pneg %p67
    %p74 = scmp.eq.s32.totalorder %s11, 1
    %p75 = por %p73, %p74
    %p76 = scmp.ne.s32.totalorder %s68, %s71
    %p77 = scmp.eq.s32.totalorder %s11, 0
    %p78 = por %p76, %p77
    %p79 = scmp.ne.s32.totalorder %s68, %s71
    %p80 = scmp.eq.s32.totalorder %s16, 1
    %p81 = por %p79, %p80
    %p82 = scmp.ne.s32.totalorder %s71, %s72
    %p83 = scmp.eq.s32.totalorder %s16, 0
    %p84 = por %p82, %p83
    %p85 = scmp.ne.s32.totalorder %s71, %s72
    %p86 = scmp.eq.s32.totalorder %s17, 1
    %p87 = por %p85, %p86
    %p89 = scmp.ne.s32.totalorder %s72, %s88
    %p90 = scmp.eq.s32.totalorder %s17, 0
    %p91 = por %p89, %p90
    %s92 = ssub.s32 %s11, %s18
    %p93 = scmp.eq.s32.totalorder %s92, 0
    %s95 = sadd.s32 %s94, 1
    %s96 = scalar_select %p93, %s94, %s95
    %p99 = pneg %p93
    %p100 = scmp.eq.s32.totalorder %s11, 1
    %p101 = por %p99, %p100
    %p102 = scmp.ne.s32.totalorder %s94, %s97
    %p103 = scmp.eq.s32.totalorder %s11, 0
    %p104 = por %p102, %p103
    %p105 = scmp.ne.s32.totalorder %s94, %s97
    %p106 = scmp.eq.s32.totalorder %s16, 1
    %p107 = por %p105, %p106
    %p108 = scmp.ne.s32.totalorder %s97, %s98
    %p109 = scmp.eq.s32.totalorder %s16, 0
    %p110 = por %p108, %p109
    %p111 = scmp.ne.s32.totalorder %s97, %s98
    %p112 = scmp.eq.s32.totalorder %s17, 1
    %p113 = por %p111, %p112
    %p115 = scmp.ne.s32.totalorder %s98, %s114
    %p116 = scmp.eq.s32.totalorder %s17, 0
    %p117 = por %p115, %p116
    %s119 = sadd.s32 %s118, 1
    %p122 = scmp.eq.s32.totalorder %s11, 1
    %p123 = scmp.ne.s32.totalorder %s118, %s120
    %p124 = scmp.eq.s32.totalorder %s11, 0
    %p125 = por %p123, %p124
    %p126 = scmp.ne.s32.totalorder %s118, %s120
    %p127 = scmp.eq.s32.totalorder %s16, 1
    %p128 = por %p126, %p127
    %p129 = scmp.ne.s32.totalorder %s120, %s121
    %p130 = scmp.eq.s32.totalorder %s16, 0
    %p131 = por %p129, %p130
    %p132 = scmp.ne.s32.totalorder %s120, %s121
    %p133 = scmp.eq.s32.totalorder %s17, 1
    %p134 = por %p132, %p133
    %p136 = scmp.ne.s32.totalorder %s121, %s135
    %p137 = scmp.eq.s32.totalorder %s17, 0
    %p138 = por %p136, %p137
    %p139 = scmp.le.s32.totalorder 1, %s11
    %p140 = scmp.lt.s32.totalorder %s11, 3
    %p141 = pnand %p139, %p140
    %p142 = pneg %p141
    // Predicated region
    $region9: #{_lambda_.4} parent=5 // pred_check
      _
    $region10: #{_lambda_.4} parent=5 // pred_check_branch
      %144 = sbr.rel (%p141) target = $region12
    $region11: #{_lambda_.4} parent=5 // pred_region
      %s145 = ssub.s32 %s11, 1
      // Predicated region
      $region13: #{_lambda_.4} parent=11 // pred_check
        %p146 = pneg %p58
      $region14: #{_lambda_.4} parent=11 // pred_check_branch
        %148 = sbr.rel (%p146) target = $region16
      $region15: #{_lambda_.4} parent=11 // pred_region
        _
      $region16: #{_lambda_.4} parent=11 // pred_fallthru
        _
    $region12: #{_lambda_.4} parent=5 // pred_fallthru
      _
    %p149 = scmp.lt.s32.totalorder %s11, 2
    // Predicated region
    $region17: #{_lambda_.4} parent=5 // pred_check
      %p150 = pneg %p149
    $region18: #{_lambda_.4} parent=5 // pred_check_branch
      %152 = sbr.rel (%p150) target = $region20
    $region19: #{_lambda_.4} parent=5 // pred_region
      // Predicated region
      $region21: #{_lambda_.4} parent=19 // pred_check
        %p153 = pneg %p31
      $region22: #{_lambda_.4} parent=19 // pred_check_branch
        %155 = sbr.rel (%p153) target = $region24
      $region23: #{_lambda_.4} parent=19 // pred_region
        %s156 = smul.u32 8, %s11
        %p157 = scmp.lt.s32.totalorder %s156, 15
        %s158 = scalar_select %p157, %s156, 15
        %s159 = smul.addr %s158, 4
        %s160 = scalar_lea.vmem %s0, %s159
        %s161 = smul.u32 8, %s11
      $region24: #{_lambda_.4} parent=19 // pred_fallthru
        _
    $region20: #{_lambda_.4} parent=5 // pred_fallthru
      _
    %p162 = scmp.le.s32.totalorder 1, %s11
    %p163 = scmp.lt.s32.totalorder %s11, 3
    %p164 = pnand %p162, %p163
    %p165 = pneg %p164
    // Predicated region
    $region25: #{_lambda_.4} parent=5 // pred_check
      _
    $region26: #{_lambda_.4} parent=5 // pred_check_branch
      %167 = sbr.rel (%p164) target = $region28
    $region27: #{_lambda_.4} parent=5 // pred_region
      %s168 = ssub.s32 %s11, 1
      %s169 = smul.u32 8, %s16
      %p170 = scmp.lt.s32.totalorder %s169, 15
      %s171 = scalar_select %p170, %s169, 15
      %s172 = smul.addr %s171, 4
      %s173 = scalar_lea.vmem %s0, %s172
      %p174 = pneg %p37
      %p175 = pneg %p34
      %p176 = pneg %p58
      %p177 = pneg %p55
      %p178 = pneg %p84
      %p179 = pneg %p81
      %s180 = smul.u32 8, %s16
      %p181 = scmp.lt.s32.totalorder %s180, 15
      %s182 = scalar_select %p181, %s180, 15
      %s183 = smul.addr %s182, 8
      %s184 = scalar_lea.vmem %s2, %s183
      %p185 = pneg %p110
      %p186 = pneg %p107
      %s187 = smul.u32 8, %s16
      %p188 = scmp.lt.s32.totalorder %s187, 15
      %s189 = scalar_select %p188, %s187, 15
      %s190 = smul.addr %s189, 8
      %s191 = scalar_lea.vmem %s3, %s190
      %p192 = pneg %p131
      %p193 = pneg %p128
      %s194 = smul.u32 8, %s16
      %p195 = scmp.lt.s32.totalorder %s194, 15
      %s196 = scalar_select %p195, %s194, 15
      %s197 = smul.addr %s196, 4
      %s198 = scalar_lea.vmem %s0, %s197
      %s199 = smul.u32 8, %s16
      %s200 = smul.u32 8, %s16
      %p201 = scmp.lt.s32.totalorder %s200, 15
      %s202 = scalar_select %p201, %s200, 15
      %s203 = smul.addr %s202, 8
      %s204 = scalar_lea.vmem %s2, %s203
      %s205 = smul.u32 8, %s16
      %s206 = smul.u32 8, %s16
      %p207 = scmp.lt.s32.totalorder %s206, 15
      %s208 = scalar_select %p207, %s206, 15
      %s209 = smul.addr %s208, 8
      %s210 = scalar_lea.vmem %s3, %s209
      %s211 = smul.u32 8, %s16
      %v213 = vld [vmem:[%s198] sm:$0xf]
      %v214 = vld [vmem:[%s198 + $0x4] sm:$0xf]
      %v215 = vld [vmem:[%s198 + $0x8] sm:$0xf]
      %v216 = vld [vmem:[%s198 + $0xc] sm:$0xf]
      %v217 = vld [vmem:[%s198 + $0x10] sm:$0xf]
      %v218 = vld [vmem:[%s198 + $0x14] sm:$0xf]
      %v219 = vld [vmem:[%s198 + $0x18] sm:$0xf]
      %v220 = vld [vmem:[%s198 + $0x1c] sm:$0xf]
      %v221 = vld [vmem:[%s1] sm:$0xff]
      %v222 = vld [vmem:[%s1 + $0x8] sm:$0xff]
      %v223 = vld [vmem:[%s1 + $0x10] sm:$0xff]
      %v224 = vld [vmem:[%s1 + $0x18] sm:$0xff]
      %v225 = vld [vmem:[%s1 + $0x20] sm:$0xff]
      %v226 = vld [vmem:[%s1 + $0x28] sm:$0xff]
      %v227 = vld [vmem:[%s1 + $0x30] sm:$0xff]
      %v228 = vld [vmem:[%s1 + $0x38] sm:$0xff]
      %v229 = vld [vmem:[%s1 + $0x40] sm:$0xff]
      %v230 = vld [vmem:[%s1 + $0x48] sm:$0xff]
      %v231 = vld [vmem:[%s1 + $0x50] sm:$0xff]
      %v232 = vld [vmem:[%s1 + $0x58] sm:$0xff]
      %v233 = vld [vmem:[%s1 + $0x60] sm:$0xff]
      %v234 = vld [vmem:[%s1 + $0x68] sm:$0xff]
      %v235 = vld [vmem:[%s1 + $0x70] sm:$0xff]
      %v236 = vld [vmem:[%s1 + $0x78] sm:$0xff]
      %v245 = vunpack.c.l.b16 %v213
      %v246 = vunpack.c.l.b16 %v214
      %v247 = vunpack.c.l.b16 %v215
      %v248 = vunpack.c.l.b16 %v216
      %v249 = vunpack.c.l.b16 %v217
      %v250 = vunpack.c.l.b16 %v218
      %v251 = vunpack.c.l.b16 %v219
      %v252 = vunpack.c.l.b16 %v220
      %v253 = vpack.c.b16 %v246, %v245
      %v254 = vpack.c.b16 %v248, %v247
      %v255 = vpack.c.b16 %v250, %v249
      %v256 = vpack.c.b16 %v252, %v251
      %v277 = vunpack.c.l.b16 %v221
      %v278 = vunpack.c.h.b16 %v221
      %v279 = vunpack.c.l.b16 %v222
      %v280 = vunpack.c.h.b16 %v222
      %v281 = vunpack.c.l.b16 %v223
      %v282 = vunpack.c.h.b16 %v223
      %v283 = vunpack.c.l.b16 %v224
      %v284 = vunpack.c.h.b16 %v224
      %v285 = vunpack.c.l.b16 %v225
      %v286 = vunpack.c.h.b16 %v225
      %v287 = vunpack.c.l.b16 %v226
      %v288 = vunpack.c.h.b16 %v226
      %v289 = vunpack.c.l.b16 %v227
      %v290 = vunpack.c.h.b16 %v227
      %v291 = vunpack.c.l.b16 %v228
      %v292 = vunpack.c.h.b16 %v228
      %v293 = vunpack.c.l.b16 %v229
      %v294 = vunpack.c.h.b16 %v229
      %v295 = vunpack.c.l.b16 %v230
      %v296 = vunpack.c.h.b16 %v230
      %v297 = vunpack.c.l.b16 %v231
      %v298 = vunpack.c.h.b16 %v231
      %v299 = vunpack.c.l.b16 %v232
      %v300 = vunpack.c.h.b16 %v232
      %v301 = vunpack.c.l.b16 %v233
      %v302 = vunpack.c.h.b16 %v233
      %v303 = vunpack.c.l.b16 %v234
      %v304 = vunpack.c.h.b16 %v234
      %v305 = vunpack.c.l.b16 %v235
      %v306 = vunpack.c.h.b16 %v235
      %v307 = vunpack.c.l.b16 %v236
      %v308 = vunpack.c.h.b16 %v236
      %v309 = vpack.c.b16 %v279, %v277
      %v310 = vpack.c.b16 %v280, %v278
      %v311 = vpack.c.b16 %v283, %v281
      %v312 = vpack.c.b16 %v284, %v282
      %v313 = vpack.c.b16 %v287, %v285
      %v314 = vpack.c.b16 %v288, %v286
      %v315 = vpack.c.b16 %v291, %v289
      %v316 = vpack.c.b16 %v292, %v290
      %v317 = vpack.c.b16 %v295, %v293
      %v318 = vpack.c.b16 %v296, %v294
      %v319 = vpack.c.b16 %v299, %v297
      %v320 = vpack.c.b16 %v300, %v298
      %v321 = vpack.c.b16 %v303, %v301
      %v322 = vpack.c.b16 %v304, %v302
      %v323 = vpack.c.b16 %v307, %v305
      %v324 = vpack.c.b16 %v308, %v306
      %341 = vmatprep.subr.bf16.mxu0 %v310
      %342 = vmatpush1.bf16.msra.mxu0 %v309
      %343 = vmatprep.subr.bf16.mxu0 %v312
      %344 = vmatpush1.bf16.msra.mxu0 %v311
      %345 = vmatprep.subr.bf16.mxu0 %v314
      %346 = vmatpush1.bf16.msra.mxu0 %v313
      %347 = vmatprep.subr.bf16.mxu0 %v316
      %348 = vmatpush1.bf16.msra.mxu0 %v315
      %349 = vmatprep.subr.bf16.mxu0 %v318
      %350 = vmatpush1.bf16.msra.mxu0 %v317
      %351 = vmatprep.subr.bf16.mxu0 %v320
      %352 = vmatpush1.bf16.msra.mxu0 %v319
      %353 = vmatprep.subr.bf16.mxu0 %v322
      %354 = vmatpush1.bf16.msra.mxu0 %v321
      %355 = vmatprep.subr.bf16.mxu0 %v324
      %356 = vmatpush1.bf16.msra.mxu0 %v323
      %357 = vmatprep.subr.bf16.mxu0 0
      %358 = vmatpush1.bf16.msra.mxu0 0
      %359 = vmatprep.subr.bf16.mxu0 0
      %360 = vmatpush1.bf16.msra.mxu0 0
      %361 = vmatprep.subr.bf16.mxu0 0
      %362 = vmatpush1.bf16.msra.mxu0 0
      %363 = vmatprep.subr.bf16.mxu0 0
      %364 = vmatpush1.bf16.msra.mxu0 0
      %365 = vmatprep.subr.bf16.mxu0 0
      %366 = vmatpush1.bf16.msra.mxu0 0
      %367 = vmatprep.subr.bf16.mxu0 0
      %368 = vmatpush1.bf16.msra.mxu0 0
      %369 = vmatprep.subr.bf16.mxu0 0
      %370 = vmatpush1.bf16.msra.mxu0 0
      %371 = vmatprep.subr.bf16.mxu0 0
      %372 = vmatpush1.bf16.msra.mxu0 0
      %373 = vmatprep.mubr.bf16.mxu0 0
      %374 = vmatmul.mubr.bf16.gmra.mrb[0].mxu0 %v253
      %v375 = vpop.f32.mrb[0].mxu0
      %v376 = vadd.f32 0.0, %v375
      %v377 = vpop.f32.mrb[0].mxu0
      %v378 = vadd.f32 0.0, %v377
      %v379 = vpop.f32.mrb[0].mxu0
      %v380 = vadd.f32 0.0, %v379
      %v381 = vpop.f32.mrb[0].mxu0
      %v382 = vadd.f32 0.0, %v381
      %383 = vmatprep.mubr.bf16.mxu0 0
      %384 = vmatmul.mubr.bf16.gmra.mrb[0].mxu0 %v254
      %v385 = vpop.f32.mrb[0].mxu0
      %v386 = vadd.f32 0.0, %v385
      %v387 = vpop.f32.mrb[0].mxu0
      %v388 = vadd.f32 0.0, %v387
      %v389 = vpop.f32.mrb[0].mxu0
      %v390 = vadd.f32 0.0, %v389
      %v391 = vpop.f32.mrb[0].mxu0
      %v392 = vadd.f32 0.0, %v391
      %393 = vmatprep.mubr.bf16.mxu0 0
      %394 = vmatmul.mubr.bf16.gmra.mrb[0].mxu0 %v255
      %v395 = vpop.f32.mrb[0].mxu0
      %v396 = vadd.f32 0.0, %v395
      %v397 = vpop.f32.mrb[0].mxu0
      %v398 = vadd.f32 0.0, %v397
      %v399 = vpop.f32.mrb[0].mxu0
      %v400 = vadd.f32 0.0, %v399
      %v401 = vpop.f32.mrb[0].mxu0
      %v402 = vadd.f32 0.0, %v401
      %403 = vmatprep.mubr.bf16.mxu0 0
      %404 = vmatmul.mubr.bf16.gmra.mrb[0].mxu0 %v256
      %v405 = vpop.f32.mrb[0].mxu0
      %v406 = vadd.f32 0.0, %v405
      %v407 = vpop.f32.mrb[0].mxu0
      %v408 = vadd.f32 0.0, %v407
      %v409 = vpop.f32.mrb[0].mxu0
      %v410 = vadd.f32 0.0, %v409
      %v411 = vpop.f32.mrb[0].mxu0
      %v412 = vadd.f32 0.0, %v411
      %413 = vdwg.mxu0
      %414 = vst [vmem:[%s204] sm:$0xff] %v376
      %415 = vst [vmem:[%s204 + $0x8] sm:$0xff] %v380
      %416 = vst [vmem:[%s204 + $0x10] sm:$0xff] %v386
      %417 = vst [vmem:[%s204 + $0x18] sm:$0xff] %v390
      %418 = vst [vmem:[%s204 + $0x20] sm:$0xff] %v396
      %419 = vst [vmem:[%s204 + $0x28] sm:$0xff] %v400
      %420 = vst [vmem:[%s204 + $0x30] sm:$0xff] %v406
      %421 = vst [vmem:[%s204 + $0x38] sm:$0xff] %v410
      %422 = vst [vmem:[%s210] sm:$0xff] %v378
      %423 = vst [vmem:[%s210 + $0x8] sm:$0xff] %v382
      %424 = vst [vmem:[%s210 + $0x10] sm:$0xff] %v388
      %425 = vst [vmem:[%s210 + $0x18] sm:$0xff] %v392
      %426 = vst [vmem:[%s210 + $0x20] sm:$0xff] %v398
      %427 = vst [vmem:[%s210 + $0x28] sm:$0xff] %v402
      %428 = vst [vmem:[%s210 + $0x30] sm:$0xff] %v408
      %429 = vst [vmem:[%s210 + $0x38] sm:$0xff] %v412
      %p430 = scmp.eq.s32.totalorder %s16, 0
      // Predicated region
      $region29: #{_lambda_.4} parent=27 // pred_check
        %p431 = pneg %p430
      $region30: #{_lambda_.4} parent=27 // pred_check_branch
        %433 = sbr.rel (%p431) target = $region32
      $region31: #{_lambda_.4} parent=27 // pred_region
        %434 = vst [vmem:[%s4] sm:$0xf] 0.0
      $region32: #{_lambda_.4} parent=27 // pred_fallthru
        _
      %v435 = vld [vmem:[%s4] sm:$0xf]
      %v436 = vadd.f32 %v376, %v380
      %v437 = vadd.f32 %v436, %v386
      %v438 = vadd.f32 %v437, %v390
      %v439 = vadd.f32 %v438, %v396
      %v440 = vadd.f32 %v439, %v400
      %v441 = vadd.f32 %v440, %v406
      %v442 = vadd.f32 %v441, %v410
      %v443 = vrot.slane %v442, 4
      %v444 = vadd.f32 %v442, %v443
      %v445 = vrot.slane %v444, 2
      %v446 = vadd.f32 %v444, %v445
      %v447 = vrot.slane %v446, 1
      %v448 = vadd.f32 %v446, %v447
      %v449 = vmul.f32 %v376, %v376
      %v450 = vmul.f32 %v380, %v380
      %v451 = vmul.f32 %v386, %v386
      %v452 = vmul.f32 %v390, %v390
      %v453 = vmul.f32 %v396, %v396
      %v454 = vmul.f32 %v400, %v400
      %v455 = vmul.f32 %v406, %v406
      %v456 = vmul.f32 %v410, %v410
      %v457 = vadd.f32 %v449, %v450
      %v458 = vadd.f32 %v457, %v451
      %v459 = vadd.f32 %v458, %v452
      %v460 = vadd.f32 %v459, %v453
      %v461 = vadd.f32 %v460, %v454
      %v462 = vadd.f32 %v461, %v455
      %v463 = vadd.f32 %v462, %v456
      %v464 = vrot.slane %v463, 4
      %v465 = vadd.f32 %v463, %v464
      %v466 = vrot.slane %v465, 2
      %v467 = vadd.f32 %v465, %v466
      %v468 = vrot.slane %v467, 1
      %v469 = vadd.f32 %v467, %v468
      %vm470 = vcmask 1040384
      %v471 = vsel %vm470, %v448, %v469
      %v472 = vadd.f32 %v378, %v382
      %v473 = vadd.f32 %v472, %v388
      %v474 = vadd.f32 %v473, %v392
      %v475 = vadd.f32 %v474, %v398
      %v476 = vadd.f32 %v475, %v402
      %v477 = vadd.f32 %v476, %v408
      %v478 = vadd.f32 %v477, %v412
      %v479 = vrot.slane %v478, 4
      %v480 = vadd.f32 %v478, %v479
      %v481 = vrot.slane %v480, 2
      %v482 = vadd.f32 %v480, %v481
      %v483 = vrot.slane %v482, 1
      %v484 = vadd.f32 %v482, %v483
      %v485 = vmul.f32 %v378, %v378
      %v486 = vmul.f32 %v382, %v382
      %v487 = vmul.f32 %v388, %v388
      %v488 = vmul.f32 %v392, %v392
      %v489 = vmul.f32 %v398, %v398
      %v490 = vmul.f32 %v402, %v402
      %v491 = vmul.f32 %v408, %v408
      %v492 = vmul.f32 %v412, %v412
      %v493 = vadd.f32 %v485, %v486
      %v494 = vadd.f32 %v493, %v487
      %v495 = vadd.f32 %v494, %v488
      %v496 = vadd.f32 %v495, %v489
      %v497 = vadd.f32 %v496, %v490
      %v498 = vadd.f32 %v497, %v491
      %v499 = vadd.f32 %v498, %v492
      %v500 = vrot.slane %v499, 4
      %v501 = vadd.f32 %v499, %v500
      %v502 = vrot.slane %v501, 2
      %v503 = vadd.f32 %v501, %v502
      %v504 = vrot.slane %v503, 1
      %v505 = vadd.f32 %v503, %v504
      %v506 = vsel %vm470, %v484, %v505
      %v508 = vrot.slane %v506, 6
      %vm510 = vcmask 1041408
      %v511 = vsel %vm510, %v471, %v508
      %v512 = vadd.f32 %v435, %v511
      %513 = vst [vmem:[%s4] sm:$0xf] %v512
      %s514 = smul.u32 8, %s16
      %p515 = scmp.lt.s32.totalorder %s514, 15
      %s516 = scalar_select %p515, %s514, 15
      %s517 = smul.addr %s516, 8
      %s518 = scalar_lea.vmem %s2, %s517
      %s519 = smul.u32 8, %s16
      %p520 = scmp.lt.s32.totalorder %s519, 15
      %s521 = scalar_select %p520, %s519, 15
      %s522 = smul.addr %s521, 8
      %s523 = scalar_lea.vmem %s3, %s522
      // Predicated region
      $region33: #{_lambda_.4} parent=27 // pred_check
        %p524 = pneg %p81
      $region34: #{_lambda_.4} parent=27 // pred_check_branch
        %526 = sbr.rel (%p524) target = $region36
      $region35: #{_lambda_.4} parent=27 // pred_region
        %s527 = smul.u32 8, %s16
      $region36: #{_lambda_.4} parent=27 // pred_fallthru
        _
      // Predicated region
      $region37: #{_lambda_.4} parent=27 // pred_check
        %p528 = pneg %p107
      $region38: #{_lambda_.4} parent=27 // pred_check_branch
        %530 = sbr.rel (%p528) target = $region40
      $region39: #{_lambda_.4} parent=27 // pred_region
        %s531 = smul.u32 8, %s16
      $region40: #{_lambda_.4} parent=27 // pred_fallthru
        _
      // Predicated region
      $region41: #{_lambda_.4} parent=27 // pred_check
        %p532 = pneg %p128
      $region42: #{_lambda_.4} parent=27 // pred_check_branch
        %534 = sbr.rel (%p532) target = $region44
      $region43: #{_lambda_.4} parent=27 // pred_region
        _
      $region44: #{_lambda_.4} parent=27 // pred_fallthru
        _
      // Predicated region
      $region45: #{_lambda_.4} parent=27 // pred_check
        %p535 = pneg %p128
      $region46: #{_lambda_.4} parent=27 // pred_check_branch
        %537 = sbr.rel (%p535) target = $region48
      $region47: #{_lambda_.4} parent=27 // pred_region
        _
      $region48: #{_lambda_.4} parent=27 // pred_fallthru
        _
    $region28: #{_lambda_.4} parent=5 // pred_fallthru
      _
    %p538 = scmp.le.s32.totalorder 2, %s11
    // Predicated region
    $region49: #{_lambda_.4} parent=5 // pred_check
      %p539 = pneg %p538
    $region50: #{_lambda_.4} parent=5 // pred_check_branch
      %541 = sbr.rel (%p539) target = $region52
    $region51: #{_lambda_.4} parent=5 // pred_region
      %s542 = ssub.s32 %s11, 2
      // Predicated region
      $region53: #{_lambda_.4} parent=51 // pred_check
        %p543 = pneg %p87
      $region54: #{_lambda_.4} parent=51 // pred_check_branch
        %545 = sbr.rel (%p543) target = $region56
      $region55: #{_lambda_.4} parent=51 // pred_region
        %s546 = smul.u32 8, %s17
        %p547 = scmp.lt.s32.totalorder %s546, 15
        %s548 = scalar_select %p547, %s546, 15
        %s549 = smul.addr %s548, 8
        %s550 = scalar_lea.vmem %s2, %s549
      $region56: #{_lambda_.4} parent=51 // pred_fallthru
        _
      // Predicated region
      $region57: #{_lambda_.4} parent=51 // pred_check
        %p551 = pneg %p113
      $region58: #{_lambda_.4} parent=51 // pred_check_branch
        %553 = sbr.rel (%p551) target = $region60
      $region59: #{_lambda_.4} parent=51 // pred_region
        %s554 = smul.u32 8, %s17
        %p555 = scmp.lt.s32.totalorder %s554, 15
        %s556 = scalar_select %p555, %s554, 15
        %s557 = smul.addr %s556, 8
        %s558 = scalar_lea.vmem %s3, %s557
      $region60: #{_lambda_.4} parent=51 // pred_fallthru
        _
    $region52: #{_lambda_.4} parent=5 // pred_fallthru
      _
  $region6: #{_lambda_.4} parent=0 // loop_footer
    %s15 = sadd.s32 1, %s11
  $region7: #{_lambda_.4} parent=0 // loop_footer_branch
    %10 = sbr.rel target = $region3
  $region8: #{_lambda_.4} parent=0 // loop_exit
    _

// kernel: _lambda_.6
$region0: #{_lambda_.6}
  #allocation0 [shape = 'u32[]', space=smem, size = 0x4, offset = 0x4, fixed_abs, tag = 'smem constant byte address 0x4 - core index']
  #allocation1 [shape = 'u32[144,128]{1,0:T(1,128)}', space=vmem, size = 0x12000, scoped, tag = 'internal scratch']
  %s0 = inlined_call_operand.vmem [shape: f32[128,128], index: 0, kind: input, shape index: {}]
  %s1 = inlined_call_operand.vmem [shape: f32[2,128], index: 1, kind: input, shape index: {}]
  %s2 = inlined_call_operand.vmem [shape: f32[8,128], index: 2, kind: input, shape index: {}]
  %s3 = inlined_call_operand.vmem [shape: bf16[128,128], index: 3, kind: input, shape index: {}]
  %s4 = inlined_call_operand.vmem [shape: f32[128,128], index: 4, kind: output, shape index: {0}]
  %s5 = inlined_call_operand.vmem [shape: f32[2,128], index: 5, kind: output, shape index: {1}]
  %6 = xla_tuple %s4, %s5
  %s7 = sld [smem:[#allocation0]]
  $region61: #{_lambda_.6} parent=0
    _
  %s9 = ssub.s32 1, %s7
  %s10 = scalar_select 0, %s9, %s7
  loop: start=0, step=1, limit=4
  $region2: #{_lambda_.6} parent=0 // loop_pre_header
    _
  $region3: #{_lambda_.6} parent=0 // loop_header
    %s12 = sphi 0, %s16
    %p13 = scmp.ge.s32.totalorder %s12, 4
    %s22 = sphi 0, %s24
    %s25 = sphi 0, %s22
    %s26 = sphi 0, %s25
    %s42 = sphi 0, %s26
    %s46 = sphi 0, %s46
    %s48 = sphi 0, %s46
    %s49 = sphi 0, %s48
    %s63 = sphi 0, %s49
    %s67 = sphi 0, %s67
    %s69 = sphi 0, %s67
    %s70 = sphi 0, %s69
    %s84 = sphi 0, %s70
    %s88 = sphi 0, %s88
    %s90 = sphi 0, %s88
    %s91 = sphi 0, %s90
    %s105 = sphi 0, %s91
    %s111 = sphi 0, %s113
    %s114 = sphi 0, %s111
    %s115 = sphi 0, %s114
    %s131 = sphi 0, %s115
    %s135 = sphi 0, %s135
    %s137 = sphi 0, %s135
    %s138 = sphi 0, %s137
    %s152 = sphi 0, %s138
  $region4: #{_lambda_.6} parent=0 // loop_header_branch
    %15 = sbr.rel (%p13) target = $region8
  $region5: #{_lambda_.6} parent=0 // loop_body
    %s17 = ssub.s32 %s12, 1
    %s18 = ssub.s32 %s12, 2
    %s19 = sadd.s32 %s12, 1
    %s20 = ssub.s32 %s12, %s19
    %p21 = scmp.eq.s32.totalorder %s20, 0
    %s23 = sadd.s32 %s22, 1
    %s24 = scalar_select %p21, %s22, %s23
    %p27 = pneg %p21
    %p28 = scmp.eq.s32.totalorder %s12, 1
    %p29 = por %p27, %p28
    %p30 = scmp.ne.s32.totalorder %s22, %s25
    %p31 = scmp.eq.s32.totalorder %s12, 0
    %p32 = por %p30, %p31
    %p33 = scmp.ne.s32.totalorder %s22, %s25
    %p34 = scmp.eq.s32.totalorder %s17, 1
    %p35 = por %p33, %p34
    %p36 = scmp.ne.s32.totalorder %s25, %s26
    %p37 = scmp.eq.s32.totalorder %s17, 0
    %p38 = por %p36, %p37
    %p39 = scmp.ne.s32.totalorder %s25, %s26
    %p40 = scmp.eq.s32.totalorder %s18, 1
    %p41 = por %p39, %p40
    %p43 = scmp.ne.s32.totalorder %s26, %s42
    %p44 = scmp.eq.s32.totalorder %s18, 0
    %p45 = por %p43, %p44
    %s47 = sadd.s32 %s46, 1
    %p50 = scmp.eq.s32.totalorder %s12, 1
    %p51 = scmp.ne.s32.totalorder %s46, %s48
    %p52 = scmp.eq.s32.totalorder %s12, 0
    %p53 = por %p51, %p52
    %p54 = scmp.ne.s32.totalorder %s46, %s48
    %p55 = scmp.eq.s32.totalorder %s17, 1
    %p56 = por %p54, %p55
    %p57 = scmp.ne.s32.totalorder %s48, %s49
    %p58 = scmp.eq.s32.totalorder %s17, 0
    %p59 = por %p57, %p58
    %p60 = scmp.ne.s32.totalorder %s48, %s49
    %p61 = scmp.eq.s32.totalorder %s18, 1
    %p62 = por %p60, %p61
    %p64 = scmp.ne.s32.totalorder %s49, %s63
    %p65 = scmp.eq.s32.totalorder %s18, 0
    %p66 = por %p64, %p65
    %s68 = sadd.s32 %s67, 1
    %p71 = scmp.eq.s32.totalorder %s12, 1
    %p72 = scmp.ne.s32.totalorder %s67, %s69
    %p73 = scmp.eq.s32.totalorder %s12, 0
    %p74 = por %p72, %p73
    %p75 = scmp.ne.s32.totalorder %s67, %s69
    %p76 = scmp.eq.s32.totalorder %s17, 1
    %p77 = por %p75, %p76
    %p78 = scmp.ne.s32.totalorder %s69, %s70
    %p79 = scmp.eq.s32.totalorder %s17, 0
    %p80 = por %p78, %p79
    %p81 = scmp.ne.s32.totalorder %s69, %s70
    %p82 = scmp.eq.s32.totalorder %s18, 1
    %p83 = por %p81, %p82
    %p85 = scmp.ne.s32.totalorder %s70, %s84
    %p86 = scmp.eq.s32.totalorder %s18, 0
    %p87 = por %p85, %p86
    %s89 = sadd.s32 %s88, 1
    %p92 = scmp.eq.s32.totalorder %s12, 1
    %p93 = scmp.ne.s32.totalorder %s88, %s90
    %p94 = scmp.eq.s32.totalorder %s12, 0
    %p95 = por %p93, %p94
    %p96 = scmp.ne.s32.totalorder %s88, %s90
    %p97 = scmp.eq.s32.totalorder %s17, 1
    %p98 = por %p96, %p97
    %p99 = scmp.ne.s32.totalorder %s90, %s91
    %p100 = scmp.eq.s32.totalorder %s17, 0
    %p101 = por %p99, %p100
    %p102 = scmp.ne.s32.totalorder %s90, %s91
    %p103 = scmp.eq.s32.totalorder %s18, 1
    %p104 = por %p102, %p103
    %p106 = scmp.ne.s32.totalorder %s91, %s105
    %p107 = scmp.eq.s32.totalorder %s18, 0
    %p108 = por %p106, %p107
    %s109 = ssub.s32 %s12, %s19
    %p110 = scmp.eq.s32.totalorder %s109, 0
    %s112 = sadd.s32 %s111, 1
    %s113 = scalar_select %p110, %s111, %s112
    %p116 = pneg %p110
    %p117 = scmp.eq.s32.totalorder %s12, 1
    %p118 = por %p116, %p117
    %p119 = scmp.ne.s32.totalorder %s111, %s114
    %p120 = scmp.eq.s32.totalorder %s12, 0
    %p121 = por %p119, %p120
    %p122 = scmp.ne.s32.totalorder %s111, %s114
    %p123 = scmp.eq.s32.totalorder %s17, 1
    %p124 = por %p122, %p123
    %p125 = scmp.ne.s32.totalorder %s114, %s115
    %p126 = scmp.eq.s32.totalorder %s17, 0
    %p127 = por %p125, %p126
    %p128 = scmp.ne.s32.totalorder %s114, %s115
    %p129 = scmp.eq.s32.totalorder %s18, 1
    %p130 = por %p128, %p129
    %p132 = scmp.ne.s32.totalorder %s115, %s131
    %p133 = scmp.eq.s32.totalorder %s18, 0
    %p134 = por %p132, %p133
    %s136 = sadd.s32 %s135, 1
    %p139 = scmp.eq.s32.totalorder %s12, 1
    %p140 = scmp.ne.s32.totalorder %s135, %s137
    %p141 = scmp.eq.s32.totalorder %s12, 0
    %p142 = por %p140, %p141
    %p143 = scmp.ne.s32.totalorder %s135, %s137
    %p144 = scmp.eq.s32.totalorder %s17, 1
    %p145 = por %p143, %p144
    %p146 = scmp.ne.s32.totalorder %s137, %s138
    %p147 = scmp.eq.s32.totalorder %s17, 0
    %p148 = por %p146, %p147
    %p149 = scmp.ne.s32.totalorder %s137, %s138
    %p150 = scmp.eq.s32.totalorder %s18, 1
    %p151 = por %p149, %p150
    %p153 = scmp.ne.s32.totalorder %s138, %s152
    %p154 = scmp.eq.s32.totalorder %s18, 0
    %p155 = por %p153, %p154
    %p156 = scmp.le.s32.totalorder 1, %s12
    %p157 = scmp.lt.s32.totalorder %s12, 3
    %p158 = pnand %p156, %p157
    %p159 = pneg %p158
    // Predicated region
    $region9: #{_lambda_.6} parent=5 // pred_check
      _
    $region10: #{_lambda_.6} parent=5 // pred_check_branch
      %161 = sbr.rel (%p158) target = $region12
    $region11: #{_lambda_.6} parent=5 // pred_region
      %s162 = ssub.s32 %s12, 1
      // Predicated region
      $region13: #{_lambda_.6} parent=11 // pred_check
        %p163 = pneg %p59
      $region14: #{_lambda_.6} parent=11 // pred_check_branch
        %165 = sbr.rel (%p163) target = $region16
      $region15: #{_lambda_.6} parent=11 // pred_region
        _
      $region16: #{_lambda_.6} parent=11 // pred_fallthru
        _
      // Predicated region
      $region17: #{_lambda_.6} parent=11 // pred_check
        %p166 = pneg %p80
      $region18: #{_lambda_.6} parent=11 // pred_check_branch
        %168 = sbr.rel (%p166) target = $region20
      $region19: #{_lambda_.6} parent=11 // pred_region
        _
      $region20: #{_lambda_.6} parent=11 // pred_fallthru
        _
      // Predicated region
      $region21: #{_lambda_.6} parent=11 // pred_check
        %p169 = pneg %p101
      $region22: #{_lambda_.6} parent=11 // pred_check_branch
        %171 = sbr.rel (%p169) target = $region24
      $region23: #{_lambda_.6} parent=11 // pred_region
        _
      $region24: #{_lambda_.6} parent=11 // pred_fallthru
        _
    $region12: #{_lambda_.6} parent=5 // pred_fallthru
      _
    %p172 = scmp.lt.s32.totalorder %s12, 2
    // Predicated region
    $region25: #{_lambda_.6} parent=5 // pred_check
      %p173 = pneg %p172
    $region26: #{_lambda_.6} parent=5 // pred_check_branch
      %175 = sbr.rel (%p173) target = $region28
    $region27: #{_lambda_.6} parent=5 // pred_region
      // Predicated region
      $region29: #{_lambda_.6} parent=27 // pred_check
        %p176 = pneg %p32
      $region30: #{_lambda_.6} parent=27 // pred_check_branch
        %178 = sbr.rel (%p176) target = $region32
      $region31: #{_lambda_.6} parent=27 // pred_region
        %s179 = smul.u32 8, %s12
        %p180 = scmp.lt.s32.totalorder %s179, 15
        %s181 = scalar_select %p180, %s179, 15
        %s182 = smul.addr %s181, 8
        %s183 = scalar_lea.vmem %s0, %s182
        %s184 = smul.u32 8, %s12
      $region32: #{_lambda_.6} parent=27 // pred_fallthru
        _
    $region28: #{_lambda_.6} parent=5 // pred_fallthru
      _
    %p185 = scmp.le.s32.totalorder 1, %s12
    %p186 = scmp.lt.s32.totalorder %s12, 3
    %p187 = pnand %p185, %p186
    %p188 = pneg %p187
    // Predicated region
    $region33: #{_lambda_.6} parent=5 // pred_check
      _
    $region34: #{_lambda_.6} parent=5 // pred_check_branch
      %190 = sbr.rel (%p187) target = $region36
    $region35: #{_lambda_.6} parent=5 // pred_region
      %s191 = ssub.s32 %s12, 1
      %s192 = smul.u32 8, %s17
      %p193 = scmp.lt.s32.totalorder %s192, 15
      %s194 = scalar_select %p193, %s192, 15
      %s195 = smul.addr %s194, 8
      %s196 = scalar_lea.vmem %s0, %s195
      %p197 = pneg %p38
      %p198 = pneg %p35
      %p199 = pneg %p59
      %p200 = pneg %p56
      %p201 = pneg %p80
      %p202 = pneg %p77
      %p203 = pneg %p101
      %p204 = pneg %p98
      %p205 = pneg %p127
      %p206 = pneg %p124
      %s207 = smul.u32 8, %s17
      %p208 = scmp.lt.s32.totalorder %s207, 15
      %s209 = scalar_select %p208, %s207, 15
      %s210 = smul.addr %s209, 8
      %s211 = scalar_lea.vmem %s4, %s210
      %p212 = pneg %p148
      %p213 = pneg %p145
      %s214 = smul.u32 8, %s17
      %p215 = scmp.lt.s32.totalorder %s214, 15
      %s216 = scalar_select %p215, %s214, 15
      %s217 = smul.addr %s216, 8
      %s218 = scalar_lea.vmem %s0, %s217
      %s219 = smul.u32 8, %s17
      %s220 = smul.u32 8, %s17
      %p221 = scmp.lt.s32.totalorder %s220, 15
      %s222 = scalar_select %p221, %s220, 15
      %s223 = smul.addr %s222, 8
      %s224 = scalar_lea.vmem %s4, %s223
      %s225 = smul.u32 8, %s17
      %v227 = vld [vmem:[%s1] sm:$0x3]
      %v228 = vld [vmem:[%s218] sm:$0xff]
      %v229 = vld [vmem:[%s218 + $0x8] sm:$0xff]
      %v230 = vld [vmem:[%s218 + $0x10] sm:$0xff]
      %v231 = vld [vmem:[%s218 + $0x18] sm:$0xff]
      %v232 = vld [vmem:[%s218 + $0x20] sm:$0xff]
      %v233 = vld [vmem:[%s218 + $0x28] sm:$0xff]
      %v234 = vld [vmem:[%s218 + $0x30] sm:$0xff]
      %v235 = vld [vmem:[%s218 + $0x38] sm:$0xff]
      %v236 = vld [vmem:[%s2 + $0x2] sm:$0x1]
      %v237 = vld [vmem:[%s2 + $0x3] sm:$0x1]
      %v238 = vmul.f32 %v227, 0.0078125
      %v239 = vmul.f32 %v238, %v238
      %v241 = vrot.slane %v239, 7
      %v243 = vsub.f32 %v238, %v241
      %v244 = vmax.f32 %v243, 0.0
      %v245 = vlaneseq
      %v246 = vshrl.u32 %v245, 7
      %v247 = vsub.s32 0, %v246
      %v248 = vrot.slane %v238, %v247
      %v249 = vsub.f32 %v228, %v248
      %v250 = vsub.f32 %v229, %v248
      %v251 = vsub.f32 %v230, %v248
      %v252 = vsub.f32 %v231, %v248
      %v253 = vsub.f32 %v232, %v248
      %v254 = vsub.f32 %v233, %v248
      %v255 = vsub.f32 %v234, %v248
      %v256 = vsub.f32 %v235, %v248
      %v257 = vadd.f32 %v244, 1e-05
      %v258 = vrsqrt.pop %v257
      %v259 = vlaneseq
      %v260 = vshrl.u32 %v259, 7
      %v261 = vsub.s32 1, %v260
      %v262 = vrot.slane %v258, %v261
      %v263 = vmul.f32 %v249, %v262
      %v264 = vmul.f32 %v250, %v262
      %v265 = vmul.f32 %v251, %v262
      %v266 = vmul.f32 %v252, %v262
      %v267 = vmul.f32 %v253, %v262
      %v268 = vmul.f32 %v254, %v262
      %v269 = vmul.f32 %v255, %v262
      %v270 = vmul.f32 %v256, %v262
      %v271 = vlaneseq
      %v272 = vshrl.u32 %v271, 7
      %v273 = vsub.s32 0, %v272
      %v274 = vrot.slane %v236, %v273
      %v275 = vmul.f32 %v274, %v263
      %v276 = vmul.f32 %v274, %v264
      %v277 = vmul.f32 %v274, %v265
      %v278 = vmul.f32 %v274, %v266
      %v279 = vmul.f32 %v274, %v267
      %v280 = vmul.f32 %v274, %v268
      %v281 = vmul.f32 %v274, %v269
      %v282 = vmul.f32 %v274, %v270
      %v283 = vlaneseq
      %v284 = vshrl.u32 %v283, 7
      %v285 = vsub.s32 0, %v284
      %v286 = vrot.slane %v237, %v285
      %v287 = vadd.f32 %v275, %v286
      %v288 = vadd.f32 %v276, %v286
      %v289 = vadd.f32 %v277, %v286
      %v290 = vadd.f32 %v278, %v286
      %v291 = vadd.f32 %v279, %v286
      %v292 = vadd.f32 %v280, %v286
      %v293 = vadd.f32 %v281, %v286
      %v294 = vadd.f32 %v282, %v286
      %v295 = vmax.f32 %v287, 0.0
      %v296 = vmax.f32 %v288, 0.0
      %v297 = vmax.f32 %v289, 0.0
      %v298 = vmax.f32 %v290, 0.0
      %v299 = vmax.f32 %v291, 0.0
      %v300 = vmax.f32 %v292, 0.0
      %v301 = vmax.f32 %v293, 0.0
      %v302 = vmax.f32 %v294, 0.0
      %v303 = vpack.c.bf16 %v296, %v295
      %v304 = vpack.c.bf16 %v298, %v297
      %v305 = vpack.c.bf16 %v300, %v299
      %v306 = vpack.c.bf16 %v302, %v301
      %v307 = vld [vmem:[%s3] sm:$0xf]
      %v308 = vld [vmem:[%s3 + $0x4] sm:$0xf]
      %v309 = vld [vmem:[%s3 + $0x8] sm:$0xf]
      %v310 = vld [vmem:[%s3 + $0xc] sm:$0xf]
      %v311 = vld [vmem:[%s3 + $0x10] sm:$0xf]
      %v312 = vld [vmem:[%s3 + $0x14] sm:$0xf]
      %v313 = vld [vmem:[%s3 + $0x18] sm:$0xf]
      %v314 = vld [vmem:[%s3 + $0x1c] sm:$0xf]
      %v315 = vld [vmem:[%s3 + $0x20] sm:$0xf]
      %v316 = vld [vmem:[%s3 + $0x24] sm:$0xf]
      %v317 = vld [vmem:[%s3 + $0x28] sm:$0xf]
      %v318 = vld [vmem:[%s3 + $0x2c] sm:$0xf]
      %v319 = vld [vmem:[%s3 + $0x30] sm:$0xf]
      %v320 = vld [vmem:[%s3 + $0x34] sm:$0xf]
      %v321 = vld [vmem:[%s3 + $0x38] sm:$0xf]
      %v322 = vld [vmem:[%s3 + $0x3c] sm:$0xf]
      %v339 = vunpack.c.l.b16 %v307
      %v340 = vunpack.c.l.b16 %v308
      %v341 = vunpack.c.l.b16 %v309
      %v342 = vunpack.c.l.b16 %v310
      %v343 = vunpack.c.l.b16 %v311
      %v344 = vunpack.c.l.b16 %v312
      %v345 = vunpack.c.l.b16 %v313
      %v346 = vunpack.c.l.b16 %v314
      %v347 = vunpack.c.l.b16 %v315
      %v348 = vunpack.c.l.b16 %v316
      %v349 = vunpack.c.l.b16 %v317
      %v350 = vunpack.c.l.b16 %v318
      %v351 = vunpack.c.l.b16 %v319
      %v352 = vunpack.c.l.b16 %v320
      %v353 = vunpack.c.l.b16 %v321
      %v354 = vunpack.c.l.b16 %v322
      %v355 = vpack.c.b16 %v340, %v339
      %v356 = vpack.c.b16 %v342, %v341
      %v357 = vpack.c.b16 %v344, %v343
      %v358 = vpack.c.b16 %v346, %v345
      %v359 = vpack.c.b16 %v348, %v347
      %v360 = vpack.c.b16 %v350, %v349
      %v361 = vpack.c.b16 %v352, %v351
      %v362 = vpack.c.b16 %v354, %v353
      %371 = vmatprep.subr.bf16.mxu0 0
      %372 = vmatpush1.bf16.msra.mxu0 %v355
      %373 = vmatprep.subr.bf16.mxu0 0
      %374 = vmatpush1.bf16.msra.mxu0 %v356
      %375 = vmatprep.subr.bf16.mxu0 0
      %376 = vmatpush1.bf16.msra.mxu0 %v357
      %377 = vmatprep.subr.bf16.mxu0 0
      %378 = vmatpush1.bf16.msra.mxu0 %v358
      %379 = vmatprep.subr.bf16.mxu0 0
      %380 = vmatpush1.bf16.msra.mxu0 %v359
      %381 = vmatprep.subr.bf16.mxu0 0
      %382 = vmatpush1.bf16.msra.mxu0 %v360
      %383 = vmatprep.subr.bf16.mxu0 0
      %384 = vmatpush1.bf16.msra.mxu0 %v361
      %385 = vmatprep.subr.bf16.mxu0 0
      %386 = vmatpush1.bf16.msra.mxu0 %v362
      %387 = vmatprep.subr.bf16.mxu0 0
      %388 = vmatpush1.bf16.msra.mxu0 0
      %389 = vmatprep.subr.bf16.mxu0 0
      %390 = vmatpush1.bf16.msra.mxu0 0
      %391 = vmatprep.subr.bf16.mxu0 0
      %392 = vmatpush1.bf16.msra.mxu0 0
      %393 = vmatprep.subr.bf16.mxu0 0
      %394 = vmatpush1.bf16.msra.mxu0 0
      %395 = vmatprep.subr.bf16.mxu0 0
      %396 = vmatpush1.bf16.msra.mxu0 0
      %397 = vmatprep.subr.bf16.mxu0 0
      %398 = vmatpush1.bf16.msra.mxu0 0
      %399 = vmatprep.subr.bf16.mxu0 0
      %400 = vmatpush1.bf16.msra.mxu0 0
      %401 = vmatprep.subr.bf16.mxu0 0
      %402 = vmatpush1.bf16.msra.mxu0 0
      %403 = vmatprep.mubr.bf16.mxu0 0
      %404 = vmatmul.mubr.bf16.gmra.mrb[0].mxu0 %v303
      %v405 = vpop.f32.mrb[0].mxu0
      %v406 = vadd.f32 0.0, %v405
      %v407 = vpop.f32.mrb[0].mxu0
      %v408 = vpop.f32.mrb[0].mxu0
      %v409 = vadd.f32 0.0, %v408
      %v410 = vpop.f32.mrb[0].mxu0
      %411 = vmatprep.mubr.bf16.mxu0 0
      %412 = vmatmul.mubr.bf16.gmra.mrb[0].mxu0 %v304
      %v413 = vpop.f32.mrb[0].mxu0
      %v414 = vadd.f32 0.0, %v413
      %v415 = vpop.f32.mrb[0].mxu0
      %v416 = vpop.f32.mrb[0].mxu0
      %v417 = vadd.f32 0.0, %v416
      %v418 = vpop.f32.mrb[0].mxu0
      %419 = vmatprep.mubr.bf16.mxu0 0
      %420 = vmatmul.mubr.bf16.gmra.mrb[0].mxu0 %v305
      %v421 = vpop.f32.mrb[0].mxu0
      %v422 = vadd.f32 0.0, %v421
      %v423 = vpop.f32.mrb[0].mxu0
      %v424 = vpop.f32.mrb[0].mxu0
      %v425 = vadd.f32 0.0, %v424
      %v426 = vpop.f32.mrb[0].mxu0
      %427 = vmatprep.mubr.bf16.mxu0 0
      %428 = vmatmul.mubr.bf16.gmra.mrb[0].mxu0 %v306
      %v429 = vpop.f32.mrb[0].mxu0
      %v430 = vadd.f32 0.0, %v429
      %v431 = vpop.f32.mrb[0].mxu0
      %v432 = vpop.f32.mrb[0].mxu0
      %v433 = vadd.f32 0.0, %v432
      %v434 = vpop.f32.mrb[0].mxu0
      %435 = vdwg.mxu0
      %436 = vst [vmem:[%s224] sm:$0xff] %v406
      %437 = vst [vmem:[%s224 + $0x8] sm:$0xff] %v409
      %438 = vst [vmem:[%s224 + $0x10] sm:$0xff] %v414
      %439 = vst [vmem:[%s224 + $0x18] sm:$0xff] %v417
      %440 = vst [vmem:[%s224 + $0x20] sm:$0xff] %v422
      %441 = vst [vmem:[%s224 + $0x28] sm:$0xff] %v425
      %442 = vst [vmem:[%s224 + $0x30] sm:$0xff] %v430
      %443 = vst [vmem:[%s224 + $0x38] sm:$0xff] %v433
      %p444 = scmp.eq.s32.totalorder %s17, 0
      // Predicated region
      $region37: #{_lambda_.6} parent=35 // pred_check
        %p445 = pneg %p444
      $region38: #{_lambda_.6} parent=35 // pred_check_branch
        %447 = sbr.rel (%p445) target = $region40
      $region39: #{_lambda_.6} parent=35 // pred_region
        %448 = vst [vmem:[%s5] sm:$0x3] 0.0
      $region40: #{_lambda_.6} parent=35 // pred_fallthru
        _
      %v449 = vld [vmem:[%s5] sm:$0x3]
      %v450 = vadd.f32 %v406, %v409
      %v451 = vadd.f32 %v450, %v414
      %v452 = vadd.f32 %v451, %v417
      %v453 = vadd.f32 %v452, %v422
      %v454 = vadd.f32 %v453, %v425
      %v455 = vadd.f32 %v454, %v430
      %v456 = vadd.f32 %v455, %v433
      %v457 = vrot.slane %v456, 4
      %v458 = vadd.f32 %v456, %v457
      %v459 = vrot.slane %v458, 2
      %v460 = vadd.f32 %v458, %v459
      %v461 = vrot.slane %v460, 1
      %v462 = vadd.f32 %v460, %v461
      %v463 = vmul.f32 %v406, %v406
      %v464 = vmul.f32 %v409, %v409
      %v465 = vmul.f32 %v414, %v414
      %v466 = vmul.f32 %v417, %v417
      %v467 = vmul.f32 %v422, %v422
      %v468 = vmul.f32 %v425, %v425
      %v469 = vmul.f32 %v430, %v430
      %v470 = vmul.f32 %v433, %v433
      %v471 = vadd.f32 %v463, %v464
      %v472 = vadd.f32 %v471, %v465
      %v473 = vadd.f32 %v472, %v466
      %v474 = vadd.f32 %v473, %v467
      %v475 = vadd.f32 %v474, %v468
      %v476 = vadd.f32 %v475, %v469
      %v477 = vadd.f32 %v476, %v470
      %v478 = vrot.slane %v477, 4
      %v479 = vadd.f32 %v477, %v478
      %v480 = vrot.slane %v479, 2
      %v481 = vadd.f32 %v479, %v480
      %v482 = vrot.slane %v481, 1
      %v483 = vadd.f32 %v481, %v482
      %vm484 = vcmask 1040384
      %v485 = vsel %vm484, %v462, %v483
      %v486 = vadd.f32 %v449, %v485
      %487 = vst [vmem:[%s5] sm:$0x3] %v486
      %s488 = smul.u32 8, %s17
      %p489 = scmp.lt.s32.totalorder %s488, 15
      %s490 = scalar_select %p489, %s488, 15
      %s491 = smul.addr %s490, 8
      %s492 = scalar_lea.vmem %s4, %s491
      // Predicated region
      $region41: #{_lambda_.6} parent=35 // pred_check
        %p493 = pneg %p124
      $region42: #{_lambda_.6} parent=35 // pred_check_branch
        %495 = sbr.rel (%p493) target = $region44
      $region43: #{_lambda_.6} parent=35 // pred_region
        %s496 = smul.u32 8, %s17
      $region44: #{_lambda_.6} parent=35 // pred_fallthru
        _
      // Predicated region
      $region45: #{_lambda_.6} parent=35 // pred_check
        %p497 = pneg %p145
      $region46: #{_lambda_.6} parent=35 // pred_check_branch
        %499 = sbr.rel (%p497) target = $region48
      $region47: #{_lambda_.6} parent=35 // pred_region
        _
      $region48: #{_lambda_.6} parent=35 // pred_fallthru
        _
      // Predicated region
      $region49: #{_lambda_.6} parent=35 // pred_check
        %p500 = pneg %p145
      $region50: #{_lambda_.6} parent=35 // pred_check_branch
        %502 = sbr.rel (%p500) target = $region52
      $region51: #{_lambda_.6} parent=35 // pred_region
        _
      $region52: #{_lambda_.6} parent=35 // pred_fallthru
        _
    $region36: #{_lambda_.6} parent=5 // pred_fallthru
      _
    %p503 = scmp.le.s32.totalorder 2, %s12
    // Predicated region
    $region53: #{_lambda_.6} parent=5 // pred_check
      %p504 = pneg %p503
    $region54: #{_lambda_.6} parent=5 // pred_check_branch
      %506 = sbr.rel (%p504) target = $region56
    $region55: #{_lambda_.6} parent=5 // pred_region
      %s507 = ssub.s32 %s12, 2
      // Predicated region
      $region57: #{_lambda_.6} parent=55 // pred_check
        %p508 = pneg %p130
      $region58: #{_lambda_.6} parent=55 // pred_check_branch
        %510 = sbr.rel (%p508) target = $region60
      $region59: #{_lambda_.6} parent=55 // pred_region
        %s511 = smul.u32 8, %s18
        %p512 = scmp.lt.s32.totalorder %s511, 15
        %s513 = scalar_select %p512, %s511, 15
        %s514 = smul.addr %s513, 8
        %s515 = scalar_lea.vmem %s4, %s514
      $region60: #{_lambda_.6} parent=55 // pred_fallthru
        _
    $region56: #{_lambda_.6} parent=5 // pred_fallthru
      _
  $region6: #{_lambda_.6} parent=0 // loop_footer
    %s16 = sadd.s32 1, %s12
  $region7: #{_lambda_.6} parent=0 // loop_footer_branch
    %11 = sbr.rel target = $region3
  $region8: #{_lambda_.6} parent=0 // loop_exit
    _

// kernel: _lambda_.5
$region0: #{_lambda_.5}
  #allocation0 [shape = 'u32[]', space=smem, size = 0x4, offset = 0x4, fixed_abs, tag = 'smem constant byte address 0x4 - core index']
  #allocation1 [shape = 'u32[144,128]{1,0:T(1,128)}', space=vmem, size = 0x12000, scoped, tag = 'internal scratch']
  %s0 = inlined_call_operand.vmem [shape: f32[128,128], index: 0, kind: input, shape index: {}]
  %s1 = inlined_call_operand.vmem [shape: f32[4,128], index: 1, kind: input, shape index: {}]
  %s2 = inlined_call_operand.vmem [shape: f32[8,128], index: 2, kind: input, shape index: {}]
  %s3 = inlined_call_operand.vmem [shape: bf16[1152,128], index: 3, kind: input, shape index: {}]
  %s4 = inlined_call_operand.vmem [shape: f32[128,128], index: 4, kind: output, shape index: {0}]
  %s5 = inlined_call_operand.vmem [shape: f32[2,128], index: 5, kind: output, shape index: {1}]
  %6 = xla_tuple %s4, %s5
  %s7 = sld [smem:[#allocation0]]
  $region61: #{_lambda_.5} parent=0
    _
  %s9 = ssub.s32 1, %s7
  %s10 = scalar_select 0, %s9, %s7
  loop: start=0, step=1, limit=4
  $region2: #{_lambda_.5} parent=0 // loop_pre_header
    _
  $region3: #{_lambda_.5} parent=0 // loop_header
    %s12 = sphi 0, %s16
    %p13 = scmp.ge.s32.totalorder %s12, 4
    %s22 = sphi 0, %s24
    %s25 = sphi 0, %s22
    %s26 = sphi 0, %s25
    %s42 = sphi 0, %s26
    %s46 = sphi 0, %s46
    %s48 = sphi 0, %s46
    %s49 = sphi 0, %s48
    %s63 = sphi 0, %s49
    %s67 = sphi 0, %s67
    %s69 = sphi 0, %s67
    %s70 = sphi 0, %s69
    %s84 = sphi 0, %s70
    %s88 = sphi 0, %s88
    %s90 = sphi 0, %s88
    %s91 = sphi 0, %s90
    %s105 = sphi 0, %s91
    %s111 = sphi 0, %s113
    %s114 = sphi 0, %s111
    %s115 = sphi 0, %s114
    %s131 = sphi 0, %s115
    %s135 = sphi 0, %s135
    %s137 = sphi 0, %s135
    %s138 = sphi 0, %s137
    %s152 = sphi 0, %s138
  $region4: #{_lambda_.5} parent=0 // loop_header_branch
    %15 = sbr.rel (%p13) target = $region8
  $region5: #{_lambda_.5} parent=0 // loop_body
    %s17 = ssub.s32 %s12, 1
    %s18 = ssub.s32 %s12, 2
    %s19 = sadd.s32 %s12, 1
    %s20 = ssub.s32 %s12, %s19
    %p21 = scmp.eq.s32.totalorder %s20, 0
    %s23 = sadd.s32 %s22, 1
    %s24 = scalar_select %p21, %s22, %s23
    %p27 = pneg %p21
    %p28 = scmp.eq.s32.totalorder %s12, 1
    %p29 = por %p27, %p28
    %p30 = scmp.ne.s32.totalorder %s22, %s25
    %p31 = scmp.eq.s32.totalorder %s12, 0
    %p32 = por %p30, %p31
    %p33 = scmp.ne.s32.totalorder %s22, %s25
    %p34 = scmp.eq.s32.totalorder %s17, 1
    %p35 = por %p33, %p34
    %p36 = scmp.ne.s32.totalorder %s25, %s26
    %p37 = scmp.eq.s32.totalorder %s17, 0
    %p38 = por %p36, %p37
    %p39 = scmp.ne.s32.totalorder %s25, %s26
    %p40 = scmp.eq.s32.totalorder %s18, 1
    %p41 = por %p39, %p40
    %p43 = scmp.ne.s32.totalorder %s26, %s42
    %p44 = scmp.eq.s32.totalorder %s18, 0
    %p45 = por %p43, %p44
    %s47 = sadd.s32 %s46, 1
    %p50 = scmp.eq.s32.totalorder %s12, 1
    %p51 = scmp.ne.s32.totalorder %s46, %s48
    %p52 = scmp.eq.s32.totalorder %s12, 0
    %p53 = por %p51, %p52
    %p54 = scmp.ne.s32.totalorder %s46, %s48
    %p55 = scmp.eq.s32.totalorder %s17, 1
    %p56 = por %p54, %p55
    %p57 = scmp.ne.s32.totalorder %s48, %s49
    %p58 = scmp.eq.s32.totalorder %s17, 0
    %p59 = por %p57, %p58
    %p60 = scmp.ne.s32.totalorder %s48, %s49
    %p61 = scmp.eq.s32.totalorder %s18, 1
    %p62 = por %p60, %p61
    %p64 = scmp.ne.s32.totalorder %s49, %s63
    %p65 = scmp.eq.s32.totalorder %s18, 0
    %p66 = por %p64, %p65
    %s68 = sadd.s32 %s67, 1
    %p71 = scmp.eq.s32.totalorder %s12, 1
    %p72 = scmp.ne.s32.totalorder %s67, %s69
    %p73 = scmp.eq.s32.totalorder %s12, 0
    %p74 = por %p72, %p73
    %p75 = scmp.ne.s32.totalorder %s67, %s69
    %p76 = scmp.eq.s32.totalorder %s17, 1
    %p77 = por %p75, %p76
    %p78 = scmp.ne.s32.totalorder %s69, %s70
    %p79 = scmp.eq.s32.totalorder %s17, 0
    %p80 = por %p78, %p79
    %p81 = scmp.ne.s32.totalorder %s69, %s70
    %p82 = scmp.eq.s32.totalorder %s18, 1
    %p83 = por %p81, %p82
    %p85 = scmp.ne.s32.totalorder %s70, %s84
    %p86 = scmp.eq.s32.totalorder %s18, 0
    %p87 = por %p85, %p86
    %s89 = sadd.s32 %s88, 1
    %p92 = scmp.eq.s32.totalorder %s12, 1
    %p93 = scmp.ne.s32.totalorder %s88, %s90
    %p94 = scmp.eq.s32.totalorder %s12, 0
    %p95 = por %p93, %p94
    %p96 = scmp.ne.s32.totalorder %s88, %s90
    %p97 = scmp.eq.s32.totalorder %s17, 1
    %p98 = por %p96, %p97
    %p99 = scmp.ne.s32.totalorder %s90, %s91
    %p100 = scmp.eq.s32.totalorder %s17, 0
    %p101 = por %p99, %p100
    %p102 = scmp.ne.s32.totalorder %s90, %s91
    %p103 = scmp.eq.s32.totalorder %s18, 1
    %p104 = por %p102, %p103
    %p106 = scmp.ne.s32.totalorder %s91, %s105
    %p107 = scmp.eq.s32.totalorder %s18, 0
    %p108 = por %p106, %p107
    %s109 = ssub.s32 %s12, %s19
    %p110 = scmp.eq.s32.totalorder %s109, 0
    %s112 = sadd.s32 %s111, 1
    %s113 = scalar_select %p110, %s111, %s112
    %p116 = pneg %p110
    %p117 = scmp.eq.s32.totalorder %s12, 1
    %p118 = por %p116, %p117
    %p119 = scmp.ne.s32.totalorder %s111, %s114
    %p120 = scmp.eq.s32.totalorder %s12, 0
    %p121 = por %p119, %p120
    %p122 = scmp.ne.s32.totalorder %s111, %s114
    %p123 = scmp.eq.s32.totalorder %s17, 1
    %p124 = por %p122, %p123
    %p125 = scmp.ne.s32.totalorder %s114, %s115
    %p126 = scmp.eq.s32.totalorder %s17, 0
    %p127 = por %p125, %p126
    %p128 = scmp.ne.s32.totalorder %s114, %s115
    %p129 = scmp.eq.s32.totalorder %s18, 1
    %p130 = por %p128, %p129
    %p132 = scmp.ne.s32.totalorder %s115, %s131
    %p133 = scmp.eq.s32.totalorder %s18, 0
    %p134 = por %p132, %p133
    %s136 = sadd.s32 %s135, 1
    %p139 = scmp.eq.s32.totalorder %s12, 1
    %p140 = scmp.ne.s32.totalorder %s135, %s137
    %p141 = scmp.eq.s32.totalorder %s12, 0
    %p142 = por %p140, %p141
    %p143 = scmp.ne.s32.totalorder %s135, %s137
    %p144 = scmp.eq.s32.totalorder %s17, 1
    %p145 = por %p143, %p144
    %p146 = scmp.ne.s32.totalorder %s137, %s138
    %p147 = scmp.eq.s32.totalorder %s17, 0
    %p148 = por %p146, %p147
    %p149 = scmp.ne.s32.totalorder %s137, %s138
    %p150 = scmp.eq.s32.totalorder %s18, 1
    %p151 = por %p149, %p150
    %p153 = scmp.ne.s32.totalorder %s138, %s152
    %p154 = scmp.eq.s32.totalorder %s18, 0
    %p155 = por %p153, %p154
    %p156 = scmp.le.s32.totalorder 1, %s12
    %p157 = scmp.lt.s32.totalorder %s12, 3
    %p158 = pnand %p156, %p157
    %p159 = pneg %p158
    // Predicated region
    $region9: #{_lambda_.5} parent=5 // pred_check
      _
    $region10: #{_lambda_.5} parent=5 // pred_check_branch
      %161 = sbr.rel (%p158) target = $region12
    $region11: #{_lambda_.5} parent=5 // pred_region
      %s162 = ssub.s32 %s12, 1
      // Predicated region
      $region13: #{_lambda_.5} parent=11 // pred_check
        %p163 = pneg %p59
      $region14: #{_lambda_.5} parent=11 // pred_check_branch
        %165 = sbr.rel (%p163) target = $region16
      $region15: #{_lambda_.5} parent=11 // pred_region
        _
      $region16: #{_lambda_.5} parent=11 // pred_fallthru
        _
      // Predicated region
      $region17: #{_lambda_.5} parent=11 // pred_check
        %p166 = pneg %p80
      $region18: #{_lambda_.5} parent=11 // pred_check_branch
        %168 = sbr.rel (%p166) target = $region20
      $region19: #{_lambda_.5} parent=11 // pred_region
        _
      $region20: #{_lambda_.5} parent=11 // pred_fallthru
        _
      // Predicated region
      $region21: #{_lambda_.5} parent=11 // pred_check
        %p169 = pneg %p101
      $region22: #{_lambda_.5} parent=11 // pred_check_branch
        %171 = sbr.rel (%p169) target = $region24
      $region23: #{_lambda_.5} parent=11 // pred_region
        _
      $region24: #{_lambda_.5} parent=11 // pred_fallthru
        _
    $region12: #{_lambda_.5} parent=5 // pred_fallthru
      _
    %p172 = scmp.lt.s32.totalorder %s12, 2
    // Predicated region
    $region25: #{_lambda_.5} parent=5 // pred_check
      %p173 = pneg %p172
    $region26: #{_lambda_.5} parent=5 // pred_check_branch
      %175 = sbr.rel (%p173) target = $region28
    $region27: #{_lambda_.5} parent=5 // pred_region
      // Predicated region
      $region29: #{_lambda_.5} parent=27 // pred_check
        %p176 = pneg %p32
      $region30: #{_lambda_.5} parent=27 // pred_check_branch
        %178 = sbr.rel (%p176) target = $region32
      $region31: #{_lambda_.5} parent=27 // pred_region
        %s179 = smul.u32 8, %s12
        %p180 = scmp.lt.s32.totalorder %s179, 15
        %s181 = scalar_select %p180, %s179, 15
        %s182 = smul.addr %s181, 8
        %s183 = scalar_lea.vmem %s0, %s182
        %s184 = smul.u32 8, %s12
      $region32: #{_lambda_.5} parent=27 // pred_fallthru
        _
    $region28: #{_lambda_.5} parent=5 // pred_fallthru
      _
    %p185 = scmp.le.s32.totalorder 1, %s12
    %p186 = scmp.lt.s32.totalorder %s12, 3
    %p187 = pnand %p185, %p186
    %p188 = pneg %p187
    // Predicated region
    $region33: #{_lambda_.5} parent=5 // pred_check
      _
    $region34: #{_lambda_.5} parent=5 // pred_check_branch
      %190 = sbr.rel (%p187) target = $region36
    $region35: #{_lambda_.5} parent=5 // pred_region
      %s191 = ssub.s32 %s12, 1
      %s192 = smul.u32 8, %s17
      %p193 = scmp.lt.s32.totalorder %s192, 15
      %s194 = scalar_select %p193, %s192, 15
      %s195 = smul.addr %s194, 8
      %s196 = scalar_lea.vmem %s0, %s195
      %p197 = pneg %p38
      %p198 = pneg %p35
      %p199 = pneg %p59
      %p200 = pneg %p56
      %p201 = pneg %p80
      %p202 = pneg %p77
      %p203 = pneg %p101
      %p204 = pneg %p98
      %p205 = pneg %p127
      %p206 = pneg %p124
      %s207 = smul.u32 8, %s17
      %p208 = scmp.lt.s32.totalorder %s207, 15
      %s209 = scalar_select %p208, %s207, 15
      %s210 = smul.addr %s209, 8
      %s211 = scalar_lea.vmem %s4, %s210
      %p212 = pneg %p148
      %p213 = pneg %p145
      %s214 = smul.u32 8, %s17
      %p215 = scmp.lt.s32.totalorder %s214, 15
      %s216 = scalar_select %p215, %s214, 15
      %s217 = smul.addr %s216, 8
      %s218 = scalar_lea.vmem %s0, %s217
      %s219 = smul.u32 8, %s17
      %s220 = smul.u32 8, %s17
      %p221 = scmp.lt.s32.totalorder %s220, 15
      %s222 = scalar_select %p221, %s220, 15
      %s223 = smul.addr %s222, 8
      %s224 = scalar_lea.vmem %s4, %s223
      %s225 = smul.u32 8, %s17
      %v229 = vld [vmem:[%s1] sm:$0xf]
      %v230 = vld [vmem:[%s218] sm:$0xff]
      %v231 = vld [vmem:[%s218 + $0x8] sm:$0xff]
      %v232 = vld [vmem:[%s218 + $0x10] sm:$0xff]
      %v233 = vld [vmem:[%s218 + $0x18] sm:$0xff]
      %v234 = vld [vmem:[%s218 + $0x20] sm:$0xff]
      %v235 = vld [vmem:[%s218 + $0x28] sm:$0xff]
      %v236 = vld [vmem:[%s218 + $0x30] sm:$0xff]
      %v237 = vld [vmem:[%s218 + $0x38] sm:$0xff]
      %v238 = vld [vmem:[%s2] sm:$0x1]
      %v239 = vld [vmem:[%s2 + $0x1] sm:$0x1]
      %v240 = vmul.f32 %v229, 0.0078125
      %v241 = vmul.f32 %v240, %v240
      %v243 = vrot.slane %v241, 7
      %v245 = vsub.f32 %v240, %v243
      %v246 = vmax.f32 %v245, 0.0
      %v247 = vlaneseq
      %v248 = vshrl.u32 %v247, 7
      %v249 = vsub.s32 0, %v248
      %v250 = vrot.slane %v240, %v249
      %v251 = vsub.f32 %v230, %v250
      %v252 = vsub.f32 %v231, %v250
      %v253 = vsub.f32 %v232, %v250
      %v254 = vsub.f32 %v233, %v250
      %v255 = vsub.f32 %v234, %v250
      %v256 = vsub.f32 %v235, %v250
      %v257 = vsub.f32 %v236, %v250
      %v258 = vsub.f32 %v237, %v250
      %v259 = vadd.f32 %v246, 1e-05
      %v260 = vrsqrt.pop %v259
      %v261 = vlaneseq
      %v262 = vshrl.u32 %v261, 7
      %v263 = vsub.s32 1, %v262
      %v264 = vrot.slane %v260, %v263
      %v265 = vmul.f32 %v251, %v264
      %v266 = vmul.f32 %v252, %v264
      %v267 = vmul.f32 %v253, %v264
      %v268 = vmul.f32 %v254, %v264
      %v269 = vmul.f32 %v255, %v264
      %v270 = vmul.f32 %v256, %v264
      %v271 = vmul.f32 %v257, %v264
      %v272 = vmul.f32 %v258, %v264
      %v273 = vlaneseq
      %v274 = vshrl.u32 %v273, 7
      %v275 = vsub.s32 0, %v274
      %v276 = vrot.slane %v238, %v275
      %v277 = vmul.f32 %v276, %v265
      %v278 = vmul.f32 %v276, %v266
      %v279 = vmul.f32 %v276, %v267
      %v280 = vmul.f32 %v276, %v268
      %v281 = vmul.f32 %v276, %v269
      %v282 = vmul.f32 %v276, %v270
      %v283 = vmul.f32 %v276, %v271
      %v284 = vmul.f32 %v276, %v272
      %v285 = vlaneseq
      %v286 = vshrl.u32 %v285, 7
      %v287 = vsub.s32 0, %v286
      %v288 = vrot.slane %v239, %v287
      %v289 = vadd.f32 %v277, %v288
      %v290 = vadd.f32 %v278, %v288
      %v291 = vadd.f32 %v279, %v288
      %v292 = vadd.f32 %v280, %v288
      %v293 = vadd.f32 %v281, %v288
      %v294 = vadd.f32 %v282, %v288
      %v295 = vadd.f32 %v283, %v288
      %v296 = vadd.f32 %v284, %v288
      %v297 = vmax.f32 %v289, 0.0
      %v298 = vmax.f32 %v290, 0.0
      %v299 = vmax.f32 %v291, 0.0
      %v300 = vmax.f32 %v292, 0.0
      %v301 = vmax.f32 %v293, 0.0
      %v302 = vmax.f32 %v294, 0.0
      %v303 = vmax.f32 %v295, 0.0
      %v304 = vmax.f32 %v296, 0.0
      %v305 = vpack.c.bf16 %v298, %v297
      %v306 = vpack.c.bf16 %v300, %v299
      %v307 = vpack.c.bf16 %v302, %v301
      %v308 = vpack.c.bf16 %v304, %v303
      %v309 = vlaneseq
      %v310 = vshrl.u32 %v309, 7
      %v311 = vadd.s32 %v310, 8
      %v312 = vadd.s32 %v310, 16
      %v313 = vadd.s32 %v310, 24
      %v314 = vadd.s32 %v310, 32
      %v315 = vadd.s32 %v310, 40
      %v316 = vadd.s32 %v310, 48
      %v317 = vadd.s32 %v310, 56
      %v318 = vand.u32 %v310, 63
      %v319 = vand.u32 %v311, 63
      %v320 = vand.u32 %v312, 63
      %v321 = vand.u32 %v313, 63
      %v322 = vand.u32 %v314, 63
      %v323 = vand.u32 %v315, 63
      %v324 = vand.u32 %v316, 63
      %v325 = vand.u32 %v317, 63
      %v326 = vshra.s32 %v318, 3
      %v327 = vshra.s32 %v319, 3
      %v328 = vshra.s32 %v320, 3
      %v329 = vshra.s32 %v321, 3
      %v330 = vshra.s32 %v322, 3
      %v331 = vshra.s32 %v323, 3
      %v332 = vshra.s32 %v324, 3
      %v333 = vshra.s32 %v325, 3
      %v334 = vand.u32 %v318, 7
      %v335 = vand.u32 %v319, 7
      %v336 = vand.u32 %v320, 7
      %v337 = vand.u32 %v321, 7
      %v338 = vand.u32 %v322, 7
      %v339 = vand.u32 %v323, 7
      %v340 = vand.u32 %v324, 7
      %v341 = vand.u32 %v325, 7
      %v343 = vshrl.u32 %v308, 16
      %v345 = vrot.slane %v343, 3
      %v346 = vshll.u32 %v308, 16
      %v348 = vrot.slane %v346, 4
      %v349 = vor.u32 %v345, %v348
      %vm351 = vsmask.f32 4352
      %v353 = vshrl.u32 %v305, 16
      %v355 = vrot.slane %v353, 3
      %v356 = vshll.u32 %v305, 16
      %v358 = vrot.slane %v356, 4
      %v359 = vor.u32 %v355, %v358
      %v361 = vshrl.u32 %v306, 16
      %v363 = vrot.slane %v361, 3
      %v364 = vshll.u32 %v306, 16
      %v366 = vrot.slane %v364, 4
      %v367 = vor.u32 %v363, %v366
      %v368 = vsel %vm351, %v359, %v367
      %v370 = vshrl.u32 %v307, 16
      %v372 = vrot.slane %v370, 3
      %v373 = vshll.u32 %v307, 16
      %v375 = vrot.slane %v373, 4
      %v376 = vor.u32 %v372, %v375
      %v377 = vsel %vm351, %v367, %v376
      %v378 = vsel %vm351, %v376, %v349
      %vm383 = vcmask 1044480
      %vm384 = vmand %vm383, %vm351
      %v385 = vsel %vm384, %v349, %v359
      %vm386 = vcmp.ge.s32.totalorder %v326, 1
      %vm387 = vcmp.ge.s32.totalorder %v327, 1
      %vm388 = vcmp.ge.s32.totalorder %v328, 1
      %vm389 = vcmp.ge.s32.totalorder %v329, 1
      %vm390 = vcmp.ge.s32.totalorder %v330, 1
      %vm391 = vcmp.ge.s32.totalorder %v331, 1
      %vm392 = vcmp.ge.s32.totalorder %v332, 1
      %vm393 = vcmp.ge.s32.totalorder %v333, 1
      %vm394 = vcmp.lt.s32.totalorder %v326, 9
      %vm395 = vcmp.lt.s32.totalorder %v327, 9
      %vm396 = vcmp.lt.s32.totalorder %v328, 9
      %vm397 = vcmp.lt.s32.totalorder %v329, 9
      %vm398 = vcmp.lt.s32.totalorder %v330, 9
      %vm399 = vcmp.lt.s32.totalorder %v331, 9
      %vm400 = vcmp.lt.s32.totalorder %v332, 9
      %vm401 = vcmp.lt.s32.totalorder %v333, 9
      %vm402 = vmand %vm386, %vm394
      %vm403 = vmand %vm387, %vm395
      %vm404 = vmand %vm388, %vm396
      %vm405 = vmand %vm389, %vm397
      %vm406 = vmand %vm390, %vm398
      %vm407 = vmand %vm391, %vm399
      %vm408 = vmand %vm392, %vm400
      %vm409 = vmand %vm393, %vm401
      %vm410 = vcmp.ge.s32.totalorder %v334, 1
      %vm411 = vcmp.ge.s32.totalorder %v335, 1
      %vm412 = vcmp.ge.s32.totalorder %v336, 1
      %vm413 = vcmp.ge.s32.totalorder %v337, 1
      %vm414 = vcmp.ge.s32.totalorder %v338, 1
      %vm415 = vcmp.ge.s32.totalorder %v339, 1
      %vm416 = vcmp.ge.s32.totalorder %v340, 1
      %vm417 = vcmp.ge.s32.totalorder %v341, 1
      %vm418 = vmand %vm402, %vm410
      %vm419 = vmand %vm403, %vm411
      %vm420 = vmand %vm404, %vm412
      %vm421 = vmand %vm405, %vm413
      %vm422 = vmand %vm406, %vm414
      %vm423 = vmand %vm407, %vm415
      %vm424 = vmand %vm408, %vm416
      %vm425 = vmand %vm409, %vm417
      %vm426 = vcmp.lt.s32.totalorder %v334, 9
      %vm427 = vcmp.lt.s32.totalorder %v335, 9
      %vm428 = vcmp.lt.s32.totalorder %v336, 9
      %vm429 = vcmp.lt.s32.totalorder %v337, 9
      %vm430 = vcmp.lt.s32.totalorder %v338, 9
      %vm431 = vcmp.lt.s32.totalorder %v339, 9
      %vm432 = vcmp.lt.s32.totalorder %v340, 9
      %vm433 = vcmp.lt.s32.totalorder %v341, 9
      %vm434 = vmand %vm418, %vm426
      %vm435 = vmand %vm419, %vm427
      %vm436 = vmand %vm420, %vm428
      %vm437 = vmand %vm421, %vm429
      %vm438 = vmand %vm422, %vm430
      %vm439 = vmand %vm423, %vm431
      %vm440 = vmand %vm424, %vm432
      %vm441 = vmand %vm425, %vm433
      %vm442 = vmpackc.low %vm434, %vm434
      %vm443 = vmpackc.low %vm435, %vm435
      %vm444 = vmpackc.low %vm436, %vm436
      %vm445 = vmpackc.low %vm437, %vm437
      %vm446 = vmpackc.low %vm438, %vm438
      %vm447 = vmpackc.low %vm439, %vm439
      %vm448 = vmpackc.low %vm440, %vm440
      %vm449 = vmpackc.low %vm441, %vm441
      %v450 = vsel %vm442, 65537, 0
      %v451 = vsel %vm443, 65537, 0
      %v452 = vsel %vm444, 65537, 0
      %v453 = vsel %vm445, 65537, 0
      %v454 = vsel %vm446, 65537, 0
      %v455 = vsel %vm447, 65537, 0
      %v456 = vsel %vm448, 65537, 0
      %v457 = vsel %vm449, 65537, 0
      %v458 = vunpack.c.l.b16 %v450
      %v459 = vunpack.c.l.b16 %v451
      %v460 = vunpack.c.l.b16 %v452
      %v461 = vunpack.c.l.b16 %v453
      %v462 = vunpack.c.l.b16 %v454
      %v463 = vunpack.c.l.b16 %v455
      %v464 = vunpack.c.l.b16 %v456
      %v465 = vunpack.c.l.b16 %v457
      %v466 = vpack.c.b16 %v459, %v458
      %v467 = vpack.c.b16 %v461, %v460
      %v468 = vpack.c.b16 %v463, %v462
      %v469 = vpack.c.b16 %v465, %v464
      %vm470 = vcmp.ne.s16.totalorder %v466, 0
      %vm471 = vcmp.ne.s16.totalorder %v467, 0
      %vm472 = vcmp.ne.s16.totalorder %v468, 0
      %vm473 = vcmp.ne.s16.totalorder %v469, 0
      %v474 = vsel %vm470, %v385, 0
      %v475 = vsel %vm471, %v368, 0
      %v476 = vsel %vm472, %v377, 0
      %v477 = vsel %vm473, %v378, 0
      %v479 = vrot.slane %v308, 4
      %vm483 = vcmask 1043456
      %v484 = vrot.slane %v305, 4
      %v485 = vrot.slane %v306, 4
      %v486 = vsel %vm483, %v484, %v485
      %v487 = vrot.slane %v307, 4
      %v488 = vsel %vm483, %v485, %v487
      %v489 = vsel %vm483, %v487, %v479
      %vm493 = vcmask 1043456
      %v496 = vsel %vm493, %v479, %v484
      %vm498 = vcmp.ge.s32.totalorder %v334, 0
      %vm499 = vcmp.ge.s32.totalorder %v335, 0
      %vm500 = vcmp.ge.s32.totalorder %v336, 0
      %vm501 = vcmp.ge.s32.totalorder %v337, 0
      %vm502 = vcmp.ge.s32.totalorder %v338, 0
      %vm503 = vcmp.ge.s32.totalorder %v339, 0
      %vm504 = vcmp.ge.s32.totalorder %v340, 0
      %vm505 = vcmp.ge.s32.totalorder %v341, 0
      %vm506 = vmand %vm402, %vm498
      %vm507 = vmand %vm403, %vm499
      %vm508 = vmand %vm404, %vm500
      %vm509 = vmand %vm405, %vm501
      %vm510 = vmand %vm406, %vm502
      %vm511 = vmand %vm407, %vm503
      %vm512 = vmand %vm408, %vm504
      %vm513 = vmand %vm409, %vm505
      %vm514 = vcmp.lt.s32.totalorder %v334, 8
      %vm515 = vcmp.lt.s32.totalorder %v335, 8
      %vm516 = vcmp.lt.s32.totalorder %v336, 8
      %vm517 = vcmp.lt.s32.totalorder %v337, 8
      %vm518 = vcmp.lt.s32.totalorder %v338, 8
      %vm519 = vcmp.lt.s32.totalorder %v339, 8
      %vm520 = vcmp.lt.s32.totalorder %v340, 8
      %vm521 = vcmp.lt.s32.totalorder %v341, 8
      %vm522 = vmand %vm506, %vm514
      %vm523 = vmand %vm507, %vm515
      %vm524 = vmand %vm508, %vm516
      %vm525 = vmand %vm509, %vm517
      %vm526 = vmand %vm510, %vm518
      %vm527 = vmand %vm511, %vm519
      %vm528 = vmand %vm512, %vm520
      %vm529 = vmand %vm513, %vm521
      %vm530 = vmpackc.low %vm522, %vm522
      %vm531 = vmpackc.low %vm523, %vm523
      %vm532 = vmpackc.low %vm524, %vm524
      %vm533 = vmpackc.low %vm525, %vm525
      %vm534 = vmpackc.low %vm526, %vm526
      %vm535 = vmpackc.low %vm527, %vm527
      %vm536 = vmpackc.low %vm528, %vm528
      %vm537 = vmpackc.low %vm529, %vm529
      %v538 = vsel %vm530, 65537, 0
      %v539 = vsel %vm531, 65537, 0
      %v540 = vsel %vm532, 65537, 0
      %v541 = vsel %vm533, 65537, 0
      %v542 = vsel %vm534, 65537, 0
      %v543 = vsel %vm535, 65537, 0
      %v544 = vsel %vm536, 65537, 0
      %v545 = vsel %vm537, 65537, 0
      %v546 = vunpack.c.l.b16 %v538
      %v547 = vunpack.c.l.b16 %v539
      %v548 = vunpack.c.l.b16 %v540
      %v549 = vunpack.c.l.b16 %v541
      %v550 = vunpack.c.l.b16 %v542
      %v551 = vunpack.c.l.b16 %v543
      %v552 = vunpack.c.l.b16 %v544
      %v553 = vunpack.c.l.b16 %v545
      %v554 = vpack.c.b16 %v547, %v546
      %v555 = vpack.c.b16 %v549, %v548
      %v556 = vpack.c.b16 %v551, %v550
      %v557 = vpack.c.b16 %v553, %v552
      %vm558 = vcmp.ne.s16.totalorder %v554, 0
      %vm559 = vcmp.ne.s16.totalorder %v555, 0
      %vm560 = vcmp.ne.s16.totalorder %v556, 0
      %vm561 = vcmp.ne.s16.totalorder %v557, 0
      %v562 = vsel %vm558, %v496, 0
      %v563 = vsel %vm559, %v486, 0
      %v564 = vsel %vm560, %v488, 0
      %v565 = vsel %vm561, %v489, 0
      %v566 = vrot.slane %v343, 4
      %v567 = vrot.slane %v346, 5
      %v568 = vor.u32 %v566, %v567
      %vm570 = vsmask.f32 3328
      %v571 = vrot.slane %v353, 4
      %v572 = vrot.slane %v356, 5
      %v573 = vor.u32 %v571, %v572
      %v574 = vrot.slane %v361, 4
      %v575 = vrot.slane %v364, 5
      %v576 = vor.u32 %v574, %v575
      %v577 = vsel %vm570, %v573, %v576
      %v578 = vrot.slane %v370, 4
      %v579 = vrot.slane %v373, 5
      %v580 = vor.u32 %v578, %v579
      %v581 = vsel %vm570, %v576, %v580
      %v582 = vsel %vm570, %v580, %v568
      %vm587 = vmand %vm483, %vm570
      %v588 = vsel %vm587, %v568, %v573
      %vm589 = vcmp.ge.s32.totalorder %v334, 4294967295
      %vm590 = vcmp.ge.s32.totalorder %v335, 4294967295
      %vm591 = vcmp.ge.s32.totalorder %v336, 4294967295
      %vm592 = vcmp.ge.s32.totalorder %v337, 4294967295
      %vm593 = vcmp.ge.s32.totalorder %v338, 4294967295
      %vm594 = vcmp.ge.s32.totalorder %v339, 4294967295
      %vm595 = vcmp.ge.s32.totalorder %v340, 4294967295
      %vm596 = vcmp.ge.s32.totalorder %v341, 4294967295
      %vm597 = vmand %vm402, %vm589
      %vm598 = vmand %vm403, %vm590
      %vm599 = vmand %vm404, %vm591
      %vm600 = vmand %vm405, %vm592
      %vm601 = vmand %vm406, %vm593
      %vm602 = vmand %vm407, %vm594
      %vm603 = vmand %vm408, %vm595
      %vm604 = vmand %vm409, %vm596
      %vm605 = vcmp.lt.s32.totalorder %v334, 7
      %vm606 = vcmp.lt.s32.totalorder %v335, 7
      %vm607 = vcmp.lt.s32.totalorder %v336, 7
      %vm608 = vcmp.lt.s32.totalorder %v337, 7
      %vm609 = vcmp.lt.s32.totalorder %v338, 7
      %vm610 = vcmp.lt.s32.totalorder %v339, 7
      %vm611 = vcmp.lt.s32.totalorder %v340, 7
      %vm612 = vcmp.lt.s32.totalorder %v341, 7
      %vm613 = vmand %vm597, %vm605
      %vm614 = vmand %vm598, %vm606
      %vm615 = vmand %vm599, %vm607
      %vm616 = vmand %vm600, %vm608
      %vm617 = vmand %vm601, %vm609
      %vm618 = vmand %vm602, %vm610
      %vm619 = vmand %vm603, %vm611
      %vm620 = vmand %vm604, %vm612
      %vm621 = vmpackc.low %vm613, %vm613
      %vm622 = vmpackc.low %vm614, %vm614
      %vm623 = vmpackc.low %vm615, %vm615
      %vm624 = vmpackc.low %vm616, %vm616
      %vm625 = vmpackc.low %vm617, %vm617
      %vm626 = vmpackc.low %vm618, %vm618
      %vm627 = vmpackc.low %vm619, %vm619
      %vm628 = vmpackc.low %vm620, %vm620
      %v629 = vsel %vm621, 65537, 0
      %v630 = vsel %vm622, 65537, 0
      %v631 = vsel %vm623, 65537, 0
      %v632 = vsel %vm624, 65537, 0
      %v633 = vsel %vm625, 65537, 0
      %v634 = vsel %vm626, 65537, 0
      %v635 = vsel %vm627, 65537, 0
      %v636 = vsel %vm628, 65537, 0
      %v637 = vunpack.c.l.b16 %v629
      %v638 = vunpack.c.l.b16 %v630
      %v639 = vunpack.c.l.b16 %v631
      %v640 = vunpack.c.l.b16 %v632
      %v641 = vunpack.c.l.b16 %v633
      %v642 = vunpack.c.l.b16 %v634
      %v643 = vunpack.c.l.b16 %v635
      %v644 = vunpack.c.l.b16 %v636
      %v645 = vpack.c.b16 %v638, %v637
      %v646 = vpack.c.b16 %v640, %v639
      %v647 = vpack.c.b16 %v642, %v641
      %v648 = vpack.c.b16 %v644, %v643
      %vm649 = vcmp.ne.s16.totalorder %v645, 0
      %vm650 = vcmp.ne.s16.totalorder %v646, 0
      %vm651 = vcmp.ne.s16.totalorder %v647, 0
      %vm652 = vcmp.ne.s16.totalorder %v648, 0
      %v653 = vsel %vm649, %v588, 0
      %v654 = vsel %vm650, %v577, 0
      %v655 = vsel %vm651, %v581, 0
      %v656 = vsel %vm652, %v582, 0
      %v657 = vrot.slane %v343, 7
      %vm659 = vsmask.f32 256
      %v660 = vrot.slane %v353, 7
      %v661 = vor.u32 %v660, %v356
      %v662 = vrot.slane %v361, 7
      %v663 = vor.u32 %v662, %v364
      %v664 = vsel %vm659, %v660, %v663
      %v665 = vrot.slane %v370, 7
      %v666 = vor.u32 %v665, %v373
      %v667 = vsel %vm659, %v662, %v666
      %v668 = vor.u32 %v657, %v346
      %v669 = vsel %vm659, %v665, %v668
      %vm674 = vcmask 1040384
      %vm675 = vmand %vm674, %vm659
      %v676 = vsel %vm675, %v657, %v661
      %vm677 = vcmp.ge.s32.totalorder %v326, 0
      %vm678 = vcmp.ge.s32.totalorder %v327, 0
      %vm679 = vcmp.ge.s32.totalorder %v328, 0
      %vm680 = vcmp.ge.s32.totalorder %v329, 0
      %vm681 = vcmp.ge.s32.totalorder %v330, 0
      %vm682 = vcmp.ge.s32.totalorder %v331, 0
      %vm683 = vcmp.ge.s32.totalorder %v332, 0
      %vm684 = vcmp.ge.s32.totalorder %v333, 0
      %vm685 = vcmp.lt.s32.totalorder %v326, 8
      %vm686 = vcmp.lt.s32.totalorder %v327, 8
      %vm687 = vcmp.lt.s32.totalorder %v328, 8
      %vm688 = vcmp.lt.s32.totalorder %v329, 8
      %vm689 = vcmp.lt.s32.totalorder %v330, 8
      %vm690 = vcmp.lt.s32.totalorder %v331, 8
      %vm691 = vcmp.lt.s32.totalorder %v332, 8
      %vm692 = vcmp.lt.s32.totalorder %v333, 8
      %vm693 = vmand %vm677, %vm685
      %vm694 = vmand %vm678, %vm686
      %vm695 = vmand %vm679, %vm687
      %vm696 = vmand %vm680, %vm688
      %vm697 = vmand %vm681, %vm689
      %vm698 = vmand %vm682, %vm690
      %vm699 = vmand %vm683, %vm691
      %vm700 = vmand %vm684, %vm692
      %vm701 = vmand %vm693, %vm410
      %vm702 = vmand %vm694, %vm411
      %vm703 = vmand %vm695, %vm412
      %vm704 = vmand %vm696, %vm413
      %vm705 = vmand %vm697, %vm414
      %vm706 = vmand %vm698, %vm415
      %vm707 = vmand %vm699, %vm416
      %vm708 = vmand %vm700, %vm417
      %vm709 = vmand %vm701, %vm426
      %vm710 = vmand %vm702, %vm427
      %vm711 = vmand %vm703, %vm428
      %vm712 = vmand %vm704, %vm429
      %vm713 = vmand %vm705, %vm430
      %vm714 = vmand %vm706, %vm431
      %vm715 = vmand %vm707, %vm432
      %vm716 = vmand %vm708, %vm433
      %vm717 = vmpackc.low %vm709, %vm709
      %vm718 = vmpackc.low %vm710, %vm710
      %vm719 = vmpackc.low %vm711, %vm711
      %vm720 = vmpackc.low %vm712, %vm712
      %vm721 = vmpackc.low %vm713, %vm713
      %vm722 = vmpackc.low %vm714, %vm714
      %vm723 = vmpackc.low %vm715, %vm715
      %vm724 = vmpackc.low %vm716, %vm716
      %v725 = vsel %vm717, 65537, 0
      %v726 = vsel %vm718, 65537, 0
      %v727 = vsel %vm719, 65537, 0
      %v728 = vsel %vm720, 65537, 0
      %v729 = vsel %vm721, 65537, 0
      %v730 = vsel %vm722, 65537, 0
      %v731 = vsel %vm723, 65537, 0
      %v732 = vsel %vm724, 65537, 0
      %v733 = vunpack.c.l.b16 %v725
      %v734 = vunpack.c.l.b16 %v726
      %v735 = vunpack.c.l.b16 %v727
      %v736 = vunpack.c.l.b16 %v728
      %v737 = vunpack.c.l.b16 %v729
      %v738 = vunpack.c.l.b16 %v730
      %v739 = vunpack.c.l.b16 %v731
      %v740 = vunpack.c.l.b16 %v732
      %v741 = vpack.c.b16 %v734, %v733
      %v742 = vpack.c.b16 %v736, %v735
      %v743 = vpack.c.b16 %v738, %v737
      %v744 = vpack.c.b16 %v740, %v739
      %vm745 = vcmp.ne.s16.totalorder %v741, 0
      %vm746 = vcmp.ne.s16.totalorder %v742, 0
      %vm747 = vcmp.ne.s16.totalorder %v743, 0
      %vm748 = vcmp.ne.s16.totalorder %v744, 0
      %v749 = vsel %vm745, %v676, 0
      %v750 = vsel %vm746, %v664, 0
      %v751 = vsel %vm747, %v667, 0
      %v752 = vsel %vm748, %v669, 0
      %vm753 = vsmask.f32 7424
      %v754 = vrot.slane %v356, 1
      %v755 = vor.u32 %v353, %v754
      %v756 = vrot.slane %v364, 1
      %v757 = vsel %vm753, %v755, %v756
      %v758 = vor.u32 %v361, %v756
      %v759 = vrot.slane %v373, 1
      %v760 = vsel %vm753, %v758, %v759
      %v761 = vor.u32 %v370, %v759
      %v762 = vrot.slane %v346, 1
      %v763 = vsel %vm753, %v761, %v762
      %v764 = vor.u32 %v343, %v762
      %vm770 = vcmask 1047552
      %vm771 = vmand %vm770, %vm753
      %v772 = vsel %vm771, %v764, %v754
      %vm773 = vmand %vm693, %vm589
      %vm774 = vmand %vm694, %vm590
      %vm775 = vmand %vm695, %vm591
      %vm776 = vmand %vm696, %vm592
      %vm777 = vmand %vm697, %vm593
      %vm778 = vmand %vm698, %vm594
      %vm779 = vmand %vm699, %vm595
      %vm780 = vmand %vm700, %vm596
      %vm781 = vmand %vm773, %vm605
      %vm782 = vmand %vm774, %vm606
      %vm783 = vmand %vm775, %vm607
      %vm784 = vmand %vm776, %vm608
      %vm785 = vmand %vm777, %vm609
      %vm786 = vmand %vm778, %vm610
      %vm787 = vmand %vm779, %vm611
      %vm788 = vmand %vm780, %vm612
      %vm789 = vmpackc.low %vm781, %vm781
      %vm790 = vmpackc.low %vm782, %vm782
      %vm791 = vmpackc.low %vm783, %vm783
      %vm792 = vmpackc.low %vm784, %vm784
      %vm793 = vmpackc.low %vm785, %vm785
      %vm794 = vmpackc.low %vm786, %vm786
      %vm795 = vmpackc.low %vm787, %vm787
      %vm796 = vmpackc.low %vm788, %vm788
      %v797 = vsel %vm789, 65537, 0
      %v798 = vsel %vm790, 65537, 0
      %v799 = vsel %vm791, 65537, 0
      %v800 = vsel %vm792, 65537, 0
      %v801 = vsel %vm793, 65537, 0
      %v802 = vsel %vm794, 65537, 0
      %v803 = vsel %vm795, 65537, 0
      %v804 = vsel %vm796, 65537, 0
      %v805 = vunpack.c.l.b16 %v797
      %v806 = vunpack.c.l.b16 %v798
      %v807 = vunpack.c.l.b16 %v799
      %v808 = vunpack.c.l.b16 %v800
      %v809 = vunpack.c.l.b16 %v801
      %v810 = vunpack.c.l.b16 %v802
      %v811 = vunpack.c.l.b16 %v803
      %v812 = vunpack.c.l.b16 %v804
      %v813 = vpack.c.b16 %v806, %v805
      %v814 = vpack.c.b16 %v808, %v807
      %v815 = vpack.c.b16 %v810, %v809
      %v816 = vpack.c.b16 %v812, %v811
      %vm817 = vcmp.ne.s16.totalorder %v813, 0
      %vm818 = vcmp.ne.s16.totalorder %v814, 0
      %vm819 = vcmp.ne.s16.totalorder %v815, 0
      %vm820 = vcmp.ne.s16.totalorder %v816, 0
      %v821 = vsel %vm817, %v757, 0
      %v822 = vsel %vm818, %v760, 0
      %v823 = vsel %vm819, %v763, 0
      %v824 = vsel %vm820, %v772, 0
      %vm825 = vcmp.ge.s32.totalorder %v326, 4294967295
      %vm826 = vcmp.ge.s32.totalorder %v327, 4294967295
      %vm827 = vcmp.ge.s32.totalorder %v328, 4294967295
      %vm828 = vcmp.ge.s32.totalorder %v329, 4294967295
      %vm829 = vcmp.ge.s32.totalorder %v330, 4294967295
      %vm830 = vcmp.ge.s32.totalorder %v331, 4294967295
      %vm831 = vcmp.ge.s32.totalorder %v332, 4294967295
      %vm832 = vcmp.ge.s32.totalorder %v333, 4294967295
      %vm833 = vcmp.lt.s32.totalorder %v326, 7
      %vm834 = vcmp.lt.s32.totalorder %v327, 7
      %vm835 = vcmp.lt.s32.totalorder %v328, 7
      %vm836 = vcmp.lt.s32.totalorder %v329, 7
      %vm837 = vcmp.lt.s32.totalorder %v330, 7
      %vm838 = vcmp.lt.s32.totalorder %v331, 7
      %vm839 = vcmp.lt.s32.totalorder %v332, 7
      %vm840 = vcmp.lt.s32.totalorder %v333, 7
      %vm841 = vmand %vm825, %vm833
      %vm842 = vmand %vm826, %vm834
      %vm843 = vmand %vm827, %vm835
      %vm844 = vmand %vm828, %vm836
      %vm845 = vmand %vm829, %vm837
      %vm846 = vmand %vm830, %vm838
      %vm847 = vmand %vm831, %vm839
      %vm848 = vmand %vm832, %vm840
      %vm849 = vmand %vm841, %vm410
      %vm850 = vmand %vm842, %vm411
      %vm851 = vmand %vm843, %vm412
      %vm852 = vmand %vm844, %vm413
      %vm853 = vmand %vm845, %vm414
      %vm854 = vmand %vm846, %vm415
      %vm855 = vmand %vm847, %vm416
      %vm856 = vmand %vm848, %vm417
      %vm857 = vmand %vm849, %vm426
      %vm858 = vmand %vm850, %vm427
      %vm859 = vmand %vm851, %vm428
      %vm860 = vmand %vm852, %vm429
      %vm861 = vmand %vm853, %vm430
      %vm862 = vmand %vm854, %vm431
      %vm863 = vmand %vm855, %vm432
      %vm864 = vmand %vm856, %vm433
      %vm865 = vmpackc.low %vm857, %vm857
      %vm866 = vmpackc.low %vm858, %vm858
      %vm867 = vmpackc.low %vm859, %vm859
      %vm868 = vmpackc.low %vm860, %vm860
      %vm869 = vmpackc.low %vm861, %vm861
      %vm870 = vmpackc.low %vm862, %vm862
      %vm871 = vmpackc.low %vm863, %vm863
      %vm872 = vmpackc.low %vm864, %vm864
      %v873 = vsel %vm865, 65537, 0
      %v874 = vsel %vm866, 65537, 0
      %v875 = vsel %vm867, 65537, 0
      %v876 = vsel %vm868, 65537, 0
      %v877 = vsel %vm869, 65537, 0
      %v878 = vsel %vm870, 65537, 0
      %v879 = vsel %vm871, 65537, 0
      %v880 = vsel %vm872, 65537, 0
      %v881 = vunpack.c.l.b16 %v873
      %v882 = vunpack.c.l.b16 %v874
      %v883 = vunpack.c.l.b16 %v875
      %v884 = vunpack.c.l.b16 %v876
      %v885 = vunpack.c.l.b16 %v877
      %v886 = vunpack.c.l.b16 %v878
      %v887 = vunpack.c.l.b16 %v879
      %v888 = vunpack.c.l.b16 %v880
      %v889 = vpack.c.b16 %v882, %v881
      %v890 = vpack.c.b16 %v884, %v883
      %v891 = vpack.c.b16 %v886, %v885
      %v892 = vpack.c.b16 %v888, %v887
      %vm893 = vcmp.ne.s16.totalorder %v889, 0
      %vm894 = vcmp.ne.s16.totalorder %v890, 0
      %vm895 = vcmp.ne.s16.totalorder %v891, 0
      %vm896 = vcmp.ne.s16.totalorder %v892, 0
      %v897 = vsel %vm893, %v368, 0
      %v898 = vsel %vm894, %v377, 0
      %v899 = vsel %vm895, %v378, 0
      %v900 = vsel %vm896, %v385, 0
      %vm901 = vmand %vm841, %vm498
      %vm902 = vmand %vm842, %vm499
      %vm903 = vmand %vm843, %vm500
      %vm904 = vmand %vm844, %vm501
      %vm905 = vmand %vm845, %vm502
      %vm906 = vmand %vm846, %vm503
      %vm907 = vmand %vm847, %vm504
      %vm908 = vmand %vm848, %vm505
      %vm909 = vmand %vm901, %vm514
      %vm910 = vmand %vm902, %vm515
      %vm911 = vmand %vm903, %vm516
      %vm912 = vmand %vm904, %vm517
      %vm913 = vmand %vm905, %vm518
      %vm914 = vmand %vm906, %vm519
      %vm915 = vmand %vm907, %vm520
      %vm916 = vmand %vm908, %vm521
      %vm917 = vmpackc.low %vm909, %vm909
      %vm918 = vmpackc.low %vm910, %vm910
      %vm919 = vmpackc.low %vm911, %vm911
      %vm920 = vmpackc.low %vm912, %vm912
      %vm921 = vmpackc.low %vm913, %vm913
      %vm922 = vmpackc.low %vm914, %vm914
      %vm923 = vmpackc.low %vm915, %vm915
      %vm924 = vmpackc.low %vm916, %vm916
      %v925 = vsel %vm917, 65537, 0
      %v926 = vsel %vm918, 65537, 0
      %v927 = vsel %vm919, 65537, 0
      %v928 = vsel %vm920, 65537, 0
      %v929 = vsel %vm921, 65537, 0
      %v930 = vsel %vm922, 65537, 0
      %v931 = vsel %vm923, 65537, 0
      %v932 = vsel %vm924, 65537, 0
      %v933 = vunpack.c.l.b16 %v925
      %v934 = vunpack.c.l.b16 %v926
      %v935 = vunpack.c.l.b16 %v927
      %v936 = vunpack.c.l.b16 %v928
      %v937 = vunpack.c.l.b16 %v929
      %v938 = vunpack.c.l.b16 %v930
      %v939 = vunpack.c.l.b16 %v931
      %v940 = vunpack.c.l.b16 %v932
      %v941 = vpack.c.b16 %v934, %v933
      %v942 = vpack.c.b16 %v936, %v935
      %v943 = vpack.c.b16 %v938, %v937
      %v944 = vpack.c.b16 %v940, %v939
      %vm945 = vcmp.ne.s16.totalorder %v941, 0
      %vm946 = vcmp.ne.s16.totalorder %v942, 0
      %vm947 = vcmp.ne.s16.totalorder %v943, 0
      %vm948 = vcmp.ne.s16.totalorder %v944, 0
      %v949 = vsel %vm945, %v486, 0
      %v950 = vsel %vm946, %v488, 0
      %v951 = vsel %vm947, %v489, 0
      %v952 = vsel %vm948, %v496, 0
      %vm953 = vmand %vm841, %vm589
      %vm954 = vmand %vm842, %vm590
      %vm955 = vmand %vm843, %vm591
      %vm956 = vmand %vm844, %vm592
      %vm957 = vmand %vm845, %vm593
      %vm958 = vmand %vm846, %vm594
      %vm959 = vmand %vm847, %vm595
      %vm960 = vmand %vm848, %vm596
      %vm961 = vmand %vm953, %vm605
      %vm962 = vmand %vm954, %vm606
      %vm963 = vmand %vm955, %vm607
      %vm964 = vmand %vm956, %vm608
      %vm965 = vmand %vm957, %vm609
      %vm966 = vmand %vm958, %vm610
      %vm967 = vmand %vm959, %vm611
      %vm968 = vmand %vm960, %vm612
      %vm969 = vmpackc.low %vm961, %vm961
      %vm970 = vmpackc.low %vm962, %vm962
      %vm971 = vmpackc.low %vm963, %vm963
      %vm972 = vmpackc.low %vm964, %vm964
      %vm973 = vmpackc.low %vm965, %vm965
      %vm974 = vmpackc.low %vm966, %vm966
      %vm975 = vmpackc.low %vm967, %vm967
      %vm976 = vmpackc.low %vm968, %vm968
      %v977 = vsel %vm969, 65537, 0
      %v978 = vsel %vm970, 65537, 0
      %v979 = vsel %vm971, 65537, 0
      %v980 = vsel %vm972, 65537, 0
      %v981 = vsel %vm973, 65537, 0
      %v982 = vsel %vm974, 65537, 0
      %v983 = vsel %vm975, 65537, 0
      %v984 = vsel %vm976, 65537, 0
      %v985 = vunpack.c.l.b16 %v977
      %v986 = vunpack.c.l.b16 %v978
      %v987 = vunpack.c.l.b16 %v979
      %v988 = vunpack.c.l.b16 %v980
      %v989 = vunpack.c.l.b16 %v981
      %v990 = vunpack.c.l.b16 %v982
      %v991 = vunpack.c.l.b16 %v983
      %v992 = vunpack.c.l.b16 %v984
      %v993 = vpack.c.b16 %v986, %v985
      %v994 = vpack.c.b16 %v988, %v987
      %v995 = vpack.c.b16 %v990, %v989
      %v996 = vpack.c.b16 %v992, %v991
      %vm997 = vcmp.ne.s16.totalorder %v993, 0
      %vm998 = vcmp.ne.s16.totalorder %v994, 0
      %vm999 = vcmp.ne.s16.totalorder %v995, 0
      %vm1000 = vcmp.ne.s16.totalorder %v996, 0
      %v1001 = vsel %vm997, %v577, 0
      %v1002 = vsel %vm998, %v581, 0
      %v1003 = vsel %vm999, %v582, 0
      %v1004 = vsel %vm1000, %v588, 0
      %v1005 = vld [vmem:[%s3] sm:$0xf]
      %v1006 = vld [vmem:[%s3 + $0x4] sm:$0xf]
      %v1007 = vld [vmem:[%s3 + $0x8] sm:$0xf]
      %v1008 = vld [vmem:[%s3 + $0xc] sm:$0xf]
      %v1009 = vld [vmem:[%s3 + $0x10] sm:$0xf]
      %v1010 = vld [vmem:[%s3 + $0x14] sm:$0xf]
      %v1011 = vld [vmem:[%s3 + $0x18] sm:$0xf]
      %v1012 = vld [vmem:[%s3 + $0x1c] sm:$0xf]
      %v1013 = vld [vmem:[%s3 + $0x20] sm:$0xf]
      %v1014 = vld [vmem:[%s3 + $0x24] sm:$0xf]
      %v1015 = vld [vmem:[%s3 + $0x28] sm:$0xf]
      %v1016 = vld [vmem:[%s3 + $0x2c] sm:$0xf]
      %v1017 = vld [vmem:[%s3 + $0x30] sm:$0xf]
      %v1018 = vld [vmem:[%s3 + $0x34] sm:$0xf]
      %v1019 = vld [vmem:[%s3 + $0x38] sm:$0xf]
      %v1020 = vld [vmem:[%s3 + $0x3c] sm:$0xf]
      %v1021 = vld [vmem:[%s3 + $0x40] sm:$0xf]
      %v1022 = vld [vmem:[%s3 + $0x44] sm:$0xf]
      %v1023 = vld [vmem:[%s3 + $0x48] sm:$0xf]
      %v1024 = vld [vmem:[%s3 + $0x4c] sm:$0xf]
      %v1025 = vld [vmem:[%s3 + $0x50] sm:$0xf]
      %v1026 = vld [vmem:[%s3 + $0x54] sm:$0xf]
      %v1027 = vld [vmem:[%s3 + $0x58] sm:$0xf]
      %v1028 = vld [vmem:[%s3 + $0x5c] sm:$0xf]
      %v1029 = vld [vmem:[%s3 + $0x60] sm:$0xf]
      %v1030 = vld [vmem:[%s3 + $0x64] sm:$0xf]
      %v1031 = vld [vmem:[%s3 + $0x68] sm:$0xf]
      %v1032 = vld [vmem:[%s3 + $0x6c] sm:$0xf]
      %v1033 = vld [vmem:[%s3 + $0x70] sm:$0xf]
      %v1034 = vld [vmem:[%s3 + $0x74] sm:$0xf]
      %v1035 = vld [vmem:[%s3 + $0x78] sm:$0xf]
      %v1036 = vld [vmem:[%s3 + $0x7c] sm:$0xf]
      %v1037 = vld [vmem:[%s3 + $0x80] sm:$0xf]
      %v1038 = vld [vmem:[%s3 + $0x84] sm:$0xf]
      %v1039 = vld [vmem:[%s3 + $0x88] sm:$0xf]
      %v1040 = vld [vmem:[%s3 + $0x8c] sm:$0xf]
      %v1041 = vld [vmem:[%s3 + $0x90] sm:$0xf]
      %v1042 = vld [vmem:[%s3 + $0x94] sm:$0xf]
      %v1043 = vld [vmem:[%s3 + $0x98] sm:$0xf]
      %v1044 = vld [vmem:[%s3 + $0x9c] sm:$0xf]
      %v1045 = vld [vmem:[%s3 + $0xa0] sm:$0xf]
      %v1046 = vld [vmem:[%s3 + $0xa4] sm:$0xf]
      %v1047 = vld [vmem:[%s3 + $0xa8] sm:$0xf]
      %v1048 = vld [vmem:[%s3 + $0xac] sm:$0xf]
      %v1049 = vld [vmem:[%s3 + $0xb0] sm:$0xf]
      %v1050 = vld [vmem:[%s3 + $0xb4] sm:$0xf]
      %v1051 = vld [vmem:[%s3 + $0xb8] sm:$0xf]
      %v1052 = vld [vmem:[%s3 + $0xbc] sm:$0xf]
      %v1053 = vld [vmem:[%s3 + $0xc0] sm:$0xf]
      %v1054 = vld [vmem:[%s3 + $0xc4] sm:$0xf]
      %v1055 = vld [vmem:[%s3 + $0xc8] sm:$0xf]
      %v1056 = vld [vmem:[%s3 + $0xcc] sm:$0xf]
      %v1057 = vld [vmem:[%s3 + $0xd0] sm:$0xf]
      %v1058 = vld [vmem:[%s3 + $0xd4] sm:$0xf]
      %v1059 = vld [vmem:[%s3 + $0xd8] sm:$0xf]
      %v1060 = vld [vmem:[%s3 + $0xdc] sm:$0xf]
      %v1061 = vld [vmem:[%s3 + $0xe0] sm:$0xf]
      %v1062 = vld [vmem:[%s3 + $0xe4] sm:$0xf]
      %v1063 = vld [vmem:[%s3 + $0xe8] sm:$0xf]
      %v1064 = vld [vmem:[%s3 + $0xec] sm:$0xf]
      %v1065 = vld [vmem:[%s3 + $0xf0] sm:$0xf]
      %v1066 = vld [vmem:[%s3 + $0xf4] sm:$0xf]
      %v1067 = vld [vmem:[%s3 + $0xf8] sm:$0xf]
      %v1068 = vld [vmem:[%s3 + $0xfc] sm:$0xf]
      %v1069 = vld [vmem:[%s3 + $0x100] sm:$0xf]
      %v1070 = vld [vmem:[%s3 + $0x104] sm:$0xf]
      %v1071 = vld [vmem:[%s3 + $0x108] sm:$0xf]
      %v1072 = vld [vmem:[%s3 + $0x10c] sm:$0xf]
      %v1073 = vld [vmem:[%s3 + $0x110] sm:$0xf]
      %v1074 = vld [vmem:[%s3 + $0x114] sm:$0xf]
      %v1075 = vld [vmem:[%s3 + $0x118] sm:$0xf]
      %v1076 = vld [vmem:[%s3 + $0x11c] sm:$0xf]
      %v1077 = vld [vmem:[%s3 + $0x120] sm:$0xf]
      %v1078 = vld [vmem:[%s3 + $0x124] sm:$0xf]
      %v1079 = vld [vmem:[%s3 + $0x128] sm:$0xf]
      %v1080 = vld [vmem:[%s3 + $0x12c] sm:$0xf]
      %v1081 = vld [vmem:[%s3 + $0x130] sm:$0xf]
      %v1082 = vld [vmem:[%s3 + $0x134] sm:$0xf]
      %v1083 = vld [vmem:[%s3 + $0x138] sm:$0xf]
      %v1084 = vld [vmem:[%s3 + $0x13c] sm:$0xf]
      %v1085 = vld [vmem:[%s3 + $0x140] sm:$0xf]
      %v1086 = vld [vmem:[%s3 + $0x144] sm:$0xf]
      %v1087 = vld [vmem:[%s3 + $0x148] sm:$0xf]
      %v1088 = vld [vmem:[%s3 + $0x14c] sm:$0xf]
      %v1089 = vld [vmem:[%s3 + $0x150] sm:$0xf]
      %v1090 = vld [vmem:[%s3 + $0x154] sm:$0xf]
      %v1091 = vld [vmem:[%s3 + $0x158] sm:$0xf]
      %v1092 = vld [vmem:[%s3 + $0x15c] sm:$0xf]
      %v1093 = vld [vmem:[%s3 + $0x160] sm:$0xf]
      %v1094 = vld [vmem:[%s3 + $0x164] sm:$0xf]
      %v1095 = vld [vmem:[%s3 + $0x168] sm:$0xf]
      %v1096 = vld [vmem:[%s3 + $0x16c] sm:$0xf]
      %v1097 = vld [vmem:[%s3 + $0x170] sm:$0xf]
      %v1098 = vld [vmem:[%s3 + $0x174] sm:$0xf]
      %v1099 = vld [vmem:[%s3 + $0x178] sm:$0xf]
      %v1100 = vld [vmem:[%s3 + $0x17c] sm:$0xf]
      %v1101 = vld [vmem:[%s3 + $0x180] sm:$0xf]
      %v1102 = vld [vmem:[%s3 + $0x184] sm:$0xf]
      %v1103 = vld [vmem:[%s3 + $0x188] sm:$0xf]
      %v1104 = vld [vmem:[%s3 + $0x18c] sm:$0xf]
      %v1105 = vld [vmem:[%s3 + $0x190] sm:$0xf]
      %v1106 = vld [vmem:[%s3 + $0x194] sm:$0xf]
      %v1107 = vld [vmem:[%s3 + $0x198] sm:$0xf]
      %v1108 = vld [vmem:[%s3 + $0x19c] sm:$0xf]
      %v1109 = vld [vmem:[%s3 + $0x1a0] sm:$0xf]
      %v1110 = vld [vmem:[%s3 + $0x1a4] sm:$0xf]
      %v1111 = vld [vmem:[%s3 + $0x1a8] sm:$0xf]
      %v1112 = vld [vmem:[%s3 + $0x1ac] sm:$0xf]
      %v1113 = vld [vmem:[%s3 + $0x1b0] sm:$0xf]
      %v1114 = vld [vmem:[%s3 + $0x1b4] sm:$0xf]
      %v1115 = vld [vmem:[%s3 + $0x1b8] sm:$0xf]
      %v1116 = vld [vmem:[%s3 + $0x1bc] sm:$0xf]
      %v1117 = vld [vmem:[%s3 + $0x1c0] sm:$0xf]
      %v1118 = vld [vmem:[%s3 + $0x1c4] sm:$0xf]
      %v1119 = vld [vmem:[%s3 + $0x1c8] sm:$0xf]
      %v1120 = vld [vmem:[%s3 + $0x1cc] sm:$0xf]
      %v1121 = vld [vmem:[%s3 + $0x1d0] sm:$0xf]
      %v1122 = vld [vmem:[%s3 + $0x1d4] sm:$0xf]
      %v1123 = vld [vmem:[%s3 + $0x1d8] sm:$0xf]
      %v1124 = vld [vmem:[%s3 + $0x1dc] sm:$0xf]
      %v1125 = vld [vmem:[%s3 + $0x1e0] sm:$0xf]
      %v1126 = vld [vmem:[%s3 + $0x1e4] sm:$0xf]
      %v1127 = vld [vmem:[%s3 + $0x1e8] sm:$0xf]
      %v1128 = vld [vmem:[%s3 + $0x1ec] sm:$0xf]
      %v1129 = vld [vmem:[%s3 + $0x1f0] sm:$0xf]
      %v1130 = vld [vmem:[%s3 + $0x1f4] sm:$0xf]
      %v1131 = vld [vmem:[%s3 + $0x1f8] sm:$0xf]
      %v1132 = vld [vmem:[%s3 + $0x1fc] sm:$0xf]
      %v1133 = vld [vmem:[%s3 + $0x200] sm:$0xf]
      %v1134 = vld [vmem:[%s3 + $0x204] sm:$0xf]
      %v1135 = vld [vmem:[%s3 + $0x208] sm:$0xf]
      %v1136 = vld [vmem:[%s3 + $0x20c] sm:$0xf]
      %v1137 = vld [vmem:[%s3 + $0x210] sm:$0xf]
      %v1138 = vld [vmem:[%s3 + $0x214] sm:$0xf]
      %v1139 = vld [vmem:[%s3 + $0x218] sm:$0xf]
      %v1140 = vld [vmem:[%s3 + $0x21c] sm:$0xf]
      %v1141 = vld [vmem:[%s3 + $0x220] sm:$0xf]
      %v1142 = vld [vmem:[%s3 + $0x224] sm:$0xf]
      %v1143 = vld [vmem:[%s3 + $0x228] sm:$0xf]
      %v1144 = vld [vmem:[%s3 + $0x22c] sm:$0xf]
      %v1145 = vld [vmem:[%s3 + $0x230] sm:$0xf]
      %v1146 = vld [vmem:[%s3 + $0x234] sm:$0xf]
      %v1147 = vld [vmem:[%s3 + $0x238] sm:$0xf]
      %v1148 = vld [vmem:[%s3 + $0x23c] sm:$0xf]
      %v1293 = vunpack.c.l.b16 %v1005
      %v1294 = vunpack.c.l.b16 %v1006
      %v1295 = vunpack.c.l.b16 %v1007
      %v1296 = vunpack.c.l.b16 %v1008
      %v1297 = vunpack.c.l.b16 %v1009
      %v1298 = vunpack.c.l.b16 %v1010
      %v1299 = vunpack.c.l.b16 %v1011
      %v1300 = vunpack.c.l.b16 %v1012
      %v1301 = vunpack.c.l.b16 %v1013
      %v1302 = vunpack.c.l.b16 %v1014
      %v1303 = vunpack.c.l.b16 %v1015
      %v1304 = vunpack.c.l.b16 %v1016
      %v1305 = vunpack.c.l.b16 %v1017
      %v1306 = vunpack.c.l.b16 %v1018
      %v1307 = vunpack.c.l.b16 %v1019
      %v1308 = vunpack.c.l.b16 %v1020
      %v1309 = vunpack.c.l.b16 %v1021
      %v1310 = vunpack.c.l.b16 %v1022
      %v1311 = vunpack.c.l.b16 %v1023
      %v1312 = vunpack.c.l.b16 %v1024
      %v1313 = vunpack.c.l.b16 %v1025
      %v1314 = vunpack.c.l.b16 %v1026
      %v1315 = vunpack.c.l.b16 %v1027
      %v1316 = vunpack.c.l.b16 %v1028
      %v1317 = vunpack.c.l.b16 %v1029
      %v1318 = vunpack.c.l.b16 %v1030
      %v1319 = vunpack.c.l.b16 %v1031
      %v1320 = vunpack.c.l.b16 %v1032
      %v1321 = vunpack.c.l.b16 %v1033
      %v1322 = vunpack.c.l.b16 %v1034
      %v1323 = vunpack.c.l.b16 %v1035
      %v1324 = vunpack.c.l.b16 %v1036
      %v1325 = vunpack.c.l.b16 %v1037
      %v1326 = vunpack.c.l.b16 %v1038
      %v1327 = vunpack.c.l.b16 %v1039
      %v1328 = vunpack.c.l.b16 %v1040
      %v1329 = vunpack.c.l.b16 %v1041
      %v1330 = vunpack.c.l.b16 %v1042
      %v1331 = vunpack.c.l.b16 %v1043
      %v1332 = vunpack.c.l.b16 %v1044
      %v1333 = vunpack.c.l.b16 %v1045
      %v1334 = vunpack.c.l.b16 %v1046
      %v1335 = vunpack.c.l.b16 %v1047
      %v1336 = vunpack.c.l.b16 %v1048
      %v1337 = vunpack.c.l.b16 %v1049
      %v1338 = vunpack.c.l.b16 %v1050
      %v1339 = vunpack.c.l.b16 %v1051
      %v1340 = vunpack.c.l.b16 %v1052
      %v1341 = vunpack.c.l.b16 %v1053
      %v1342 = vunpack.c.l.b16 %v1054
      %v1343 = vunpack.c.l.b16 %v1055
      %v1344 = vunpack.c.l.b16 %v1056
      %v1345 = vunpack.c.l.b16 %v1057
      %v1346 = vunpack.c.l.b16 %v1058
      %v1347 = vunpack.c.l.b16 %v1059
      %v1348 = vunpack.c.l.b16 %v1060
      %v1349 = vunpack.c.l.b16 %v1061
      %v1350 = vunpack.c.l.b16 %v1062
      %v1351 = vunpack.c.l.b16 %v1063
      %v1352 = vunpack.c.l.b16 %v1064
      %v1353 = vunpack.c.l.b16 %v1065
      %v1354 = vunpack.c.l.b16 %v1066
      %v1355 = vunpack.c.l.b16 %v1067
      %v1356 = vunpack.c.l.b16 %v1068
      %v1357 = vunpack.c.l.b16 %v1069
      %v1358 = vunpack.c.l.b16 %v1070
      %v1359 = vunpack.c.l.b16 %v1071
      %v1360 = vunpack.c.l.b16 %v1072
      %v1361 = vunpack.c.l.b16 %v1073
      %v1362 = vunpack.c.l.b16 %v1074
      %v1363 = vunpack.c.l.b16 %v1075
      %v1364 = vunpack.c.l.b16 %v1076
      %v1365 = vunpack.c.l.b16 %v1077
      %v1366 = vunpack.c.l.b16 %v1078
      %v1367 = vunpack.c.l.b16 %v1079
      %v1368 = vunpack.c.l.b16 %v1080
      %v1369 = vunpack.c.l.b16 %v1081
      %v1370 = vunpack.c.l.b16 %v1082
      %v1371 = vunpack.c.l.b16 %v1083
      %v1372 = vunpack.c.l.b16 %v1084
      %v1373 = vunpack.c.l.b16 %v1085
      %v1374 = vunpack.c.l.b16 %v1086
      %v1375 = vunpack.c.l.b16 %v1087
      %v1376 = vunpack.c.l.b16 %v1088
      %v1377 = vunpack.c.l.b16 %v1089
      %v1378 = vunpack.c.l.b16 %v1090
      %v1379 = vunpack.c.l.b16 %v1091
      %v1380 = vunpack.c.l.b16 %v1092
      %v1381 = vunpack.c.l.b16 %v1093
      %v1382 = vunpack.c.l.b16 %v1094
      %v1383 = vunpack.c.l.b16 %v1095
      %v1384 = vunpack.c.l.b16 %v1096
      %v1385 = vunpack.c.l.b16 %v1097
      %v1386 = vunpack.c.l.b16 %v1098
      %v1387 = vunpack.c.l.b16 %v1099
      %v1388 = vunpack.c.l.b16 %v1100
      %v1389 = vunpack.c.l.b16 %v1101
      %v1390 = vunpack.c.l.b16 %v1102
      %v1391 = vunpack.c.l.b16 %v1103
      %v1392 = vunpack.c.l.b16 %v1104
      %v1393 = vunpack.c.l.b16 %v1105
      %v1394 = vunpack.c.l.b16 %v1106
      %v1395 = vunpack.c.l.b16 %v1107
      %v1396 = vunpack.c.l.b16 %v1108
      %v1397 = vunpack.c.l.b16 %v1109
      %v1398 = vunpack.c.l.b16 %v1110
      %v1399 = vunpack.c.l.b16 %v1111
      %v1400 = vunpack.c.l.b16 %v1112
      %v1401 = vunpack.c.l.b16 %v1113
      %v1402 = vunpack.c.l.b16 %v1114
      %v1403 = vunpack.c.l.b16 %v1115
      %v1404 = vunpack.c.l.b16 %v1116
      %v1405 = vunpack.c.l.b16 %v1117
      %v1406 = vunpack.c.l.b16 %v1118
      %v1407 = vunpack.c.l.b16 %v1119
      %v1408 = vunpack.c.l.b16 %v1120
      %v1409 = vunpack.c.l.b16 %v1121
      %v1410 = vunpack.c.l.b16 %v1122
      %v1411 = vunpack.c.l.b16 %v1123
      %v1412 = vunpack.c.l.b16 %v1124
      %v1413 = vunpack.c.l.b16 %v1125
      %v1414 = vunpack.c.l.b16 %v1126
      %v1415 = vunpack.c.l.b16 %v1127
      %v1416 = vunpack.c.l.b16 %v1128
      %v1417 = vunpack.c.l.b16 %v1129
      %v1418 = vunpack.c.l.b16 %v1130
      %v1419 = vunpack.c.l.b16 %v1131
      %v1420 = vunpack.c.l.b16 %v1132
      %v1421 = vunpack.c.l.b16 %v1133
      %v1422 = vunpack.c.l.b16 %v1134
      %v1423 = vunpack.c.l.b16 %v1135
      %v1424 = vunpack.c.l.b16 %v1136
      %v1425 = vunpack.c.l.b16 %v1137
      %v1426 = vunpack.c.l.b16 %v1138
      %v1427 = vunpack.c.l.b16 %v1139
      %v1428 = vunpack.c.l.b16 %v1140
      %v1429 = vunpack.c.l.b16 %v1141
      %v1430 = vunpack.c.l.b16 %v1142
      %v1431 = vunpack.c.l.b16 %v1143
      %v1432 = vunpack.c.l.b16 %v1144
      %v1433 = vunpack.c.l.b16 %v1145
      %v1434 = vunpack.c.l.b16 %v1146
      %v1435 = vunpack.c.l.b16 %v1147
      %v1436 = vunpack.c.l.b16 %v1148
      %v1437 = vpack.c.b16 %v1294, %v1293
      %v1438 = vpack.c.b16 %v1296, %v1295
      %v1439 = vpack.c.b16 %v1298, %v1297
      %v1440 = vpack.c.b16 %v1300, %v1299
      %v1441 = vpack.c.b16 %v1302, %v1301
      %v1442 = vpack.c.b16 %v1304, %v1303
      %v1443 = vpack.c.b16 %v1306, %v1305
      %v1444 = vpack.c.b16 %v1308, %v1307
      %v1445 = vpack.c.b16 %v1310, %v1309
      %v1446 = vpack.c.b16 %v1312, %v1311
      %v1447 = vpack.c.b16 %v1314, %v1313
      %v1448 = vpack.c.b16 %v1316, %v1315
      %v1449 = vpack.c.b16 %v1318, %v1317
      %v1450 = vpack.c.b16 %v1320, %v1319
      %v1451 = vpack.c.b16 %v1322, %v1321
      %v1452 = vpack.c.b16 %v1324, %v1323
      %v1453 = vpack.c.b16 %v1326, %v1325
      %v1454 = vpack.c.b16 %v1328, %v1327
      %v1455 = vpack.c.b16 %v1330, %v1329
      %v1456 = vpack.c.b16 %v1332, %v1331
      %v1457 = vpack.c.b16 %v1334, %v1333
      %v1458 = vpack.c.b16 %v1336, %v1335
      %v1459 = vpack.c.b16 %v1338, %v1337
      %v1460 = vpack.c.b16 %v1340, %v1339
      %v1461 = vpack.c.b16 %v1342, %v1341
      %v1462 = vpack.c.b16 %v1344, %v1343
      %v1463 = vpack.c.b16 %v1346, %v1345
      %v1464 = vpack.c.b16 %v1348, %v1347
      %v1465 = vpack.c.b16 %v1350, %v1349
      %v1466 = vpack.c.b16 %v1352, %v1351
      %v1467 = vpack.c.b16 %v1354, %v1353
      %v1468 = vpack.c.b16 %v1356, %v1355
      %v1469 = vpack.c.b16 %v1358, %v1357
      %v1470 = vpack.c.b16 %v1360, %v1359
      %v1471 = vpack.c.b16 %v1362, %v1361
      %v1472 = vpack.c.b16 %v1364, %v1363
      %v1473 = vpack.c.b16 %v1366, %v1365
      %v1474 = vpack.c.b16 %v1368, %v1367
      %v1475 = vpack.c.b16 %v1370, %v1369
      %v1476 = vpack.c.b16 %v1372, %v1371
      %v1477 = vpack.c.b16 %v1374, %v1373
      %v1478 = vpack.c.b16 %v1376, %v1375
      %v1479 = vpack.c.b16 %v1378, %v1377
      %v1480 = vpack.c.b16 %v1380, %v1379
      %v1481 = vpack.c.b16 %v1382, %v1381
      %v1482 = vpack.c.b16 %v1384, %v1383
      %v1483 = vpack.c.b16 %v1386, %v1385
      %v1484 = vpack.c.b16 %v1388, %v1387
      %v1485 = vpack.c.b16 %v1390, %v1389
      %v1486 = vpack.c.b16 %v1392, %v1391
      %v1487 = vpack.c.b16 %v1394, %v1393
      %v1488 = vpack.c.b16 %v1396, %v1395
      %v1489 = vpack.c.b16 %v1398, %v1397
      %v1490 = vpack.c.b16 %v1400, %v1399
      %v1491 = vpack.c.b16 %v1402, %v1401
      %v1492 = vpack.c.b16 %v1404, %v1403
      %v1493 = vpack.c.b16 %v1406, %v1405
      %v1494 = vpack.c.b16 %v1408, %v1407
      %v1495 = vpack.c.b16 %v1410, %v1409
      %v1496 = vpack.c.b16 %v1412, %v1411
      %v1497 = vpack.c.b16 %v1414, %v1413
      %v1498 = vpack.c.b16 %v1416, %v1415
      %v1499 = vpack.c.b16 %v1418, %v1417
      %v1500 = vpack.c.b16 %v1420, %v1419
      %v1501 = vpack.c.b16 %v1422, %v1421
      %v1502 = vpack.c.b16 %v1424, %v1423
      %v1503 = vpack.c.b16 %v1426, %v1425
      %v1504 = vpack.c.b16 %v1428, %v1427
      %v1505 = vpack.c.b16 %v1430, %v1429
      %v1506 = vpack.c.b16 %v1432, %v1431
      %v1507 = vpack.c.b16 %v1434, %v1433
      %v1508 = vpack.c.b16 %v1436, %v1435
      %1581 = vmatprep.subr.bf16.mxu0 0
      %1582 = vmatpush1.bf16.msra.mxu0 %v1437
      %1583 = vmatprep.subr.bf16.mxu0 0
      %1584 = vmatpush1.bf16.msra.mxu0 %v1438
      %1585 = vmatprep.subr.bf16.mxu0 0
      %1586 = vmatpush1.bf16.msra.mxu0 %v1439
      %1587 = vmatprep.subr.bf16.mxu0 0
      %1588 = vmatpush1.bf16.msra.mxu0 %v1440
      %1589 = vmatprep.subr.bf16.mxu0 0
      %1590 = vmatpush1.bf16.msra.mxu0 %v1441
      %1591 = vmatprep.subr.bf16.mxu0 0
      %1592 = vmatpush1.bf16.msra.mxu0 %v1442
      %1593 = vmatprep.subr.bf16.mxu0 0
      %1594 = vmatpush1.bf16.msra.mxu0 %v1443
      %1595 = vmatprep.subr.bf16.mxu0 0
      %1596 = vmatpush1.bf16.msra.mxu0 %v1444
      %1597 = vmatprep.subr.bf16.mxu0 0
      %1598 = vmatpush1.bf16.msra.mxu0 %v1445
      %1599 = vmatprep.subr.bf16.mxu0 0
      %1600 = vmatpush1.bf16.msra.mxu0 %v1446
      %1601 = vmatprep.subr.bf16.mxu0 0
      %1602 = vmatpush1.bf16.msra.mxu0 %v1447
      %1603 = vmatprep.subr.bf16.mxu0 0
      %1604 = vmatpush1.bf16.msra.mxu0 %v1448
      %1605 = vmatprep.subr.bf16.mxu0 0
      %1606 = vmatpush1.bf16.msra.mxu0 %v1449
      %1607 = vmatprep.subr.bf16.mxu0 0
      %1608 = vmatpush1.bf16.msra.mxu0 %v1450
      %1609 = vmatprep.subr.bf16.mxu0 0
      %1610 = vmatpush1.bf16.msra.mxu0 %v1451
      %1611 = vmatprep.subr.bf16.mxu0 0
      %1612 = vmatpush1.bf16.msra.mxu0 %v1452
      %1613 = vmatprep.mubr.bf16.mxu0 %v562
      %1614 = vmatmul.mubr.bf16.gmra.mrb[0].mxu0 %v474
      %v1615 = vpop.f32.mrb[0].mxu0
      %v1616 = vadd.f32 0.0, %v1615
      %v1617 = vpop.f32.mrb[0].mxu0
      %v1618 = vpop.f32.mrb[0].mxu0
      %v1619 = vadd.f32 0.0, %v1618
      %v1620 = vpop.f32.mrb[0].mxu0
      %1621 = vmatprep.mubr.bf16.mxu0 %v563
      %1622 = vmatmul.mubr.bf16.gmra.mrb[0].mxu0 %v475
      %v1623 = vpop.f32.mrb[0].mxu0
      %v1624 = vadd.f32 0.0, %v1623
      %v1625 = vpop.f32.mrb[0].mxu0
      %v1626 = vpop.f32.mrb[0].mxu0
      %v1627 = vadd.f32 0.0, %v1626
      %v1628 = vpop.f32.mrb[0].mxu0
      %1629 = vmatprep.mubr.bf16.mxu0 %v564
      %1630 = vmatmul.mubr.bf16.gmra.mrb[0].mxu0 %v476
      %v1631 = vpop.f32.mrb[0].mxu0
      %v1632 = vadd.f32 0.0, %v1631
      %v1633 = vpop.f32.mrb[0].mxu0
      %v1634 = vpop.f32.mrb[0].mxu0
      %v1635 = vadd.f32 0.0, %v1634
      %v1636 = vpop.f32.mrb[0].mxu0
      %1637 = vmatprep.mubr.bf16.mxu0 %v565
      %1638 = vmatmul.mubr.bf16.gmra.mrb[0].mxu0 %v477
      %v1639 = vpop.f32.mrb[0].mxu0
      %v1640 = vadd.f32 0.0, %v1639
      %v1641 = vpop.f32.mrb[0].mxu0
      %v1642 = vpop.f32.mrb[0].mxu0
      %v1643 = vadd.f32 0.0, %v1642
      %v1644 = vpop.f32.mrb[0].mxu0
      %1645 = vdwg.mxu0
      %1646 = vmatprep.subr.bf16.mxu0 0
      %1647 = vmatpush1.bf16.msra.mxu0 %v1453
      %1648 = vmatprep.subr.bf16.mxu0 0
      %1649 = vmatpush1.bf16.msra.mxu0 %v1454
      %1650 = vmatprep.subr.bf16.mxu0 0
      %1651 = vmatpush1.bf16.msra.mxu0 %v1455
      %1652 = vmatprep.subr.bf16.mxu0 0
      %1653 = vmatpush1.bf16.msra.mxu0 %v1456
      %1654 = vmatprep.subr.bf16.mxu0 0
      %1655 = vmatpush1.bf16.msra.mxu0 %v1457
      %1656 = vmatprep.subr.bf16.mxu0 0
      %1657 = vmatpush1.bf16.msra.mxu0 %v1458
      %1658 = vmatprep.subr.bf16.mxu0 0
      %1659 = vmatpush1.bf16.msra.mxu0 %v1459
      %1660 = vmatprep.subr.bf16.mxu0 0
      %1661 = vmatpush1.bf16.msra.mxu0 %v1460
      %1662 = vmatprep.subr.bf16.mxu0 0
      %1663 = vmatpush1.bf16.msra.mxu0 %v1461
      %1664 = vmatprep.subr.bf16.mxu0 0
      %1665 = vmatpush1.bf16.msra.mxu0 %v1462
      %1666 = vmatprep.subr.bf16.mxu0 0
      %1667 = vmatpush1.bf16.msra.mxu0 %v1463
      %1668 = vmatprep.subr.bf16.mxu0 0
      %1669 = vmatpush1.bf16.msra.mxu0 %v1464
      %1670 = vmatprep.subr.bf16.mxu0 0
      %1671 = vmatpush1.bf16.msra.mxu0 %v1465
      %1672 = vmatprep.subr.bf16.mxu0 0
      %1673 = vmatpush1.bf16.msra.mxu0 %v1466
      %1674 = vmatprep.subr.bf16.mxu0 0
      %1675 = vmatpush1.bf16.msra.mxu0 %v1467
      %1676 = vmatprep.subr.bf16.mxu0 0
      %1677 = vmatpush1.bf16.msra.mxu0 %v1468
      %1678 = vmatprep.mubr.bf16.mxu0 %v749
      %1679 = vmatmul.mubr.bf16.gmra.mrb[0].mxu0 %v653
      %v1680 = vpop.f32.mrb[0].mxu0
      %v1681 = vadd.f32 %v1616, %v1680
      %v1682 = vpop.f32.mrb[0].mxu0
      %v1683 = vpop.f32.mrb[0].mxu0
      %v1684 = vadd.f32 %v1619, %v1683
      %v1685 = vpop.f32.mrb[0].mxu0
      %1686 = vmatprep.mubr.bf16.mxu0 %v750
      %1687 = vmatmul.mubr.bf16.gmra.mrb[0].mxu0 %v654
      %v1688 = vpop.f32.mrb[0].mxu0
      %v1689 = vadd.f32 %v1624, %v1688
      %v1690 = vpop.f32.mrb[0].mxu0
      %v1691 = vpop.f32.mrb[0].mxu0
      %v1692 = vadd.f32 %v1627, %v1691
      %v1693 = vpop.f32.mrb[0].mxu0
      %1694 = vmatprep.mubr.bf16.mxu0 %v751
      %1695 = vmatmul.mubr.bf16.gmra.mrb[0].mxu0 %v655
      %v1696 = vpop.f32.mrb[0].mxu0
      %v1697 = vadd.f32 %v1632, %v1696
      %v1698 = vpop.f32.mrb[0].mxu0
      %v1699 = vpop.f32.mrb[0].mxu0
      %v1700 = vadd.f32 %v1635, %v1699
      %v1701 = vpop.f32.mrb[0].mxu0
      %1702 = vmatprep.mubr.bf16.mxu0 %v752
      %1703 = vmatmul.mubr.bf16.gmra.mrb[0].mxu0 %v656
      %v1704 = vpop.f32.mrb[0].mxu0
      %v1705 = vadd.f32 %v1640, %v1704
      %v1706 = vpop.f32.mrb[0].mxu0
      %v1707 = vpop.f32.mrb[0].mxu0
      %v1708 = vadd.f32 %v1643, %v1707
      %v1709 = vpop.f32.mrb[0].mxu0
      %1710 = vdwg.mxu0
      %1711 = vmatprep.subr.bf16.mxu0 0
      %1712 = vmatpush1.bf16.msra.mxu0 %v1469
      %1713 = vmatprep.subr.bf16.mxu0 0
      %1714 = vmatpush1.bf16.msra.mxu0 %v1470
      %1715 = vmatprep.subr.bf16.mxu0 0
      %1716 = vmatpush1.bf16.msra.mxu0 %v1471
      %1717 = vmatprep.subr.bf16.mxu0 0
      %1718 = vmatpush1.bf16.msra.mxu0 %v1472
      %1719 = vmatprep.subr.bf16.mxu0 0
      %1720 = vmatpush1.bf16.msra.mxu0 %v1473
      %1721 = vmatprep.subr.bf16.mxu0 0
      %1722 = vmatpush1.bf16.msra.mxu0 %v1474
      %1723 = vmatprep.subr.bf16.mxu0 0
      %1724 = vmatpush1.bf16.msra.mxu0 %v1475
      %1725 = vmatprep.subr.bf16.mxu0 0
      %1726 = vmatpush1.bf16.msra.mxu0 %v1476
      %1727 = vmatprep.subr.bf16.mxu0 0
      %1728 = vmatpush1.bf16.msra.mxu0 %v1477
      %1729 = vmatprep.subr.bf16.mxu0 0
      %1730 = vmatpush1.bf16.msra.mxu0 %v1478
      %1731 = vmatprep.subr.bf16.mxu0 0
      %1732 = vmatpush1.bf16.msra.mxu0 %v1479
      %1733 = vmatprep.subr.bf16.mxu0 0
      %1734 = vmatpush1.bf16.msra.mxu0 %v1480
      %1735 = vmatprep.subr.bf16.mxu0 0
      %1736 = vmatpush1.bf16.msra.mxu0 %v1481
      %1737 = vmatprep.subr.bf16.mxu0 0
      %1738 = vmatpush1.bf16.msra.mxu0 %v1482
      %1739 = vmatprep.subr.bf16.mxu0 0
      %1740 = vmatpush1.bf16.msra.mxu0 %v1483
      %1741 = vmatprep.subr.bf16.mxu0 0
      %1742 = vmatpush1.bf16.msra.mxu0 %v1484
      %1743 = vmatprep.mubr.bf16.mxu0 %v821
      %1744 = vmatmul.mubr.bf16.gmra.mrb[0].mxu0 %v305
      %v1745 = vpop.f32.mrb[0].mxu0
      %v1746 = vadd.f32 %v1681, %v1745
      %v1747 = vpop.f32.mrb[0].mxu0
      %v1748 = vpop.f32.mrb[0].mxu0
      %v1749 = vadd.f32 %v1684, %v1748
      %v1750 = vpop.f32.mrb[0].mxu0
      %1751 = vmatprep.mubr.bf16.mxu0 %v822
      %1752 = vmatmul.mubr.bf16.gmra.mrb[0].mxu0 %v306
      %v1753 = vpop.f32.mrb[0].mxu0
      %v1754 = vadd.f32 %v1689, %v1753
      %v1755 = vpop.f32.mrb[0].mxu0
      %v1756 = vpop.f32.mrb[0].mxu0
      %v1757 = vadd.f32 %v1692, %v1756
      %v1758 = vpop.f32.mrb[0].mxu0
      %1759 = vmatprep.mubr.bf16.mxu0 %v823
      %1760 = vmatmul.mubr.bf16.gmra.mrb[0].mxu0 %v307
      %v1761 = vpop.f32.mrb[0].mxu0
      %v1762 = vadd.f32 %v1697, %v1761
      %v1763 = vpop.f32.mrb[0].mxu0
      %v1764 = vpop.f32.mrb[0].mxu0
      %v1765 = vadd.f32 %v1700, %v1764
      %v1766 = vpop.f32.mrb[0].mxu0
      %1767 = vmatprep.mubr.bf16.mxu0 %v824
      %1768 = vmatmul.mubr.bf16.gmra.mrb[0].mxu0 %v308
      %v1769 = vpop.f32.mrb[0].mxu0
      %v1770 = vadd.f32 %v1705, %v1769
      %v1771 = vpop.f32.mrb[0].mxu0
      %v1772 = vpop.f32.mrb[0].mxu0
      %v1773 = vadd.f32 %v1708, %v1772
      %v1774 = vpop.f32.mrb[0].mxu0
      %1775 = vdwg.mxu0
      %1776 = vmatprep.subr.bf16.mxu0 0
      %1777 = vmatpush1.bf16.msra.mxu0 %v1485
      %1778 = vmatprep.subr.bf16.mxu0 0
      %1779 = vmatpush1.bf16.msra.mxu0 %v1486
      %1780 = vmatprep.subr.bf16.mxu0 0
      %1781 = vmatpush1.bf16.msra.mxu0 %v1487
      %1782 = vmatprep.subr.bf16.mxu0 0
      %1783 = vmatpush1.bf16.msra.mxu0 %v1488
      %1784 = vmatprep.subr.bf16.mxu0 0
      %1785 = vmatpush1.bf16.msra.mxu0 %v1489
      %1786 = vmatprep.subr.bf16.mxu0 0
      %1787 = vmatpush1.bf16.msra.mxu0 %v1490
      %1788 = vmatprep.subr.bf16.mxu0 0
      %1789 = vmatpush1.bf16.msra.mxu0 %v1491
      %1790 = vmatprep.subr.bf16.mxu0 0
      %1791 = vmatpush1.bf16.msra.mxu0 %v1492
      %1792 = vmatprep.subr.bf16.mxu0 0
      %1793 = vmatpush1.bf16.msra.mxu0 %v1493
      %1794 = vmatprep.subr.bf16.mxu0 0
      %1795 = vmatpush1.bf16.msra.mxu0 %v1494
      %1796 = vmatprep.subr.bf16.mxu0 0
      %1797 = vmatpush1.bf16.msra.mxu0 %v1495
      %1798 = vmatprep.subr.bf16.mxu0 0
      %1799 = vmatpush1.bf16.msra.mxu0 %v1496
      %1800 = vmatprep.subr.bf16.mxu0 0
      %1801 = vmatpush1.bf16.msra.mxu0 %v1497
      %1802 = vmatprep.subr.bf16.mxu0 0
      %1803 = vmatpush1.bf16.msra.mxu0 %v1498
      %1804 = vmatprep.subr.bf16.mxu0 0
      %1805 = vmatpush1.bf16.msra.mxu0 %v1499
      %1806 = vmatprep.subr.bf16.mxu0 0
      %1807 = vmatpush1.bf16.msra.mxu0 %v1500
      %1808 = vmatprep.mubr.bf16.mxu0 %v949
      %1809 = vmatmul.mubr.bf16.gmra.mrb[0].mxu0 %v897
      %v1810 = vpop.f32.mrb[0].mxu0
      %v1811 = vadd.f32 %v1746, %v1810
      %v1812 = vpop.f32.mrb[0].mxu0
      %v1813 = vpop.f32.mrb[0].mxu0
      %v1814 = vadd.f32 %v1749, %v1813
      %v1815 = vpop.f32.mrb[0].mxu0
      %1816 = vmatprep.mubr.bf16.mxu0 %v950
      %1817 = vmatmul.mubr.bf16.gmra.mrb[0].mxu0 %v898
      %v1818 = vpop.f32.mrb[0].mxu0
      %v1819 = vadd.f32 %v1754, %v1818
      %v1820 = vpop.f32.mrb[0].mxu0
      %v1821 = vpop.f32.mrb[0].mxu0
      %v1822 = vadd.f32 %v1757, %v1821
      %v1823 = vpop.f32.mrb[0].mxu0
      %1824 = vmatprep.mubr.bf16.mxu0 %v951
      %1825 = vmatmul.mubr.bf16.gmra.mrb[0].mxu0 %v899
      %v1826 = vpop.f32.mrb[0].mxu0
      %v1827 = vadd.f32 %v1762, %v1826
      %v1828 = vpop.f32.mrb[0].mxu0
      %v1829 = vpop.f32.mrb[0].mxu0
      %v1830 = vadd.f32 %v1765, %v1829
      %v1831 = vpop.f32.mrb[0].mxu0
      %1832 = vmatprep.mubr.bf16.mxu0 %v952
      %1833 = vmatmul.mubr.bf16.gmra.mrb[0].mxu0 %v900
      %v1834 = vpop.f32.mrb[0].mxu0
      %v1835 = vadd.f32 %v1770, %v1834
      %v1836 = vpop.f32.mrb[0].mxu0
      %v1837 = vpop.f32.mrb[0].mxu0
      %v1838 = vadd.f32 %v1773, %v1837
      %v1839 = vpop.f32.mrb[0].mxu0
      %1840 = vdwg.mxu0
      %1841 = vmatprep.subr.bf16.mxu0 0
      %1842 = vmatpush1.bf16.msra.mxu0 %v1501
      %1843 = vmatprep.subr.bf16.mxu0 0
      %1844 = vmatpush1.bf16.msra.mxu0 %v1502
      %1845 = vmatprep.subr.bf16.mxu0 0
      %1846 = vmatpush1.bf16.msra.mxu0 %v1503
      %1847 = vmatprep.subr.bf16.mxu0 0
      %1848 = vmatpush1.bf16.msra.mxu0 %v1504
      %1849 = vmatprep.subr.bf16.mxu0 0
      %1850 = vmatpush1.bf16.msra.mxu0 %v1505
      %1851 = vmatprep.subr.bf16.mxu0 0
      %1852 = vmatpush1.bf16.msra.mxu0 %v1506
      %1853 = vmatprep.subr.bf16.mxu0 0
      %1854 = vmatpush1.bf16.msra.mxu0 %v1507
      %1855 = vmatprep.subr.bf16.mxu0 0
      %1856 = vmatpush1.bf16.msra.mxu0 %v1508
      %1857 = vmatprep.subr.bf16.mxu0 0
      %1858 = vmatpush1.bf16.msra.mxu0 0
      %1859 = vmatprep.subr.bf16.mxu0 0
      %1860 = vmatpush1.bf16.msra.mxu0 0
      %1861 = vmatprep.subr.bf16.mxu0 0
      %1862 = vmatpush1.bf16.msra.mxu0 0
      %1863 = vmatprep.subr.bf16.mxu0 0
      %1864 = vmatpush1.bf16.msra.mxu0 0
      %1865 = vmatprep.subr.bf16.mxu0 0
      %1866 = vmatpush1.bf16.msra.mxu0 0
      %1867 = vmatprep.subr.bf16.mxu0 0
      %1868 = vmatpush1.bf16.msra.mxu0 0
      %1869 = vmatprep.subr.bf16.mxu0 0
      %1870 = vmatpush1.bf16.msra.mxu0 0
      %1871 = vmatprep.subr.bf16.mxu0 0
      %1872 = vmatpush1.bf16.msra.mxu0 0
      %1873 = vmatprep.mubr.bf16.mxu0 0
      %1874 = vmatmul.mubr.bf16.gmra.mrb[0].mxu0 %v1001
      %v1875 = vpop.f32.mrb[0].mxu0
      %v1876 = vadd.f32 %v1811, %v1875
      %v1877 = vpop.f32.mrb[0].mxu0
      %v1878 = vpop.f32.mrb[0].mxu0
      %v1879 = vadd.f32 %v1814, %v1878
      %v1880 = vpop.f32.mrb[0].mxu0
      %1881 = vmatprep.mubr.bf16.mxu0 0
      %1882 = vmatmul.mubr.bf16.gmra.mrb[0].mxu0 %v1002
      %v1883 = vpop.f32.mrb[0].mxu0
      %v1884 = vadd.f32 %v1819, %v1883
      %v1885 = vpop.f32.mrb[0].mxu0
      %v1886 = vpop.f32.mrb[0].mxu0
      %v1887 = vadd.f32 %v1822, %v1886
      %v1888 = vpop.f32.mrb[0].mxu0
      %1889 = vmatprep.mubr.bf16.mxu0 0
      %1890 = vmatmul.mubr.bf16.gmra.mrb[0].mxu0 %v1003
      %v1891 = vpop.f32.mrb[0].mxu0
      %v1892 = vadd.f32 %v1827, %v1891
      %v1893 = vpop.f32.mrb[0].mxu0
      %v1894 = vpop.f32.mrb[0].mxu0
      %v1895 = vadd.f32 %v1830, %v1894
      %v1896 = vpop.f32.mrb[0].mxu0
      %1897 = vmatprep.mubr.bf16.mxu0 0
      %1898 = vmatmul.mubr.bf16.gmra.mrb[0].mxu0 %v1004
      %v1899 = vpop.f32.mrb[0].mxu0
      %v1900 = vadd.f32 %v1835, %v1899
      %v1901 = vpop.f32.mrb[0].mxu0
      %v1902 = vpop.f32.mrb[0].mxu0
      %v1903 = vadd.f32 %v1838, %v1902
      %v1904 = vpop.f32.mrb[0].mxu0
      %1905 = vdwg.mxu0
      %1906 = vst [vmem:[%s224] sm:$0xff] %v1876
      %1907 = vst [vmem:[%s224 + $0x8] sm:$0xff] %v1879
      %1908 = vst [vmem:[%s224 + $0x10] sm:$0xff] %v1884
      %1909 = vst [vmem:[%s224 + $0x18] sm:$0xff] %v1887
      %1910 = vst [vmem:[%s224 + $0x20] sm:$0xff] %v1892
      %1911 = vst [vmem:[%s224 + $0x28] sm:$0xff] %v1895
      %1912 = vst [vmem:[%s224 + $0x30] sm:$0xff] %v1900
      %1913 = vst [vmem:[%s224 + $0x38] sm:$0xff] %v1903
      %p1914 = scmp.eq.s32.totalorder %s17, 0
      // Predicated region
      $region37: #{_lambda_.5} parent=35 // pred_check
        %p1915 = pneg %p1914
      $region38: #{_lambda_.5} parent=35 // pred_check_branch
        %1917 = sbr.rel (%p1915) target = $region40
      $region39: #{_lambda_.5} parent=35 // pred_region
        %1918 = vst [vmem:[%s5] sm:$0x3] 0.0
      $region40: #{_lambda_.5} parent=35 // pred_fallthru
        _
      %v1919 = vld [vmem:[%s5] sm:$0x3]
      %v1920 = vadd.f32 %v1876, %v1879
      %v1921 = vadd.f32 %v1920, %v1884
      %v1922 = vadd.f32 %v1921, %v1887
      %v1923 = vadd.f32 %v1922, %v1892
      %v1924 = vadd.f32 %v1923, %v1895
      %v1925 = vadd.f32 %v1924, %v1900
      %v1926 = vadd.f32 %v1925, %v1903
      %v1927 = vrot.slane %v1926, 4
      %v1928 = vadd.f32 %v1926, %v1927
      %v1929 = vrot.slane %v1928, 2
      %v1930 = vadd.f32 %v1928, %v1929
      %v1931 = vrot.slane %v1930, 1
      %v1932 = vadd.f32 %v1930, %v1931
      %v1933 = vmul.f32 %v1876, %v1876
      %v1934 = vmul.f32 %v1879, %v1879
      %v1935 = vmul.f32 %v1884, %v1884
      %v1936 = vmul.f32 %v1887, %v1887
      %v1937 = vmul.f32 %v1892, %v1892
      %v1938 = vmul.f32 %v1895, %v1895
      %v1939 = vmul.f32 %v1900, %v1900
      %v1940 = vmul.f32 %v1903, %v1903
      %v1941 = vadd.f32 %v1933, %v1934
      %v1942 = vadd.f32 %v1941, %v1935
      %v1943 = vadd.f32 %v1942, %v1936
      %v1944 = vadd.f32 %v1943, %v1937
      %v1945 = vadd.f32 %v1944, %v1938
      %v1946 = vadd.f32 %v1945, %v1939
      %v1947 = vadd.f32 %v1946, %v1940
      %v1948 = vrot.slane %v1947, 4
      %v1949 = vadd.f32 %v1947, %v1948
      %v1950 = vrot.slane %v1949, 2
      %v1951 = vadd.f32 %v1949, %v1950
      %v1952 = vrot.slane %v1951, 1
      %v1953 = vadd.f32 %v1951, %v1952
      %vm1954 = vcmask 1040384
      %v1955 = vsel %vm1954, %v1932, %v1953
      %v1956 = vadd.f32 %v1919, %v1955
      %1957 = vst [vmem:[%s5] sm:$0x3] %v1956
      %s1958 = smul.u32 8, %s17
      %p1959 = scmp.lt.s32.totalorder %s1958, 15
      %s1960 = scalar_select %p1959, %s1958, 15
      %s1961 = smul.addr %s1960, 8
      %s1962 = scalar_lea.vmem %s4, %s1961
      // Predicated region
      $region41: #{_lambda_.5} parent=35 // pred_check
        %p1963 = pneg %p124
      $region42: #{_lambda_.5} parent=35 // pred_check_branch
        %1965 = sbr.rel (%p1963) target = $region44
      $region43: #{_lambda_.5} parent=35 // pred_region
        %s1966 = smul.u32 8, %s17
      $region44: #{_lambda_.5} parent=35 // pred_fallthru
        _
      // Predicated region
      $region45: #{_lambda_.5} parent=35 // pred_check
        %p1967 = pneg %p145
      $region46: #{_lambda_.5} parent=35 // pred_check_branch
        %1969 = sbr.rel (%p1967) target = $region48
      $region47: #{_lambda_.5} parent=35 // pred_region
        _
      $region48: #{_lambda_.5} parent=35 // pred_fallthru
        _
      // Predicated region
      $region49: #{_lambda_.5} parent=35 // pred_check
        %p1970 = pneg %p145
      $region50: #{_lambda_.5} parent=35 // pred_check_branch
        %1972 = sbr.rel (%p1970) target = $region52
      $region51: #{_lambda_.5} parent=35 // pred_region
        _
      $region52: #{_lambda_.5} parent=35 // pred_fallthru
        _
    $region36: #{_lambda_.5} parent=5 // pred_fallthru
      _
    %p1973 = scmp.le.s32.totalorder 2, %s12
    // Predicated region
    $region53: #{_lambda_.5} parent=5 // pred_check
      %p1974 = pneg %p1973
    $region54: #{_lambda_.5} parent=5 // pred_check_branch
      %1976 = sbr.rel (%p1974) target = $region56
    $region55: #{_lambda_.5} parent=5 // pred_region
      %s1977 = ssub.s32 %s12, 2
      // Predicated region
      $region57: #{_lambda_.5} parent=55 // pred_check
        %p1978 = pneg %p130
      $region58: #{_lambda_.5} parent=55 // pred_check_branch
        %1980 = sbr.rel (%p1978) target = $region60
      $region59: #{_lambda_.5} parent=55 // pred_region
        %s1981 = smul.u32 8, %s18
        %p1982 = scmp.lt.s32.totalorder %s1981, 15
        %s1983 = scalar_select %p1982, %s1981, 15
        %s1984 = smul.addr %s1983, 8
        %s1985 = scalar_lea.vmem %s4, %s1984
      $region60: #{_lambda_.5} parent=55 // pred_fallthru
        _
    $region56: #{_lambda_.5} parent=5 // pred_fallthru
      _
  $region6: #{_lambda_.5} parent=0 // loop_footer
    %s16 = sadd.s32 1, %s12
  $region7: #{_lambda_.5} parent=0 // loop_footer_branch
    %11 = sbr.rel target = $region3
  $region8: #{_lambda_.5} parent=0 // loop_exit
    _

</llo_original>
